<compile_context>
chip_gen: v5e
topology: v5e:2x2
jax: 0.10.0
libtpu: 0.0.40
codegen_flags: <defaults>
</compile_context>

<pallas_src>
import jax
import jax.numpy as jnp
from jax.experimental import pallas as pl
from jax.experimental.pallas import tpu as pltpu

IMG_C, IMG_H, IMG_W = 3, 16, 16
NUM_LABELS = 2
EMB_DIM = 10
H1, H2, H3 = 1024, 512, 256
IMG_DIM = IMG_C * IMG_H * IMG_W          # 768 = 6 * 128 -> lane-aligned K, no padding
IN_DIM = IMG_DIM + EMB_DIM               # 778 (PyTorch layer-1 fan-in, used for init)
B_PAD = 16                               # bf16 sublane tile (16, 128)
OUT_LANES = 128                          # lane-dense output slab


def _leaky_relu(x, slope=0.2):
    return jnp.where(x > 0, x, slope * x)


def _disc_mlp_kernel(x_ref, rb_ref,
                     w1_ref,
                     w2_ref, b2_ref,
                     w3_ref, b3_ref,
                     w4_ref, b4_ref,
                     out_ref):
    """Fused MLP: 3x (bf16 MXU matmul, f32 acc -> +bias -> LeakyReLU(0.2))
    -> 256->1 as VPU/XLU reduce -> Sigmoid.  Dropout(0.3) is identity (eval mode).
    rb_ref carries b1 + the label-embedding contribution to layer 1 (per batch row)."""
    x = x_ref[...]                                                     # (B_PAD, 768) bf16

    h = jnp.dot(x, w1_ref[...], preferred_element_type=jnp.float32) + rb_ref[...]
    h = _leaky_relu(h)
    # TODO(synk): train-mode Dropout(0.3) would use pltpu.prng_seed/prng_random_bits;
    # forward here follows eval semantics (dropout = identity).

    h = jnp.dot(h.astype(jnp.bfloat16), w2_ref[...],
                preferred_element_type=jnp.float32) + b2_ref[...]
    h = _leaky_relu(h)

    h = jnp.dot(h.astype(jnp.bfloat16), w3_ref[...],
                preferred_element_type=jnp.float32) + b3_ref[...]
    h = _leaky_relu(h)

    # Final Linear(256, 1): multiply by the weight row and reduce across lanes
    # (avoids an N=1 MXU matmul that would pad the output to 128 lanes).
    logits = jnp.sum(h * w4_ref[...], axis=-1, keepdims=True) + b4_ref[...]   # (B_PAD, 1)
    sig = 1.0 / (1.0 + jnp.exp(-logits))                                      # Sigmoid
    out_ref[...] = jnp.broadcast_to(sig, out_ref.shape)                       # lane-dense store


def _full_spec(shape):
    # single grid step -> whole array resident in VMEM
    return pl.BlockSpec(shape, lambda i: tuple(0 for _ in shape))


@jax.jit
def conditional_discriminator_forward(images, labels, params):
    """images: (B, C, H, W) float32 NCHW; labels: (B, 1) int32. Returns (B, 1) float32."""
    B = images.shape[0]

    # Glue (plain JAX): embedding lookup; fold its layer-1 contribution + b1 into a
    # per-row bias (concat([img, emb]) @ w1  ==  img @ w1_img + emb @ w1_emb).
    emb = jnp.take(params["emb"], labels[:, 0], axis=0).astype(jnp.bfloat16)        # (B, 10)
    row_bias = jnp.dot(emb, params["w1_emb"],
                       preferred_element_type=jnp.float32) + params["b1"]           # (B, 1024)
    flat = images.reshape(B, -1).astype(jnp.bfloat16)                               # (B, 768)

    # Explicit batch padding: zero rows contribute exactly 0 and are sliced off below.
    x_pad = jnp.zeros((B_PAD, IMG_DIM), jnp.bfloat16).at[:B].set(flat)
    rb_pad = jnp.zeros((B_PAD, H1), jnp.float32).at[:B].set(row_bias)

    operands = (x_pad, rb_pad,
                params["w1"],
                params["w2"], params["b2"],
                params["w3"], params["b3"],
                params["w4"], params["b4"])
    in_specs = [_full_spec(op.shape) for op in operands]

    flops = 2 * B_PAD * (IMG_DIM * H1 + H1 * H2 + H2 * H3 + H3)
    bytes_accessed = sum(int(op.size) * op.dtype.itemsize for op in operands) \
        + B_PAD * OUT_LANES * 4
    cost = pl.CostEstimate(flops=flops, transcendentals=B_PAD,
                           bytes_accessed=bytes_accessed)

    out_full = pl.pallas_call(
        _disc_mlp_kernel,
        out_shape=jax.ShapeDtypeStruct((B_PAD, OUT_LANES), jnp.float32),
        grid=(1,),
        in_specs=in_specs,
        out_specs=_full_spec((B_PAD, OUT_LANES)),
        compiler_params=pltpu.CompilerParams(
            dimension_semantics=("arbitrary",),
            # bf16 working set (double-buffered) ~6 MiB; 16 MiB leaves headroom even on
            # v7x where 64 MiB is the entire physical VMEM.
            vmem_limit_bytes=16 << 20,
        ),
        cost_estimate=cost,
    )(*operands)

    return out_full[:B, :1]


def init_params(key):
    """PyTorch-style init U(-1/sqrt(fan_in), 1/sqrt(fan_in)); matmul weights stored bf16.
    Layer-1 weight is split into an image part (768, lane-aligned, used by the kernel)
    and an embedding part (10, folded into the per-row bias in the wrapper)."""
    def linear(k, fan_in, fan_out, w_dtype):
        bound = 1.0 / float(fan_in) ** 0.5
        kw, kb = jax.random.split(k)
        w = jax.random.uniform(kw, (fan_in, fan_out), jnp.float32, -bound, bound).astype(w_dtype)
        b = jax.random.uniform(kb, (1, fan_out), jnp.float32, -bound, bound)
        return w, b

    k_emb, k1, k2, k3, k4 = jax.random.split(key, 5)
    params = {}
    params["emb"] = jax.random.normal(k_emb, (NUM_LABELS, EMB_DIM), jnp.float32)

    w1_full, params["b1"] = linear(k1, IN_DIM, H1, jnp.bfloat16)     # (778, 1024)
    params["w1"] = w1_full[:IMG_DIM]                                 # (768, 1024) image part
    params["w1_emb"] = w1_full[IMG_DIM:]                             # (10, 1024) embedding part
    params["w2"], params["b2"] = linear(k2, H1, H2, jnp.bfloat16)
    params["w3"], params["b3"] = linear(k3, H2, H3, jnp.bfloat16)
    w4, params["b4"] = linear(k4, H3, 1, jnp.float32)
    params["w4"] = w4.reshape(1, H3)   # row form for the in-kernel VPU reduce
    return params


def _reference_forward(images, labels, params):
    """Pure-JAX reference mirroring the module (concat + full w1) with the same
    bf16-weight / f32-accumulation numerics as the kernel."""
    B = images.shape[0]
    emb = jnp.take(params["emb"], labels[:, 0], axis=0)
    x = jnp.concatenate([images.reshape(B, -1), emb], axis=1).astype(jnp.bfloat16)
    w1_full = jnp.concatenate([params["w1"], params["w1_emb"]], axis=0)
    h = _leaky_relu(jnp.dot(x, w1_full,
                            preferred_element_type=jnp.float32) + params["b1"])
    h = _leaky_relu(jnp.dot(h.astype(jnp.bfloat16), params["w2"],
                            preferred_element_type=jnp.float32) + params["b2"])
    h = _leaky_relu(jnp.dot(h.astype(jnp.bfloat16), params["w3"],
                            preferred_element_type=jnp.float32) + params["b3"])
    logits = jnp.sum(h * params["w4"], axis=-1, keepdims=True) + params["b4"]
    return 1.0 / (1.0 + jnp.exp(-logits))


if __name__ == "__main__":
    key = jax.random.PRNGKey(0)
    k_img, k_param = jax.random.split(key)

    B = 2
    images = jax.random.normal(k_img, (B, IMG_C, IMG_H, IMG_W), jnp.float32)
    labels = jnp.array([[0], [1]], dtype=jnp.int32)  # (B, 1), squeezed like torch

    params = init_params(k_param)

    out = conditional_discriminator_forward(images, labels, params)
    out = jax.block_until_ready(out)
    assert out.shape == (B, 1)

    ref = _reference_forward(images, labels, params)
    assert jnp.allclose(out, ref, atol=1e-3, rtol=1e-3), (out, ref)

    print("KERNEL_OK")
</pallas_src>

<mosaic_0001>
module attributes {stable_mosaic.version = 11 : i64} {
  func.func @_disc_mlp_kernel(%arg0: i32, %arg1: memref<16x768xbf16, #tpu.memory_space<vmem>>, %arg2: memref<16x1024xf32, #tpu.memory_space<vmem>>, %arg3: memref<768x1024xbf16, #tpu.memory_space<vmem>>, %arg4: memref<1024x512xbf16, #tpu.memory_space<vmem>>, %arg5: memref<1x512xf32, #tpu.memory_space<vmem>>, %arg6: memref<512x256xbf16, #tpu.memory_space<vmem>>, %arg7: memref<1x256xf32, #tpu.memory_space<vmem>>, %arg8: memref<1x256xf32, #tpu.memory_space<vmem>>, %arg9: memref<1x1xf32, #tpu.memory_space<vmem>>, %arg10: memref<16x128xf32, #tpu.memory_space<vmem>>) attributes {dimension_semantics = [#tpu.dimension_semantics<arbitrary>], iteration_bounds = array<i64: 1>, scalar_prefetch = 0 : i64, scratch_operands = 0 : i64, tpu.core_type = #tpu.core_type<tc>, window_params = [{pipeline_mode = #tpu.pipeline_mode<synchronous>, transform_indices = @transform_0, window_bounds = array<i64: 16, 768>}, {pipeline_mode = #tpu.pipeline_mode<synchronous>, transform_indices = @transform_1, window_bounds = array<i64: 16, 1024>}, {pipeline_mode = #tpu.pipeline_mode<synchronous>, transform_indices = @transform_2, window_bounds = array<i64: 768, 1024>}, {pipeline_mode = #tpu.pipeline_mode<synchronous>, transform_indices = @transform_3, window_bounds = array<i64: 1024, 512>}, {pipeline_mode = #tpu.pipeline_mode<synchronous>, transform_indices = @transform_4, window_bounds = array<i64: 1, 512>}, {pipeline_mode = #tpu.pipeline_mode<synchronous>, transform_indices = @transform_5, window_bounds = array<i64: 512, 256>}, {pipeline_mode = #tpu.pipeline_mode<synchronous>, transform_indices = @transform_6, window_bounds = array<i64: 1, 256>}, {pipeline_mode = #tpu.pipeline_mode<synchronous>, transform_indices = @transform_7, window_bounds = array<i64: 1, 256>}, {pipeline_mode = #tpu.pipeline_mode<synchronous>, transform_indices = @transform_8, window_bounds = array<i64: 1, 1>}, {pipeline_mode = #tpu.pipeline_mode<synchronous>, transform_indices = @transform_9, window_bounds = array<i64: 16, 128>}]} {
    %c0 = arith.constant 0 : index
    %c0_0 = arith.constant 0 : index
    %0 = vector.load %arg1[%c0, %c0_0] : memref<16x768xbf16, #tpu.memory_space<vmem>>, vector<16x768xbf16>
    %c0_1 = arith.constant 0 : index
    %c0_2 = arith.constant 0 : index
    %1 = vector.load %arg3[%c0_1, %c0_2] : memref<768x1024xbf16, #tpu.memory_space<vmem>>, vector<768x1024xbf16>
    %cst = arith.constant dense<0.000000e+00> : vector<16x1024xf32>
    %2 = tpu.matmul %0, %1, %cst {dimension_numbers = #tpu.dot_dimension_numbers<[1], [0], [0], [1], [0, 0, 1, 1], [], []>} : vector<16x768xbf16>, vector<768x1024xbf16>, vector<16x1024xf32> -> vector<16x1024xf32>
    %c0_3 = arith.constant 0 : index
    %c0_4 = arith.constant 0 : index
    %3 = vector.load %arg2[%c0_3, %c0_4] : memref<16x1024xf32, #tpu.memory_space<vmem>>, vector<16x1024xf32>
    %4 = arith.addf %2, %3 : vector<16x1024xf32>
    %cst_5 = arith.constant 0.000000e+00 : f32
    %5 = vector.broadcast %cst_5 : f32 to vector<16x1024xf32>
    %6 = arith.cmpf ogt, %4, %5 : vector<16x1024xf32>
    %cst_6 = arith.constant 2.000000e-01 : f32
    %7 = vector.broadcast %cst_6 : f32 to vector<16x1024xf32>
    %8 = arith.mulf %7, %4 : vector<16x1024xf32>
    %9 = arith.select %6, %4, %8 : vector<16x1024xi1>, vector<16x1024xf32>
    %10 = arith.truncf %9 : vector<16x1024xf32> to vector<16x1024xbf16>
    %c0_7 = arith.constant 0 : index
    %c0_8 = arith.constant 0 : index
    %11 = vector.load %arg4[%c0_7, %c0_8] : memref<1024x512xbf16, #tpu.memory_space<vmem>>, vector<1024x512xbf16>
    %cst_9 = arith.constant dense<0.000000e+00> : vector<16x512xf32>
    %12 = tpu.matmul %10, %11, %cst_9 {dimension_numbers = #tpu.dot_dimension_numbers<[1], [0], [0], [1], [0, 0, 1, 1], [], []>} : vector<16x1024xbf16>, vector<1024x512xbf16>, vector<16x512xf32> -> vector<16x512xf32>
    %c0_10 = arith.constant 0 : index
    %c0_11 = arith.constant 0 : index
    %13 = vector.load %arg5[%c0_10, %c0_11] : memref<1x512xf32, #tpu.memory_space<vmem>>, vector<1x512xf32>
    %14 = vector.broadcast %13 : vector<1x512xf32> to vector<16x512xf32>
    %15 = arith.addf %12, %14 : vector<16x512xf32>
    %cst_12 = arith.constant 0.000000e+00 : f32
    %16 = vector.broadcast %cst_12 : f32 to vector<16x512xf32>
    %17 = arith.cmpf ogt, %15, %16 : vector<16x512xf32>
    %cst_13 = arith.constant 2.000000e-01 : f32
    %18 = vector.broadcast %cst_13 : f32 to vector<16x512xf32>
    %19 = arith.mulf %18, %15 : vector<16x512xf32>
    %20 = arith.select %17, %15, %19 : vector<16x512xi1>, vector<16x512xf32>
    %21 = arith.truncf %20 : vector<16x512xf32> to vector<16x512xbf16>
    %c0_14 = arith.constant 0 : index
    %c0_15 = arith.constant 0 : index
    %22 = vector.load %arg6[%c0_14, %c0_15] : memref<512x256xbf16, #tpu.memory_space<vmem>>, vector<512x256xbf16>
    %cst_16 = arith.constant dense<0.000000e+00> : vector<16x256xf32>
    %23 = tpu.matmul %21, %22, %cst_16 {dimension_numbers = #tpu.dot_dimension_numbers<[1], [0], [0], [1], [0, 0, 1, 1], [], []>} : vector<16x512xbf16>, vector<512x256xbf16>, vector<16x256xf32> -> vector<16x256xf32>
    %c0_17 = arith.constant 0 : index
    %c0_18 = arith.constant 0 : index
    %24 = vector.load %arg7[%c0_17, %c0_18] : memref<1x256xf32, #tpu.memory_space<vmem>>, vector<1x256xf32>
    %25 = vector.broadcast %24 : vector<1x256xf32> to vector<16x256xf32>
    %26 = arith.addf %23, %25 : vector<16x256xf32>
    %cst_19 = arith.constant 0.000000e+00 : f32
    %27 = vector.broadcast %cst_19 : f32 to vector<16x256xf32>
    %28 = arith.cmpf ogt, %26, %27 : vector<16x256xf32>
    %cst_20 = arith.constant 2.000000e-01 : f32
    %29 = vector.broadcast %cst_20 : f32 to vector<16x256xf32>
    %30 = arith.mulf %29, %26 : vector<16x256xf32>
    %31 = arith.select %28, %26, %30 : vector<16x256xi1>, vector<16x256xf32>
    %c0_21 = arith.constant 0 : index
    %c0_22 = arith.constant 0 : index
    %32 = vector.load %arg8[%c0_21, %c0_22] : memref<1x256xf32, #tpu.memory_space<vmem>>, vector<1x256xf32>
    %33 = vector.broadcast %32 : vector<1x256xf32> to vector<16x256xf32>
    %34 = arith.mulf %31, %33 : vector<16x256xf32>
    %cst_23 = arith.constant dense<0.000000e+00> : vector<16xf32>
    %35 = vector.multi_reduction <add>, %34, %cst_23 [1] : vector<16x256xf32> to vector<16xf32>
    %36 = vector.shape_cast %35 : vector<16xf32> to vector<16x1xf32>
    %c0_24 = arith.constant 0 : index
    %c0_25 = arith.constant 0 : index
    %37 = vector.load %arg9[%c0_24, %c0_25] : memref<1x1xf32, #tpu.memory_space<vmem>>, vector<1x1xf32>
    %38 = vector.broadcast %37 : vector<1x1xf32> to vector<16x1xf32>
    %39 = arith.addf %36, %38 : vector<16x1xf32>
    %cst_26 = arith.constant 0.000000e+00 : f32
    %40 = vector.broadcast %cst_26 : f32 to vector<16x1xf32>
    %41 = arith.subf %40, %39 : vector<16x1xf32>
    %42 = math.exp %41 : vector<16x1xf32>
    %cst_27 = arith.constant 1.000000e+00 : f32
    %43 = vector.broadcast %cst_27 : f32 to vector<16x1xf32>
    %44 = arith.addf %43, %42 : vector<16x1xf32>
    %cst_28 = arith.constant 1.000000e+00 : f32
    %45 = vector.broadcast %cst_28 : f32 to vector<16x1xf32>
    %46 = arith.divf %45, %44 : vector<16x1xf32>
    %47 = vector.shape_cast %46 : vector<16x1xf32> to vector<16x1xf32>
    %48 = vector.broadcast %47 : vector<16x1xf32> to vector<16x128xf32>
    %c0_29 = arith.constant 0 : index
    %c0_30 = arith.constant 0 : index
    %49 = vector.load %arg10[%c0_29, %c0_30] : memref<16x128xf32, #tpu.memory_space<vmem>>, vector<16x128xf32>
    tpu.vector_store %arg10[%c0_29, %c0_30], %48 {strides = array<i32>} : memref<16x128xf32, #tpu.memory_space<vmem>>, vector<16x128xf32>,
    return
  }
  func.func @transform_0(%arg0: i32) -> (i32, i32) {
    %c0_i32 = arith.constant 0 : i32
    %c0_i32_0 = arith.constant 0 : i32
    %c0_i32_1 = arith.constant 0 : i32
    return %c0_i32, %c0_i32_0 : i32, i32
  }
  func.func @transform_1(%arg0: i32) -> (i32, i32) {
    %c0_i32 = arith.constant 0 : i32
    %c0_i32_0 = arith.constant 0 : i32
    %c0_i32_1 = arith.constant 0 : i32
    return %c0_i32, %c0_i32_0 : i32, i32
  }
  func.func @transform_2(%arg0: i32) -> (i32, i32) {
    %c0_i32 = arith.constant 0 : i32
    %c0_i32_0 = arith.constant 0 : i32
    %c0_i32_1 = arith.constant 0 : i32
    return %c0_i32, %c0_i32_0 : i32, i32
  }
  func.func @transform_3(%arg0: i32) -> (i32, i32) {
    %c0_i32 = arith.constant 0 : i32
    %c0_i32_0 = arith.constant 0 : i32
    %c0_i32_1 = arith.constant 0 : i32
    return %c0_i32, %c0_i32_0 : i32, i32
  }
  func.func @transform_4(%arg0: i32) -> (i32, i32) {
    %c0_i32 = arith.constant 0 : i32
    %c0_i32_0 = arith.constant 0 : i32
    %c0_i32_1 = arith.constant 0 : i32
    return %c0_i32, %c0_i32_0 : i32, i32
  }
  func.func @transform_5(%arg0: i32) -> (i32, i32) {
    %c0_i32 = arith.constant 0 : i32
    %c0_i32_0 = arith.constant 0 : i32
    %c0_i32_1 = arith.constant 0 : i32
    return %c0_i32, %c0_i32_0 : i32, i32
  }
  func.func @transform_6(%arg0: i32) -> (i32, i32) {
    %c0_i32 = arith.constant 0 : i32
    %c0_i32_0 = arith.constant 0 : i32
    %c0_i32_1 = arith.constant 0 : i32
    return %c0_i32, %c0_i32_0 : i32, i32
  }
  func.func @transform_7(%arg0: i32) -> (i32, i32) {
    %c0_i32 = arith.constant 0 : i32
    %c0_i32_0 = arith.constant 0 : i32
    %c0_i32_1 = arith.constant 0 : i32
    return %c0_i32, %c0_i32_0 : i32, i32
  }
  func.func @transform_8(%arg0: i32) -> (i32, i32) {
    %c0_i32 = arith.constant 0 : i32
    %c0_i32_0 = arith.constant 0 : i32
    %c0_i32_1 = arith.constant 0 : i32
    return %c0_i32, %c0_i32_0 : i32, i32
  }
  func.func @transform_9(%arg0: i32) -> (i32, i32) {
    %c0_i32 = arith.constant 0 : i32
    %c0_i32_0 = arith.constant 0 : i32
    %c0_i32_1 = arith.constant 0 : i32
    return %c0_i32, %c0_i32_0 : i32, i32
  }
}

</mosaic_0001>

<llo_original>
// kernel: conditional_discriminator_forward.1
$region0: #{conditional_discriminator_forward.1}
  #allocation0 [shape = 'u32[]', space=smem, size = 0x4, offset = 0x4, fixed_abs, tag = 'smem constant byte address 0x4 - core index']
  #allocation1 [shape = 'u32[72,128]{1,0:T(1,128)}', space=vmem, size = 0x9000, scoped, tag = 'internal scratch']
  #allocation2 [shape = 'f32[1,1]{1,0:T(1,128)S(1)}', space=vmem, size = 0x200, scoped, tag = 'scoped memory for conditional_discriminator_forward.1']
  %s0 = inlined_call_operand.vmem [shape: bf16[16,768], index: 0, kind: input, shape index: {}]
  %s1 = inlined_call_operand.vmem [shape: f32[16,1024], index: 1, kind: input, shape index: {}]
  %s2 = inlined_call_operand.hbm [shape: bf16[768,1024], index: 2, kind: input, shape index: {}]
  %s3 = inlined_call_operand.hbm [shape: bf16[1024,512], index: 3, kind: input, shape index: {}]
  %s4 = inlined_call_operand.hbm [shape: f32[1,512], index: 4, kind: input, shape index: {}]
  %s5 = inlined_call_operand.hbm [shape: bf16[512,256], index: 5, kind: input, shape index: {}]
  %s6 = inlined_call_operand.hbm [shape: f32[1,256], index: 6, kind: input, shape index: {}]
  %s7 = inlined_call_operand.hbm [shape: f32[1,256], index: 7, kind: input, shape index: {}]
  %s8 = inlined_call_operand.<no memory space> [shape: f32[1,1], index: 8, kind: input, shape index: {}]
  %s9 = inlined_call_operand.vmem [shape: f32[16,128], index: 9, kind: output, shape index: {}]
  %s10 = sld [smem:[#allocation0]]
  $region70: #{conditional_discriminator_forward.1} parent=0
    _
  %s12 = ssub.s32 1, %s10
  %s13 = scalar_select 0, %s12, %s10
  %v14 = vstv %s8
  %15 = vst [vmem:[#allocation2] sm:$0x1] %v14
  $region1: #{conditional_discriminator_forward.1} parent=0
    #allocation3 [shape = 'u8[1572864]{0}', space=vmem, size = 0x180000, scoped, tag = 'input window, operand 2, single buffered']
    #allocation4 [shape = 's32[1]{0}', space=sflag, size = 0x4, scoped, tag = 'scoped memory for conditional_discriminator_forward.1']
    #allocation5 [shape = 'u8[1048576]{0}', space=vmem, size = 0x100000, scoped, tag = 'input window, operand 3, single buffered']
    #allocation6 [shape = 's32[1]{0}', space=sflag, size = 0x4, scoped, tag = 'scoped memory for conditional_discriminator_forward.1']
    #allocation7 [shape = 'u8[2048]{0}', space=vmem, size = 0x800, scoped, tag = 'input window, operand 4, single buffered']
    #allocation8 [shape = 'u8[262144]{0}', space=vmem, size = 0x40000, scoped, tag = 'input window, operand 5, single buffered']
    #allocation9 [shape = 's32[1]{0}', space=sflag, size = 0x4, scoped, tag = 'scoped memory for conditional_discriminator_forward.1']
    #allocation10 [shape = 'u8[1024]{0}', space=vmem, size = 0x400, scoped, tag = 'input window, operand 6, single buffered']
    #allocation11 [shape = 'u8[1024]{0}', space=vmem, size = 0x400, scoped, tag = 'input window, operand 7, single buffered']
    #allocation12 [shape = 's32[1]{0}', space=sflag, size = 0x4, scoped, tag = 'scoped memory for conditional_discriminator_forward.1']
    %16 = vsyncpa [#allocation4], 0
    %17 = vsyncpa [#allocation6], 0
    %18 = vsyncpa [#allocation9], 0
    %19 = vsyncpa [#allocation12], 0
    // Predicated region
    $region2: #{conditional_discriminator_forward.1} parent=1 // pred_check
      _
    $region3: #{conditional_discriminator_forward.1} parent=1 // pred_check_branch
      %21 = sbr.rel (0) target = $region5
    $region4: #{conditional_discriminator_forward.1} parent=1 // pred_region
      _
    $region5: #{conditional_discriminator_forward.1} parent=1 // pred_fallthru
      _
    // Predicated region
    $region6: #{conditional_discriminator_forward.1} parent=1 // pred_check
      _
    $region7: #{conditional_discriminator_forward.1} parent=1 // pred_check_branch
      %23 = sbr.rel (0) target = $region9
    $region8: #{conditional_discriminator_forward.1} parent=1 // pred_region
      _
    $region9: #{conditional_discriminator_forward.1} parent=1 // pred_fallthru
      _
    // Predicated region
    $region10: #{conditional_discriminator_forward.1} parent=1 // pred_check
      _
    $region11: #{conditional_discriminator_forward.1} parent=1 // pred_check_branch
      %25 = sbr.rel (0) target = $region13
    $region12: #{conditional_discriminator_forward.1} parent=1 // pred_region
      %27 = vsyncadd [#allocation4], 0
      %s28 = sshll.u32 %s2, 4
      %s29 = int_to_ptr.hbm [resolvable:$true] %s28
      %s30 = sshll.u32 [#allocation3], 4
      %s31 = int_to_ptr.vmem [resolvable:$true] %s30
      %36 = dma.hbm_to_vmem [thread:$0]  %s29, 49152, %s31, [#allocation4], 512, 512, 32
    $region13: #{conditional_discriminator_forward.1} parent=1 // pred_fallthru
      _
    // Predicated region
    $region14: #{conditional_discriminator_forward.1} parent=1 // pred_check
      _
    $region15: #{conditional_discriminator_forward.1} parent=1 // pred_check_branch
      %38 = sbr.rel (0) target = $region17
    $region16: #{conditional_discriminator_forward.1} parent=1 // pred_region
      %40 = vsyncadd [#allocation6], 0
      %s41 = sshll.u32 %s3, 4
      %s42 = int_to_ptr.hbm [resolvable:$true] %s41
      %s43 = sshll.u32 [#allocation5], 4
      %s44 = int_to_ptr.vmem [resolvable:$true] %s43
      %49 = dma.hbm_to_vmem [thread:$0]  %s42, 32768, %s44, [#allocation6], 256, 256, 16
    $region17: #{conditional_discriminator_forward.1} parent=1 // pred_fallthru
      _
    // Predicated region
    $region18: #{conditional_discriminator_forward.1} parent=1 // pred_check
      _
    $region19: #{conditional_discriminator_forward.1} parent=1 // pred_check_branch
      %51 = sbr.rel (0) target = $region21
    $region20: #{conditional_discriminator_forward.1} parent=1 // pred_region
      %53 = vsyncadd [#allocation6], 0
      %s55 = sshll.u32 %s4, 4
      %s56 = int_to_ptr.hbm [resolvable:$true] %s55
      %s57 = sshll.u32 [#allocation7], 4
      %s58 = int_to_ptr.vmem [resolvable:$true] %s57
      %60 = dma.hbm_to_vmem [thread:$0]  %s56, 64, %s58, [#allocation6]
    $region21: #{conditional_discriminator_forward.1} parent=1 // pred_fallthru
      _
    // Predicated region
    $region22: #{conditional_discriminator_forward.1} parent=1 // pred_check
      _
    $region23: #{conditional_discriminator_forward.1} parent=1 // pred_check_branch
      %62 = sbr.rel (0) target = $region25
    $region24: #{conditional_discriminator_forward.1} parent=1 // pred_region
      %64 = vsyncadd [#allocation9], 0
      %s65 = sshll.u32 %s5, 4
      %s66 = int_to_ptr.hbm [resolvable:$true] %s65
      %s67 = sshll.u32 [#allocation8], 4
      %s68 = int_to_ptr.vmem [resolvable:$true] %s67
      %73 = dma.hbm_to_vmem [thread:$0]  %s66, 8192, %s68, [#allocation9], 128, 128, 8
    $region25: #{conditional_discriminator_forward.1} parent=1 // pred_fallthru
      _
    // Predicated region
    $region26: #{conditional_discriminator_forward.1} parent=1 // pred_check
      _
    $region27: #{conditional_discriminator_forward.1} parent=1 // pred_check_branch
      %75 = sbr.rel (0) target = $region29
    $region28: #{conditional_discriminator_forward.1} parent=1 // pred_region
      %77 = vsyncadd [#allocation9], 0
      %s79 = sshll.u32 %s6, 4
      %s80 = int_to_ptr.hbm [resolvable:$true] %s79
      %s81 = sshll.u32 [#allocation10], 4
      %s82 = int_to_ptr.vmem [resolvable:$true] %s81
      %84 = dma.hbm_to_vmem [thread:$0]  %s80, 32, %s82, [#allocation9]
    $region29: #{conditional_discriminator_forward.1} parent=1 // pred_fallthru
      _
    // Predicated region
    $region30: #{conditional_discriminator_forward.1} parent=1 // pred_check
      _
    $region31: #{conditional_discriminator_forward.1} parent=1 // pred_check_branch
      %86 = sbr.rel (0) target = $region33
    $region32: #{conditional_discriminator_forward.1} parent=1 // pred_region
      %88 = vsyncadd [#allocation12], 0
      %s90 = sshll.u32 %s7, 4
      %s91 = int_to_ptr.hbm [resolvable:$true] %s90
      %s92 = sshll.u32 [#allocation11], 4
      %s93 = int_to_ptr.vmem [resolvable:$true] %s92
      %95 = dma.hbm_to_vmem [thread:$0]  %s91, 32, %s93, [#allocation12]
    $region33: #{conditional_discriminator_forward.1} parent=1 // pred_fallthru
      _
    // Predicated region
    $region34: #{conditional_discriminator_forward.1} parent=1 // pred_check
      _
    $region35: #{conditional_discriminator_forward.1} parent=1 // pred_check_branch
      %97 = sbr.rel (0) target = $region37
    $region36: #{conditional_discriminator_forward.1} parent=1 // pred_region
      _
    $region37: #{conditional_discriminator_forward.1} parent=1 // pred_fallthru
      _
    // Predicated region
    $region38: #{conditional_discriminator_forward.1} parent=1 // pred_check
      _
    $region39: #{conditional_discriminator_forward.1} parent=1 // pred_check_branch
      %99 = sbr.rel (0) target = $region41
    $region40: #{conditional_discriminator_forward.1} parent=1 // pred_region
      %101 = dma.done [#allocation4], 49152
    $region41: #{conditional_discriminator_forward.1} parent=1 // pred_fallthru
      _
    // Predicated region
    $region42: #{conditional_discriminator_forward.1} parent=1 // pred_check
      _
    $region43: #{conditional_discriminator_forward.1} parent=1 // pred_check_branch
      %103 = sbr.rel (0) target = $region45
    $region44: #{conditional_discriminator_forward.1} parent=1 // pred_region
      %105 = dma.done [#allocation6], 32768
    $region45: #{conditional_discriminator_forward.1} parent=1 // pred_fallthru
      _
    // Predicated region
    $region46: #{conditional_discriminator_forward.1} parent=1 // pred_check
      _
    $region47: #{conditional_discriminator_forward.1} parent=1 // pred_check_branch
      %107 = sbr.rel (0) target = $region49
    $region48: #{conditional_discriminator_forward.1} parent=1 // pred_region
      %109 = dma.done [#allocation6], 64
    $region49: #{conditional_discriminator_forward.1} parent=1 // pred_fallthru
      _
    // Predicated region
    $region50: #{conditional_discriminator_forward.1} parent=1 // pred_check
      _
    $region51: #{conditional_discriminator_forward.1} parent=1 // pred_check_branch
      %111 = sbr.rel (0) target = $region53
    $region52: #{conditional_discriminator_forward.1} parent=1 // pred_region
      %113 = dma.done [#allocation9], 8192
    $region53: #{conditional_discriminator_forward.1} parent=1 // pred_fallthru
      _
    // Predicated region
    $region54: #{conditional_discriminator_forward.1} parent=1 // pred_check
      _
    $region55: #{conditional_discriminator_forward.1} parent=1 // pred_check_branch
      %115 = sbr.rel (0) target = $region57
    $region56: #{conditional_discriminator_forward.1} parent=1 // pred_region
      %117 = dma.done [#allocation9], 32
    $region57: #{conditional_discriminator_forward.1} parent=1 // pred_fallthru
      _
    // Predicated region
    $region58: #{conditional_discriminator_forward.1} parent=1 // pred_check
      _
    $region59: #{conditional_discriminator_forward.1} parent=1 // pred_check_branch
      %119 = sbr.rel (0) target = $region61
    $region60: #{conditional_discriminator_forward.1} parent=1 // pred_region
      %121 = dma.done [#allocation12], 32
    $region61: #{conditional_discriminator_forward.1} parent=1 // pred_fallthru
      _
    %v122 = vld [vmem:[%s0] sm:$0xff]
    %v123 = vld [vmem:[%s0 + $0x8] sm:$0xff]
    %v124 = vld [vmem:[%s0 + $0x10] sm:$0xff]
    %v125 = vld [vmem:[%s0 + $0x18] sm:$0xff]
    %v126 = vld [vmem:[%s0 + $0x20] sm:$0xff]
    %v127 = vld [vmem:[%s0 + $0x28] sm:$0xff]
    %v128 = vld [vmem:[#allocation3] sm:$0xff]
    %v129 = vld [vmem:[#allocation3 + $0x8] sm:$0xff]
    %v130 = vld [vmem:[#allocation3 + $0x10] sm:$0xff]
    %v131 = vld [vmem:[#allocation3 + $0x18] sm:$0xff]
    %v132 = vld [vmem:[#allocation3 + $0x20] sm:$0xff]
    %v133 = vld [vmem:[#allocation3 + $0x28] sm:$0xff]
    %v134 = vld [vmem:[#allocation3 + $0x30] sm:$0xff]
    %v135 = vld [vmem:[#allocation3 + $0x38] sm:$0xff]
    %v136 = vld [vmem:[#allocation3 + $0x40] sm:$0xff]
    %v137 = vld [vmem:[#allocation3 + $0x48] sm:$0xff]
    %v138 = vld [vmem:[#allocation3 + $0x50] sm:$0xff]
    %v139 = vld [vmem:[#allocation3 + $0x58] sm:$0xff]
    %v140 = vld [vmem:[#allocation3 + $0x60] sm:$0xff]
    %v141 = vld [vmem:[#allocation3 + $0x68] sm:$0xff]
    %v142 = vld [vmem:[#allocation3 + $0x70] sm:$0xff]
    %v143 = vld [vmem:[#allocation3 + $0x78] sm:$0xff]
    %v144 = vld [vmem:[#allocation3 + $0x80] sm:$0xff]
    %v145 = vld [vmem:[#allocation3 + $0x88] sm:$0xff]
    %v146 = vld [vmem:[#allocation3 + $0x90] sm:$0xff]
    %v147 = vld [vmem:[#allocation3 + $0x98] sm:$0xff]
    %v148 = vld [vmem:[#allocation3 + $0xa0] sm:$0xff]
    %v149 = vld [vmem:[#allocation3 + $0xa8] sm:$0xff]
    %v150 = vld [vmem:[#allocation3 + $0xb0] sm:$0xff]
    %v151 = vld [vmem:[#allocation3 + $0xb8] sm:$0xff]
    %v152 = vld [vmem:[#allocation3 + $0xc0] sm:$0xff]
    %v153 = vld [vmem:[#allocation3 + $0xc8] sm:$0xff]
    %v154 = vld [vmem:[#allocation3 + $0xd0] sm:$0xff]
    %v155 = vld [vmem:[#allocation3 + $0xd8] sm:$0xff]
    %v156 = vld [vmem:[#allocation3 + $0xe0] sm:$0xff]
    %v157 = vld [vmem:[#allocation3 + $0xe8] sm:$0xff]
    %v158 = vld [vmem:[#allocation3 + $0xf0] sm:$0xff]
    %v159 = vld [vmem:[#allocation3 + $0xf8] sm:$0xff]
    %v160 = vld [vmem:[#allocation3 + $0x100] sm:$0xff]
    %v161 = vld [vmem:[#allocation3 + $0x108] sm:$0xff]
    %v162 = vld [vmem:[#allocation3 + $0x110] sm:$0xff]
    %v163 = vld [vmem:[#allocation3 + $0x118] sm:$0xff]
    %v164 = vld [vmem:[#allocation3 + $0x120] sm:$0xff]
    %v165 = vld [vmem:[#allocation3 + $0x128] sm:$0xff]
    %v166 = vld [vmem:[#allocation3 + $0x130] sm:$0xff]
    %v167 = vld [vmem:[#allocation3 + $0x138] sm:$0xff]
    %v168 = vld [vmem:[#allocation3 + $0x140] sm:$0xff]
    %v169 = vld [vmem:[#allocation3 + $0x148] sm:$0xff]
    %v170 = vld [vmem:[#allocation3 + $0x150] sm:$0xff]
    %v171 = vld [vmem:[#allocation3 + $0x158] sm:$0xff]
    %v172 = vld [vmem:[#allocation3 + $0x160] sm:$0xff]
    %v173 = vld [vmem:[#allocation3 + $0x168] sm:$0xff]
    %v174 = vld [vmem:[#allocation3 + $0x170] sm:$0xff]
    %v175 = vld [vmem:[#allocation3 + $0x178] sm:$0xff]
    %v176 = vld [vmem:[#allocation3 + $0x180] sm:$0xff]
    %v177 = vld [vmem:[#allocation3 + $0x188] sm:$0xff]
    %v178 = vld [vmem:[#allocation3 + $0x190] sm:$0xff]
    %v179 = vld [vmem:[#allocation3 + $0x198] sm:$0xff]
    %v180 = vld [vmem:[#allocation3 + $0x1a0] sm:$0xff]
    %v181 = vld [vmem:[#allocation3 + $0x1a8] sm:$0xff]
    %v182 = vld [vmem:[#allocation3 + $0x1b0] sm:$0xff]
    %v183 = vld [vmem:[#allocation3 + $0x1b8] sm:$0xff]
    %v184 = vld [vmem:[#allocation3 + $0x1c0] sm:$0xff]
    %v185 = vld [vmem:[#allocation3 + $0x1c8] sm:$0xff]
    %v186 = vld [vmem:[#allocation3 + $0x1d0] sm:$0xff]
    %v187 = vld [vmem:[#allocation3 + $0x1d8] sm:$0xff]
    %v188 = vld [vmem:[#allocation3 + $0x1e0] sm:$0xff]
    %v189 = vld [vmem:[#allocation3 + $0x1e8] sm:$0xff]
    %v190 = vld [vmem:[#allocation3 + $0x1f0] sm:$0xff]
    %v191 = vld [vmem:[#allocation3 + $0x1f8] sm:$0xff]
    %v192 = vld [vmem:[#allocation3 + $0x200] sm:$0xff]
    %v193 = vld [vmem:[#allocation3 + $0x208] sm:$0xff]
    %v194 = vld [vmem:[#allocation3 + $0x210] sm:$0xff]
    %v195 = vld [vmem:[#allocation3 + $0x218] sm:$0xff]
    %v196 = vld [vmem:[#allocation3 + $0x220] sm:$0xff]
    %v197 = vld [vmem:[#allocation3 + $0x228] sm:$0xff]
    %v198 = vld [vmem:[#allocation3 + $0x230] sm:$0xff]
    %v199 = vld [vmem:[#allocation3 + $0x238] sm:$0xff]
    %v200 = vld [vmem:[#allocation3 + $0x240] sm:$0xff]
    %v201 = vld [vmem:[#allocation3 + $0x248] sm:$0xff]
    %v202 = vld [vmem:[#allocation3 + $0x250] sm:$0xff]
    %v203 = vld [vmem:[#allocation3 + $0x258] sm:$0xff]
    %v204 = vld [vmem:[#allocation3 + $0x260] sm:$0xff]
    %v205 = vld [vmem:[#allocation3 + $0x268] sm:$0xff]
    %v206 = vld [vmem:[#allocation3 + $0x270] sm:$0xff]
    %v207 = vld [vmem:[#allocation3 + $0x278] sm:$0xff]
    %v208 = vld [vmem:[#allocation3 + $0x280] sm:$0xff]
    %v209 = vld [vmem:[#allocation3 + $0x288] sm:$0xff]
    %v210 = vld [vmem:[#allocation3 + $0x290] sm:$0xff]
    %v211 = vld [vmem:[#allocation3 + $0x298] sm:$0xff]
    %v212 = vld [vmem:[#allocation3 + $0x2a0] sm:$0xff]
    %v213 = vld [vmem:[#allocation3 + $0x2a8] sm:$0xff]
    %v214 = vld [vmem:[#allocation3 + $0x2b0] sm:$0xff]
    %v215 = vld [vmem:[#allocation3 + $0x2b8] sm:$0xff]
    %v216 = vld [vmem:[#allocation3 + $0x2c0] sm:$0xff]
    %v217 = vld [vmem:[#allocation3 + $0x2c8] sm:$0xff]
    %v218 = vld [vmem:[#allocation3 + $0x2d0] sm:$0xff]
    %v219 = vld [vmem:[#allocation3 + $0x2d8] sm:$0xff]
    %v220 = vld [vmem:[#allocation3 + $0x2e0] sm:$0xff]
    %v221 = vld [vmem:[#allocation3 + $0x2e8] sm:$0xff]
    %v222 = vld [vmem:[#allocation3 + $0x2f0] sm:$0xff]
    %v223 = vld [vmem:[#allocation3 + $0x2f8] sm:$0xff]
    %v224 = vld [vmem:[#allocation3 + $0x300] sm:$0xff]
    %v225 = vld [vmem:[#allocation3 + $0x308] sm:$0xff]
    %v226 = vld [vmem:[#allocation3 + $0x310] sm:$0xff]
    %v227 = vld [vmem:[#allocation3 + $0x318] sm:$0xff]
    %v228 = vld [vmem:[#allocation3 + $0x320] sm:$0xff]
    %v229 = vld [vmem:[#allocation3 + $0x328] sm:$0xff]
    %v230 = vld [vmem:[#allocation3 + $0x330] sm:$0xff]
    %v231 = vld [vmem:[#allocation3 + $0x338] sm:$0xff]
    %v232 = vld [vmem:[#allocation3 + $0x340] sm:$0xff]
    %v233 = vld [vmem:[#allocation3 + $0x348] sm:$0xff]
    %v234 = vld [vmem:[#allocation3 + $0x350] sm:$0xff]
    %v235 = vld [vmem:[#allocation3 + $0x358] sm:$0xff]
    %v236 = vld [vmem:[#allocation3 + $0x360] sm:$0xff]
    %v237 = vld [vmem:[#allocation3 + $0x368] sm:$0xff]
    %v238 = vld [vmem:[#allocation3 + $0x370] sm:$0xff]
    %v239 = vld [vmem:[#allocation3 + $0x378] sm:$0xff]
    %v240 = vld [vmem:[#allocation3 + $0x380] sm:$0xff]
    %v241 = vld [vmem:[#allocation3 + $0x388] sm:$0xff]
    %v242 = vld [vmem:[#allocation3 + $0x390] sm:$0xff]
    %v243 = vld [vmem:[#allocation3 + $0x398] sm:$0xff]
    %v244 = vld [vmem:[#allocation3 + $0x3a0] sm:$0xff]
    %v245 = vld [vmem:[#allocation3 + $0x3a8] sm:$0xff]
    %v246 = vld [vmem:[#allocation3 + $0x3b0] sm:$0xff]
    %v247 = vld [vmem:[#allocation3 + $0x3b8] sm:$0xff]
    %v248 = vld [vmem:[#allocation3 + $0x3c0] sm:$0xff]
    %v249 = vld [vmem:[#allocation3 + $0x3c8] sm:$0xff]
    %v250 = vld [vmem:[#allocation3 + $0x3d0] sm:$0xff]
    %v251 = vld [vmem:[#allocation3 + $0x3d8] sm:$0xff]
    %v252 = vld [vmem:[#allocation3 + $0x3e0] sm:$0xff]
    %v253 = vld [vmem:[#allocation3 + $0x3e8] sm:$0xff]
    %v254 = vld [vmem:[#allocation3 + $0x3f0] sm:$0xff]
    %v255 = vld [vmem:[#allocation3 + $0x3f8] sm:$0xff]
    %v256 = vld [vmem:[#allocation3 + $0x400] sm:$0xff]
    %v257 = vld [vmem:[#allocation3 + $0x408] sm:$0xff]
    %v258 = vld [vmem:[#allocation3 + $0x410] sm:$0xff]
    %v259 = vld [vmem:[#allocation3 + $0x418] sm:$0xff]
    %v260 = vld [vmem:[#allocation3 + $0x420] sm:$0xff]
    %v261 = vld [vmem:[#allocation3 + $0x428] sm:$0xff]
    %v262 = vld [vmem:[#allocation3 + $0x430] sm:$0xff]
    %v263 = vld [vmem:[#allocation3 + $0x438] sm:$0xff]
    %v264 = vld [vmem:[#allocation3 + $0x440] sm:$0xff]
    %v265 = vld [vmem:[#allocation3 + $0x448] sm:$0xff]
    %v266 = vld [vmem:[#allocation3 + $0x450] sm:$0xff]
    %v267 = vld [vmem:[#allocation3 + $0x458] sm:$0xff]
    %v268 = vld [vmem:[#allocation3 + $0x460] sm:$0xff]
    %v269 = vld [vmem:[#allocation3 + $0x468] sm:$0xff]
    %v270 = vld [vmem:[#allocation3 + $0x470] sm:$0xff]
    %v271 = vld [vmem:[#allocation3 + $0x478] sm:$0xff]
    %v272 = vld [vmem:[#allocation3 + $0x480] sm:$0xff]
    %v273 = vld [vmem:[#allocation3 + $0x488] sm:$0xff]
    %v274 = vld [vmem:[#allocation3 + $0x490] sm:$0xff]
    %v275 = vld [vmem:[#allocation3 + $0x498] sm:$0xff]
    %v276 = vld [vmem:[#allocation3 + $0x4a0] sm:$0xff]
    %v277 = vld [vmem:[#allocation3 + $0x4a8] sm:$0xff]
    %v278 = vld [vmem:[#allocation3 + $0x4b0] sm:$0xff]
    %v279 = vld [vmem:[#allocation3 + $0x4b8] sm:$0xff]
    %v280 = vld [vmem:[#allocation3 + $0x4c0] sm:$0xff]
    %v281 = vld [vmem:[#allocation3 + $0x4c8] sm:$0xff]
    %v282 = vld [vmem:[#allocation3 + $0x4d0] sm:$0xff]
    %v283 = vld [vmem:[#allocation3 + $0x4d8] sm:$0xff]
    %v284 = vld [vmem:[#allocation3 + $0x4e0] sm:$0xff]
    %v285 = vld [vmem:[#allocation3 + $0x4e8] sm:$0xff]
    %v286 = vld [vmem:[#allocation3 + $0x4f0] sm:$0xff]
    %v287 = vld [vmem:[#allocation3 + $0x4f8] sm:$0xff]
    %v288 = vld [vmem:[#allocation3 + $0x500] sm:$0xff]
    %v289 = vld [vmem:[#allocation3 + $0x508] sm:$0xff]
    %v290 = vld [vmem:[#allocation3 + $0x510] sm:$0xff]
    %v291 = vld [vmem:[#allocation3 + $0x518] sm:$0xff]
    %v292 = vld [vmem:[#allocation3 + $0x520] sm:$0xff]
    %v293 = vld [vmem:[#allocation3 + $0x528] sm:$0xff]
    %v294 = vld [vmem:[#allocation3 + $0x530] sm:$0xff]
    %v295 = vld [vmem:[#allocation3 + $0x538] sm:$0xff]
    %v296 = vld [vmem:[#allocation3 + $0x540] sm:$0xff]
    %v297 = vld [vmem:[#allocation3 + $0x548] sm:$0xff]
    %v298 = vld [vmem:[#allocation3 + $0x550] sm:$0xff]
    %v299 = vld [vmem:[#allocation3 + $0x558] sm:$0xff]
    %v300 = vld [vmem:[#allocation3 + $0x560] sm:$0xff]
    %v301 = vld [vmem:[#allocation3 + $0x568] sm:$0xff]
    %v302 = vld [vmem:[#allocation3 + $0x570] sm:$0xff]
    %v303 = vld [vmem:[#allocation3 + $0x578] sm:$0xff]
    %v304 = vld [vmem:[#allocation3 + $0x580] sm:$0xff]
    %v305 = vld [vmem:[#allocation3 + $0x588] sm:$0xff]
    %v306 = vld [vmem:[#allocation3 + $0x590] sm:$0xff]
    %v307 = vld [vmem:[#allocation3 + $0x598] sm:$0xff]
    %v308 = vld [vmem:[#allocation3 + $0x5a0] sm:$0xff]
    %v309 = vld [vmem:[#allocation3 + $0x5a8] sm:$0xff]
    %v310 = vld [vmem:[#allocation3 + $0x5b0] sm:$0xff]
    %v311 = vld [vmem:[#allocation3 + $0x5b8] sm:$0xff]
    %v312 = vld [vmem:[#allocation3 + $0x5c0] sm:$0xff]
    %v313 = vld [vmem:[#allocation3 + $0x5c8] sm:$0xff]
    %v314 = vld [vmem:[#allocation3 + $0x5d0] sm:$0xff]
    %v315 = vld [vmem:[#allocation3 + $0x5d8] sm:$0xff]
    %v316 = vld [vmem:[#allocation3 + $0x5e0] sm:$0xff]
    %v317 = vld [vmem:[#allocation3 + $0x5e8] sm:$0xff]
    %v318 = vld [vmem:[#allocation3 + $0x5f0] sm:$0xff]
    %v319 = vld [vmem:[#allocation3 + $0x5f8] sm:$0xff]
    %v320 = vld [vmem:[#allocation3 + $0x600] sm:$0xff]
    %v321 = vld [vmem:[#allocation3 + $0x608] sm:$0xff]
    %v322 = vld [vmem:[#allocation3 + $0x610] sm:$0xff]
    %v323 = vld [vmem:[#allocation3 + $0x618] sm:$0xff]
    %v324 = vld [vmem:[#allocation3 + $0x620] sm:$0xff]
    %v325 = vld [vmem:[#allocation3 + $0x628] sm:$0xff]
    %v326 = vld [vmem:[#allocation3 + $0x630] sm:$0xff]
    %v327 = vld [vmem:[#allocation3 + $0x638] sm:$0xff]
    %v328 = vld [vmem:[#allocation3 + $0x640] sm:$0xff]
    %v329 = vld [vmem:[#allocation3 + $0x648] sm:$0xff]
    %v330 = vld [vmem:[#allocation3 + $0x650] sm:$0xff]
    %v331 = vld [vmem:[#allocation3 + $0x658] sm:$0xff]
    %v332 = vld [vmem:[#allocation3 + $0x660] sm:$0xff]
    %v333 = vld [vmem:[#allocation3 + $0x668] sm:$0xff]
    %v334 = vld [vmem:[#allocation3 + $0x670] sm:$0xff]
    %v335 = vld [vmem:[#allocation3 + $0x678] sm:$0xff]
    %v336 = vld [vmem:[#allocation3 + $0x680] sm:$0xff]
    %v337 = vld [vmem:[#allocation3 + $0x688] sm:$0xff]
    %v338 = vld [vmem:[#allocation3 + $0x690] sm:$0xff]
    %v339 = vld [vmem:[#allocation3 + $0x698] sm:$0xff]
    %v340 = vld [vmem:[#allocation3 + $0x6a0] sm:$0xff]
    %v341 = vld [vmem:[#allocation3 + $0x6a8] sm:$0xff]
    %v342 = vld [vmem:[#allocation3 + $0x6b0] sm:$0xff]
    %v343 = vld [vmem:[#allocation3 + $0x6b8] sm:$0xff]
    %v344 = vld [vmem:[#allocation3 + $0x6c0] sm:$0xff]
    %v345 = vld [vmem:[#allocation3 + $0x6c8] sm:$0xff]
    %v346 = vld [vmem:[#allocation3 + $0x6d0] sm:$0xff]
    %v347 = vld [vmem:[#allocation3 + $0x6d8] sm:$0xff]
    %v348 = vld [vmem:[#allocation3 + $0x6e0] sm:$0xff]
    %v349 = vld [vmem:[#allocation3 + $0x6e8] sm:$0xff]
    %v350 = vld [vmem:[#allocation3 + $0x6f0] sm:$0xff]
    %v351 = vld [vmem:[#allocation3 + $0x6f8] sm:$0xff]
    %v352 = vld [vmem:[#allocation3 + $0x700] sm:$0xff]
    %v353 = vld [vmem:[#allocation3 + $0x708] sm:$0xff]
    %v354 = vld [vmem:[#allocation3 + $0x710] sm:$0xff]
    %v355 = vld [vmem:[#allocation3 + $0x718] sm:$0xff]
    %v356 = vld [vmem:[#allocation3 + $0x720] sm:$0xff]
    %v357 = vld [vmem:[#allocation3 + $0x728] sm:$0xff]
    %v358 = vld [vmem:[#allocation3 + $0x730] sm:$0xff]
    %v359 = vld [vmem:[#allocation3 + $0x738] sm:$0xff]
    %v360 = vld [vmem:[#allocation3 + $0x740] sm:$0xff]
    %v361 = vld [vmem:[#allocation3 + $0x748] sm:$0xff]
    %v362 = vld [vmem:[#allocation3 + $0x750] sm:$0xff]
    %v363 = vld [vmem:[#allocation3 + $0x758] sm:$0xff]
    %v364 = vld [vmem:[#allocation3 + $0x760] sm:$0xff]
    %v365 = vld [vmem:[#allocation3 + $0x768] sm:$0xff]
    %v366 = vld [vmem:[#allocation3 + $0x770] sm:$0xff]
    %v367 = vld [vmem:[#allocation3 + $0x778] sm:$0xff]
    %v368 = vld [vmem:[#allocation3 + $0x780] sm:$0xff]
    %v369 = vld [vmem:[#allocation3 + $0x788] sm:$0xff]
    %v370 = vld [vmem:[#allocation3 + $0x790] sm:$0xff]
    %v371 = vld [vmem:[#allocation3 + $0x798] sm:$0xff]
    %v372 = vld [vmem:[#allocation3 + $0x7a0] sm:$0xff]
    %v373 = vld [vmem:[#allocation3 + $0x7a8] sm:$0xff]
    %v374 = vld [vmem:[#allocation3 + $0x7b0] sm:$0xff]
    %v375 = vld [vmem:[#allocation3 + $0x7b8] sm:$0xff]
    %v376 = vld [vmem:[#allocation3 + $0x7c0] sm:$0xff]
    %v377 = vld [vmem:[#allocation3 + $0x7c8] sm:$0xff]
    %v378 = vld [vmem:[#allocation3 + $0x7d0] sm:$0xff]
    %v379 = vld [vmem:[#allocation3 + $0x7d8] sm:$0xff]
    %v380 = vld [vmem:[#allocation3 + $0x7e0] sm:$0xff]
    %v381 = vld [vmem:[#allocation3 + $0x7e8] sm:$0xff]
    %v382 = vld [vmem:[#allocation3 + $0x7f0] sm:$0xff]
    %v383 = vld [vmem:[#allocation3 + $0x7f8] sm:$0xff]
    %v384 = vld [vmem:[#allocation3 + $0x800] sm:$0xff]
    %v385 = vld [vmem:[#allocation3 + $0x808] sm:$0xff]
    %v386 = vld [vmem:[#allocation3 + $0x810] sm:$0xff]
    %v387 = vld [vmem:[#allocation3 + $0x818] sm:$0xff]
    %v388 = vld [vmem:[#allocation3 + $0x820] sm:$0xff]
    %v389 = vld [vmem:[#allocation3 + $0x828] sm:$0xff]
    %v390 = vld [vmem:[#allocation3 + $0x830] sm:$0xff]
    %v391 = vld [vmem:[#allocation3 + $0x838] sm:$0xff]
    %v392 = vld [vmem:[#allocation3 + $0x840] sm:$0xff]
    %v393 = vld [vmem:[#allocation3 + $0x848] sm:$0xff]
    %v394 = vld [vmem:[#allocation3 + $0x850] sm:$0xff]
    %v395 = vld [vmem:[#allocation3 + $0x858] sm:$0xff]
    %v396 = vld [vmem:[#allocation3 + $0x860] sm:$0xff]
    %v397 = vld [vmem:[#allocation3 + $0x868] sm:$0xff]
    %v398 = vld [vmem:[#allocation3 + $0x870] sm:$0xff]
    %v399 = vld [vmem:[#allocation3 + $0x878] sm:$0xff]
    %v400 = vld [vmem:[#allocation3 + $0x880] sm:$0xff]
    %v401 = vld [vmem:[#allocation3 + $0x888] sm:$0xff]
    %v402 = vld [vmem:[#allocation3 + $0x890] sm:$0xff]
    %v403 = vld [vmem:[#allocation3 + $0x898] sm:$0xff]
    %v404 = vld [vmem:[#allocation3 + $0x8a0] sm:$0xff]
    %v405 = vld [vmem:[#allocation3 + $0x8a8] sm:$0xff]
    %v406 = vld [vmem:[#allocation3 + $0x8b0] sm:$0xff]
    %v407 = vld [vmem:[#allocation3 + $0x8b8] sm:$0xff]
    %v408 = vld [vmem:[#allocation3 + $0x8c0] sm:$0xff]
    %v409 = vld [vmem:[#allocation3 + $0x8c8] sm:$0xff]
    %v410 = vld [vmem:[#allocation3 + $0x8d0] sm:$0xff]
    %v411 = vld [vmem:[#allocation3 + $0x8d8] sm:$0xff]
    %v412 = vld [vmem:[#allocation3 + $0x8e0] sm:$0xff]
    %v413 = vld [vmem:[#allocation3 + $0x8e8] sm:$0xff]
    %v414 = vld [vmem:[#allocation3 + $0x8f0] sm:$0xff]
    %v415 = vld [vmem:[#allocation3 + $0x8f8] sm:$0xff]
    %v416 = vld [vmem:[#allocation3 + $0x900] sm:$0xff]
    %v417 = vld [vmem:[#allocation3 + $0x908] sm:$0xff]
    %v418 = vld [vmem:[#allocation3 + $0x910] sm:$0xff]
    %v419 = vld [vmem:[#allocation3 + $0x918] sm:$0xff]
    %v420 = vld [vmem:[#allocation3 + $0x920] sm:$0xff]
    %v421 = vld [vmem:[#allocation3 + $0x928] sm:$0xff]
    %v422 = vld [vmem:[#allocation3 + $0x930] sm:$0xff]
    %v423 = vld [vmem:[#allocation3 + $0x938] sm:$0xff]
    %v424 = vld [vmem:[#allocation3 + $0x940] sm:$0xff]
    %v425 = vld [vmem:[#allocation3 + $0x948] sm:$0xff]
    %v426 = vld [vmem:[#allocation3 + $0x950] sm:$0xff]
    %v427 = vld [vmem:[#allocation3 + $0x958] sm:$0xff]
    %v428 = vld [vmem:[#allocation3 + $0x960] sm:$0xff]
    %v429 = vld [vmem:[#allocation3 + $0x968] sm:$0xff]
    %v430 = vld [vmem:[#allocation3 + $0x970] sm:$0xff]
    %v431 = vld [vmem:[#allocation3 + $0x978] sm:$0xff]
    %v432 = vld [vmem:[#allocation3 + $0x980] sm:$0xff]
    %v433 = vld [vmem:[#allocation3 + $0x988] sm:$0xff]
    %v434 = vld [vmem:[#allocation3 + $0x990] sm:$0xff]
    %v435 = vld [vmem:[#allocation3 + $0x998] sm:$0xff]
    %v436 = vld [vmem:[#allocation3 + $0x9a0] sm:$0xff]
    %v437 = vld [vmem:[#allocation3 + $0x9a8] sm:$0xff]
    %v438 = vld [vmem:[#allocation3 + $0x9b0] sm:$0xff]
    %v439 = vld [vmem:[#allocation3 + $0x9b8] sm:$0xff]
    %v440 = vld [vmem:[#allocation3 + $0x9c0] sm:$0xff]
    %v441 = vld [vmem:[#allocation3 + $0x9c8] sm:$0xff]
    %v442 = vld [vmem:[#allocation3 + $0x9d0] sm:$0xff]
    %v443 = vld [vmem:[#allocation3 + $0x9d8] sm:$0xff]
    %v444 = vld [vmem:[#allocation3 + $0x9e0] sm:$0xff]
    %v445 = vld [vmem:[#allocation3 + $0x9e8] sm:$0xff]
    %v446 = vld [vmem:[#allocation3 + $0x9f0] sm:$0xff]
    %v447 = vld [vmem:[#allocation3 + $0x9f8] sm:$0xff]
    %v448 = vld [vmem:[#allocation3 + $0xa00] sm:$0xff]
    %v449 = vld [vmem:[#allocation3 + $0xa08] sm:$0xff]
    %v450 = vld [vmem:[#allocation3 + $0xa10] sm:$0xff]
    %v451 = vld [vmem:[#allocation3 + $0xa18] sm:$0xff]
    %v452 = vld [vmem:[#allocation3 + $0xa20] sm:$0xff]
    %v453 = vld [vmem:[#allocation3 + $0xa28] sm:$0xff]
    %v454 = vld [vmem:[#allocation3 + $0xa30] sm:$0xff]
    %v455 = vld [vmem:[#allocation3 + $0xa38] sm:$0xff]
    %v456 = vld [vmem:[#allocation3 + $0xa40] sm:$0xff]
    %v457 = vld [vmem:[#allocation3 + $0xa48] sm:$0xff]
    %v458 = vld [vmem:[#allocation3 + $0xa50] sm:$0xff]
    %v459 = vld [vmem:[#allocation3 + $0xa58] sm:$0xff]
    %v460 = vld [vmem:[#allocation3 + $0xa60] sm:$0xff]
    %v461 = vld [vmem:[#allocation3 + $0xa68] sm:$0xff]
    %v462 = vld [vmem:[#allocation3 + $0xa70] sm:$0xff]
    %v463 = vld [vmem:[#allocation3 + $0xa78] sm:$0xff]
    %v464 = vld [vmem:[#allocation3 + $0xa80] sm:$0xff]
    %v465 = vld [vmem:[#allocation3 + $0xa88] sm:$0xff]
    %v466 = vld [vmem:[#allocation3 + $0xa90] sm:$0xff]
    %v467 = vld [vmem:[#allocation3 + $0xa98] sm:$0xff]
    %v468 = vld [vmem:[#allocation3 + $0xaa0] sm:$0xff]
    %v469 = vld [vmem:[#allocation3 + $0xaa8] sm:$0xff]
    %v470 = vld [vmem:[#allocation3 + $0xab0] sm:$0xff]
    %v471 = vld [vmem:[#allocation3 + $0xab8] sm:$0xff]
    %v472 = vld [vmem:[#allocation3 + $0xac0] sm:$0xff]
    %v473 = vld [vmem:[#allocation3 + $0xac8] sm:$0xff]
    %v474 = vld [vmem:[#allocation3 + $0xad0] sm:$0xff]
    %v475 = vld [vmem:[#allocation3 + $0xad8] sm:$0xff]
    %v476 = vld [vmem:[#allocation3 + $0xae0] sm:$0xff]
    %v477 = vld [vmem:[#allocation3 + $0xae8] sm:$0xff]
    %v478 = vld [vmem:[#allocation3 + $0xaf0] sm:$0xff]
    %v479 = vld [vmem:[#allocation3 + $0xaf8] sm:$0xff]
    %v480 = vld [vmem:[#allocation3 + $0xb00] sm:$0xff]
    %v481 = vld [vmem:[#allocation3 + $0xb08] sm:$0xff]
    %v482 = vld [vmem:[#allocation3 + $0xb10] sm:$0xff]
    %v483 = vld [vmem:[#allocation3 + $0xb18] sm:$0xff]
    %v484 = vld [vmem:[#allocation3 + $0xb20] sm:$0xff]
    %v485 = vld [vmem:[#allocation3 + $0xb28] sm:$0xff]
    %v486 = vld [vmem:[#allocation3 + $0xb30] sm:$0xff]
    %v487 = vld [vmem:[#allocation3 + $0xb38] sm:$0xff]
    %v488 = vld [vmem:[#allocation3 + $0xb40] sm:$0xff]
    %v489 = vld [vmem:[#allocation3 + $0xb48] sm:$0xff]
    %v490 = vld [vmem:[#allocation3 + $0xb50] sm:$0xff]
    %v491 = vld [vmem:[#allocation3 + $0xb58] sm:$0xff]
    %v492 = vld [vmem:[#allocation3 + $0xb60] sm:$0xff]
    %v493 = vld [vmem:[#allocation3 + $0xb68] sm:$0xff]
    %v494 = vld [vmem:[#allocation3 + $0xb70] sm:$0xff]
    %v495 = vld [vmem:[#allocation3 + $0xb78] sm:$0xff]
    %v496 = vld [vmem:[#allocation3 + $0xb80] sm:$0xff]
    %v497 = vld [vmem:[#allocation3 + $0xb88] sm:$0xff]
    %v498 = vld [vmem:[#allocation3 + $0xb90] sm:$0xff]
    %v499 = vld [vmem:[#allocation3 + $0xb98] sm:$0xff]
    %v500 = vld [vmem:[#allocation3 + $0xba0] sm:$0xff]
    %v501 = vld [vmem:[#allocation3 + $0xba8] sm:$0xff]
    %v502 = vld [vmem:[#allocation3 + $0xbb0] sm:$0xff]
    %v503 = vld [vmem:[#allocation3 + $0xbb8] sm:$0xff]
    %v504 = vld [vmem:[#allocation3 + $0xbc0] sm:$0xff]
    %v505 = vld [vmem:[#allocation3 + $0xbc8] sm:$0xff]
    %v506 = vld [vmem:[#allocation3 + $0xbd0] sm:$0xff]
    %v507 = vld [vmem:[#allocation3 + $0xbd8] sm:$0xff]
    %v508 = vld [vmem:[#allocation3 + $0xbe0] sm:$0xff]
    %v509 = vld [vmem:[#allocation3 + $0xbe8] sm:$0xff]
    %v510 = vld [vmem:[#allocation3 + $0xbf0] sm:$0xff]
    %v511 = vld [vmem:[#allocation3 + $0xbf8] sm:$0xff]
    %v512 = vld [vmem:[%s1] sm:$0xff]
    %v513 = vld [vmem:[%s1 + $0x8] sm:$0xff]
    %v514 = vld [vmem:[%s1 + $0x10] sm:$0xff]
    %v515 = vld [vmem:[%s1 + $0x18] sm:$0xff]
    %v516 = vld [vmem:[%s1 + $0x20] sm:$0xff]
    %v517 = vld [vmem:[%s1 + $0x28] sm:$0xff]
    %v518 = vld [vmem:[%s1 + $0x30] sm:$0xff]
    %v519 = vld [vmem:[%s1 + $0x38] sm:$0xff]
    %v520 = vld [vmem:[%s1 + $0x40] sm:$0xff]
    %v521 = vld [vmem:[%s1 + $0x48] sm:$0xff]
    %v522 = vld [vmem:[%s1 + $0x50] sm:$0xff]
    %v523 = vld [vmem:[%s1 + $0x58] sm:$0xff]
    %v524 = vld [vmem:[%s1 + $0x60] sm:$0xff]
    %v525 = vld [vmem:[%s1 + $0x68] sm:$0xff]
    %v526 = vld [vmem:[%s1 + $0x70] sm:$0xff]
    %v527 = vld [vmem:[%s1 + $0x78] sm:$0xff]
    %v534 = vunpack.c.l.b16 %v122
    %v535 = vunpack.c.h.b16 %v122
    %v536 = vunpack.c.l.b16 %v123
    %v537 = vunpack.c.h.b16 %v123
    %v538 = vunpack.c.l.b16 %v124
    %v539 = vunpack.c.h.b16 %v124
    %v540 = vunpack.c.l.b16 %v125
    %v541 = vunpack.c.h.b16 %v125
    %v542 = vunpack.c.l.b16 %v126
    %v543 = vunpack.c.h.b16 %v126
    %v544 = vunpack.c.l.b16 %v127
    %v545 = vunpack.c.h.b16 %v127
    %v546 = vpack.c.b16 %v540, %v534
    %v547 = vpack.c.b16 %v541, %v535
    %v548 = vpack.c.b16 %v542, %v536
    %v549 = vpack.c.b16 %v543, %v537
    %v550 = vpack.c.b16 %v544, %v538
    %v551 = vpack.c.b16 %v545, %v539
    %v942 = vunpack.c.l.b16 %v128
    %v943 = vunpack.c.h.b16 %v128
    %v944 = vunpack.c.l.b16 %v129
    %v945 = vunpack.c.h.b16 %v129
    %v946 = vunpack.c.l.b16 %v130
    %v947 = vunpack.c.h.b16 %v130
    %v948 = vunpack.c.l.b16 %v131
    %v949 = vunpack.c.h.b16 %v131
    %v950 = vunpack.c.l.b16 %v132
    %v951 = vunpack.c.h.b16 %v132
    %v952 = vunpack.c.l.b16 %v133
    %v953 = vunpack.c.h.b16 %v133
    %v954 = vunpack.c.l.b16 %v134
    %v955 = vunpack.c.h.b16 %v134
    %v956 = vunpack.c.l.b16 %v135
    %v957 = vunpack.c.h.b16 %v135
    %v958 = vunpack.c.l.b16 %v136
    %v959 = vunpack.c.h.b16 %v136
    %v960 = vunpack.c.l.b16 %v137
    %v961 = vunpack.c.h.b16 %v137
    %v962 = vunpack.c.l.b16 %v138
    %v963 = vunpack.c.h.b16 %v138
    %v964 = vunpack.c.l.b16 %v139
    %v965 = vunpack.c.h.b16 %v139
    %v966 = vunpack.c.l.b16 %v140
    %v967 = vunpack.c.h.b16 %v140
    %v968 = vunpack.c.l.b16 %v141
    %v969 = vunpack.c.h.b16 %v141
    %v970 = vunpack.c.l.b16 %v142
    %v971 = vunpack.c.h.b16 %v142
    %v972 = vunpack.c.l.b16 %v143
    %v973 = vunpack.c.h.b16 %v143
    %v974 = vunpack.c.l.b16 %v144
    %v975 = vunpack.c.h.b16 %v144
    %v976 = vunpack.c.l.b16 %v145
    %v977 = vunpack.c.h.b16 %v145
    %v978 = vunpack.c.l.b16 %v146
    %v979 = vunpack.c.h.b16 %v146
    %v980 = vunpack.c.l.b16 %v147
    %v981 = vunpack.c.h.b16 %v147
    %v982 = vunpack.c.l.b16 %v148
    %v983 = vunpack.c.h.b16 %v148
    %v984 = vunpack.c.l.b16 %v149
    %v985 = vunpack.c.h.b16 %v149
    %v986 = vunpack.c.l.b16 %v150
    %v987 = vunpack.c.h.b16 %v150
    %v988 = vunpack.c.l.b16 %v151
    %v989 = vunpack.c.h.b16 %v151
    %v990 = vunpack.c.l.b16 %v152
    %v991 = vunpack.c.h.b16 %v152
    %v992 = vunpack.c.l.b16 %v153
    %v993 = vunpack.c.h.b16 %v153
    %v994 = vunpack.c.l.b16 %v154
    %v995 = vunpack.c.h.b16 %v154
    %v996 = vunpack.c.l.b16 %v155
    %v997 = vunpack.c.h.b16 %v155
    %v998 = vunpack.c.l.b16 %v156
    %v999 = vunpack.c.h.b16 %v156
    %v1000 = vunpack.c.l.b16 %v157
    %v1001 = vunpack.c.h.b16 %v157
    %v1002 = vunpack.c.l.b16 %v158
    %v1003 = vunpack.c.h.b16 %v158
    %v1004 = vunpack.c.l.b16 %v159
    %v1005 = vunpack.c.h.b16 %v159
    %v1006 = vunpack.c.l.b16 %v160
    %v1007 = vunpack.c.h.b16 %v160
    %v1008 = vunpack.c.l.b16 %v161
    %v1009 = vunpack.c.h.b16 %v161
    %v1010 = vunpack.c.l.b16 %v162
    %v1011 = vunpack.c.h.b16 %v162
    %v1012 = vunpack.c.l.b16 %v163
    %v1013 = vunpack.c.h.b16 %v163
    %v1014 = vunpack.c.l.b16 %v164
    %v1015 = vunpack.c.h.b16 %v164
    %v1016 = vunpack.c.l.b16 %v165
    %v1017 = vunpack.c.h.b16 %v165
    %v1018 = vunpack.c.l.b16 %v166
    %v1019 = vunpack.c.h.b16 %v166
    %v1020 = vunpack.c.l.b16 %v167
    %v1021 = vunpack.c.h.b16 %v167
    %v1022 = vunpack.c.l.b16 %v168
    %v1023 = vunpack.c.h.b16 %v168
    %v1024 = vunpack.c.l.b16 %v169
    %v1025 = vunpack.c.h.b16 %v169
    %v1026 = vunpack.c.l.b16 %v170
    %v1027 = vunpack.c.h.b16 %v170
    %v1028 = vunpack.c.l.b16 %v171
    %v1029 = vunpack.c.h.b16 %v171
    %v1030 = vunpack.c.l.b16 %v172
    %v1031 = vunpack.c.h.b16 %v172
    %v1032 = vunpack.c.l.b16 %v173
    %v1033 = vunpack.c.h.b16 %v173
    %v1034 = vunpack.c.l.b16 %v174
    %v1035 = vunpack.c.h.b16 %v174
    %v1036 = vunpack.c.l.b16 %v175
    %v1037 = vunpack.c.h.b16 %v175
    %v1038 = vunpack.c.l.b16 %v176
    %v1039 = vunpack.c.h.b16 %v176
    %v1040 = vunpack.c.l.b16 %v177
    %v1041 = vunpack.c.h.b16 %v177
    %v1042 = vunpack.c.l.b16 %v178
    %v1043 = vunpack.c.h.b16 %v178
    %v1044 = vunpack.c.l.b16 %v179
    %v1045 = vunpack.c.h.b16 %v179
    %v1046 = vunpack.c.l.b16 %v180
    %v1047 = vunpack.c.h.b16 %v180
    %v1048 = vunpack.c.l.b16 %v181
    %v1049 = vunpack.c.h.b16 %v181
    %v1050 = vunpack.c.l.b16 %v182
    %v1051 = vunpack.c.h.b16 %v182
    %v1052 = vunpack.c.l.b16 %v183
    %v1053 = vunpack.c.h.b16 %v183
    %v1054 = vunpack.c.l.b16 %v184
    %v1055 = vunpack.c.h.b16 %v184
    %v1056 = vunpack.c.l.b16 %v185
    %v1057 = vunpack.c.h.b16 %v185
    %v1058 = vunpack.c.l.b16 %v186
    %v1059 = vunpack.c.h.b16 %v186
    %v1060 = vunpack.c.l.b16 %v187
    %v1061 = vunpack.c.h.b16 %v187
    %v1062 = vunpack.c.l.b16 %v188
    %v1063 = vunpack.c.h.b16 %v188
    %v1064 = vunpack.c.l.b16 %v189
    %v1065 = vunpack.c.h.b16 %v189
    %v1066 = vunpack.c.l.b16 %v190
    %v1067 = vunpack.c.h.b16 %v190
    %v1068 = vunpack.c.l.b16 %v191
    %v1069 = vunpack.c.h.b16 %v191
    %v1070 = vunpack.c.l.b16 %v192
    %v1071 = vunpack.c.h.b16 %v192
    %v1072 = vunpack.c.l.b16 %v193
    %v1073 = vunpack.c.h.b16 %v193
    %v1074 = vunpack.c.l.b16 %v194
    %v1075 = vunpack.c.h.b16 %v194
    %v1076 = vunpack.c.l.b16 %v195
    %v1077 = vunpack.c.h.b16 %v195
    %v1078 = vunpack.c.l.b16 %v196
    %v1079 = vunpack.c.h.b16 %v196
    %v1080 = vunpack.c.l.b16 %v197
    %v1081 = vunpack.c.h.b16 %v197
    %v1082 = vunpack.c.l.b16 %v198
    %v1083 = vunpack.c.h.b16 %v198
    %v1084 = vunpack.c.l.b16 %v199
    %v1085 = vunpack.c.h.b16 %v199
    %v1086 = vunpack.c.l.b16 %v200
    %v1087 = vunpack.c.h.b16 %v200
    %v1088 = vunpack.c.l.b16 %v201
    %v1089 = vunpack.c.h.b16 %v201
    %v1090 = vunpack.c.l.b16 %v202
    %v1091 = vunpack.c.h.b16 %v202
    %v1092 = vunpack.c.l.b16 %v203
    %v1093 = vunpack.c.h.b16 %v203
    %v1094 = vunpack.c.l.b16 %v204
    %v1095 = vunpack.c.h.b16 %v204
    %v1096 = vunpack.c.l.b16 %v205
    %v1097 = vunpack.c.h.b16 %v205
    %v1098 = vunpack.c.l.b16 %v206
    %v1099 = vunpack.c.h.b16 %v206
    %v1100 = vunpack.c.l.b16 %v207
    %v1101 = vunpack.c.h.b16 %v207
    %v1102 = vunpack.c.l.b16 %v208
    %v1103 = vunpack.c.h.b16 %v208
    %v1104 = vunpack.c.l.b16 %v209
    %v1105 = vunpack.c.h.b16 %v209
    %v1106 = vunpack.c.l.b16 %v210
    %v1107 = vunpack.c.h.b16 %v210
    %v1108 = vunpack.c.l.b16 %v211
    %v1109 = vunpack.c.h.b16 %v211
    %v1110 = vunpack.c.l.b16 %v212
    %v1111 = vunpack.c.h.b16 %v212
    %v1112 = vunpack.c.l.b16 %v213
    %v1113 = vunpack.c.h.b16 %v213
    %v1114 = vunpack.c.l.b16 %v214
    %v1115 = vunpack.c.h.b16 %v214
    %v1116 = vunpack.c.l.b16 %v215
    %v1117 = vunpack.c.h.b16 %v215
    %v1118 = vunpack.c.l.b16 %v216
    %v1119 = vunpack.c.h.b16 %v216
    %v1120 = vunpack.c.l.b16 %v217
    %v1121 = vunpack.c.h.b16 %v217
    %v1122 = vunpack.c.l.b16 %v218
    %v1123 = vunpack.c.h.b16 %v218
    %v1124 = vunpack.c.l.b16 %v219
    %v1125 = vunpack.c.h.b16 %v219
    %v1126 = vunpack.c.l.b16 %v220
    %v1127 = vunpack.c.h.b16 %v220
    %v1128 = vunpack.c.l.b16 %v221
    %v1129 = vunpack.c.h.b16 %v221
    %v1130 = vunpack.c.l.b16 %v222
    %v1131 = vunpack.c.h.b16 %v222
    %v1132 = vunpack.c.l.b16 %v223
    %v1133 = vunpack.c.h.b16 %v223
    %v1134 = vunpack.c.l.b16 %v224
    %v1135 = vunpack.c.h.b16 %v224
    %v1136 = vunpack.c.l.b16 %v225
    %v1137 = vunpack.c.h.b16 %v225
    %v1138 = vunpack.c.l.b16 %v226
    %v1139 = vunpack.c.h.b16 %v226
    %v1140 = vunpack.c.l.b16 %v227
    %v1141 = vunpack.c.h.b16 %v227
    %v1142 = vunpack.c.l.b16 %v228
    %v1143 = vunpack.c.h.b16 %v228
    %v1144 = vunpack.c.l.b16 %v229
    %v1145 = vunpack.c.h.b16 %v229
    %v1146 = vunpack.c.l.b16 %v230
    %v1147 = vunpack.c.h.b16 %v230
    %v1148 = vunpack.c.l.b16 %v231
    %v1149 = vunpack.c.h.b16 %v231
    %v1150 = vunpack.c.l.b16 %v232
    %v1151 = vunpack.c.h.b16 %v232
    %v1152 = vunpack.c.l.b16 %v233
    %v1153 = vunpack.c.h.b16 %v233
    %v1154 = vunpack.c.l.b16 %v234
    %v1155 = vunpack.c.h.b16 %v234
    %v1156 = vunpack.c.l.b16 %v235
    %v1157 = vunpack.c.h.b16 %v235
    %v1158 = vunpack.c.l.b16 %v236
    %v1159 = vunpack.c.h.b16 %v236
    %v1160 = vunpack.c.l.b16 %v237
    %v1161 = vunpack.c.h.b16 %v237
    %v1162 = vunpack.c.l.b16 %v238
    %v1163 = vunpack.c.h.b16 %v238
    %v1164 = vunpack.c.l.b16 %v239
    %v1165 = vunpack.c.h.b16 %v239
    %v1166 = vunpack.c.l.b16 %v240
    %v1167 = vunpack.c.h.b16 %v240
    %v1168 = vunpack.c.l.b16 %v241
    %v1169 = vunpack.c.h.b16 %v241
    %v1170 = vunpack.c.l.b16 %v242
    %v1171 = vunpack.c.h.b16 %v242
    %v1172 = vunpack.c.l.b16 %v243
    %v1173 = vunpack.c.h.b16 %v243
    %v1174 = vunpack.c.l.b16 %v244
    %v1175 = vunpack.c.h.b16 %v244
    %v1176 = vunpack.c.l.b16 %v245
    %v1177 = vunpack.c.h.b16 %v245
    %v1178 = vunpack.c.l.b16 %v246
    %v1179 = vunpack.c.h.b16 %v246
    %v1180 = vunpack.c.l.b16 %v247
    %v1181 = vunpack.c.h.b16 %v247
    %v1182 = vunpack.c.l.b16 %v248
    %v1183 = vunpack.c.h.b16 %v248
    %v1184 = vunpack.c.l.b16 %v249
    %v1185 = vunpack.c.h.b16 %v249
    %v1186 = vunpack.c.l.b16 %v250
    %v1187 = vunpack.c.h.b16 %v250
    %v1188 = vunpack.c.l.b16 %v251
    %v1189 = vunpack.c.h.b16 %v251
    %v1190 = vunpack.c.l.b16 %v252
    %v1191 = vunpack.c.h.b16 %v252
    %v1192 = vunpack.c.l.b16 %v253
    %v1193 = vunpack.c.h.b16 %v253
    %v1194 = vunpack.c.l.b16 %v254
    %v1195 = vunpack.c.h.b16 %v254
    %v1196 = vunpack.c.l.b16 %v255
    %v1197 = vunpack.c.h.b16 %v255
    %v1198 = vunpack.c.l.b16 %v256
    %v1199 = vunpack.c.h.b16 %v256
    %v1200 = vunpack.c.l.b16 %v257
    %v1201 = vunpack.c.h.b16 %v257
    %v1202 = vunpack.c.l.b16 %v258
    %v1203 = vunpack.c.h.b16 %v258
    %v1204 = vunpack.c.l.b16 %v259
    %v1205 = vunpack.c.h.b16 %v259
    %v1206 = vunpack.c.l.b16 %v260
    %v1207 = vunpack.c.h.b16 %v260
    %v1208 = vunpack.c.l.b16 %v261
    %v1209 = vunpack.c.h.b16 %v261
    %v1210 = vunpack.c.l.b16 %v262
    %v1211 = vunpack.c.h.b16 %v262
    %v1212 = vunpack.c.l.b16 %v263
    %v1213 = vunpack.c.h.b16 %v263
    %v1214 = vunpack.c.l.b16 %v264
    %v1215 = vunpack.c.h.b16 %v264
    %v1216 = vunpack.c.l.b16 %v265
    %v1217 = vunpack.c.h.b16 %v265
    %v1218 = vunpack.c.l.b16 %v266
    %v1219 = vunpack.c.h.b16 %v266
    %v1220 = vunpack.c.l.b16 %v267
    %v1221 = vunpack.c.h.b16 %v267
    %v1222 = vunpack.c.l.b16 %v268
    %v1223 = vunpack.c.h.b16 %v268
    %v1224 = vunpack.c.l.b16 %v269
    %v1225 = vunpack.c.h.b16 %v269
    %v1226 = vunpack.c.l.b16 %v270
    %v1227 = vunpack.c.h.b16 %v270
    %v1228 = vunpack.c.l.b16 %v271
    %v1229 = vunpack.c.h.b16 %v271
    %v1230 = vunpack.c.l.b16 %v272
    %v1231 = vunpack.c.h.b16 %v272
    %v1232 = vunpack.c.l.b16 %v273
    %v1233 = vunpack.c.h.b16 %v273
    %v1234 = vunpack.c.l.b16 %v274
    %v1235 = vunpack.c.h.b16 %v274
    %v1236 = vunpack.c.l.b16 %v275
    %v1237 = vunpack.c.h.b16 %v275
    %v1238 = vunpack.c.l.b16 %v276
    %v1239 = vunpack.c.h.b16 %v276
    %v1240 = vunpack.c.l.b16 %v277
    %v1241 = vunpack.c.h.b16 %v277
    %v1242 = vunpack.c.l.b16 %v278
    %v1243 = vunpack.c.h.b16 %v278
    %v1244 = vunpack.c.l.b16 %v279
    %v1245 = vunpack.c.h.b16 %v279
    %v1246 = vunpack.c.l.b16 %v280
    %v1247 = vunpack.c.h.b16 %v280
    %v1248 = vunpack.c.l.b16 %v281
    %v1249 = vunpack.c.h.b16 %v281
    %v1250 = vunpack.c.l.b16 %v282
    %v1251 = vunpack.c.h.b16 %v282
    %v1252 = vunpack.c.l.b16 %v283
    %v1253 = vunpack.c.h.b16 %v283
    %v1254 = vunpack.c.l.b16 %v284
    %v1255 = vunpack.c.h.b16 %v284
    %v1256 = vunpack.c.l.b16 %v285
    %v1257 = vunpack.c.h.b16 %v285
    %v1258 = vunpack.c.l.b16 %v286
    %v1259 = vunpack.c.h.b16 %v286
    %v1260 = vunpack.c.l.b16 %v287
    %v1261 = vunpack.c.h.b16 %v287
    %v1262 = vunpack.c.l.b16 %v288
    %v1263 = vunpack.c.h.b16 %v288
    %v1264 = vunpack.c.l.b16 %v289
    %v1265 = vunpack.c.h.b16 %v289
    %v1266 = vunpack.c.l.b16 %v290
    %v1267 = vunpack.c.h.b16 %v290
    %v1268 = vunpack.c.l.b16 %v291
    %v1269 = vunpack.c.h.b16 %v291
    %v1270 = vunpack.c.l.b16 %v292
    %v1271 = vunpack.c.h.b16 %v292
    %v1272 = vunpack.c.l.b16 %v293
    %v1273 = vunpack.c.h.b16 %v293
    %v1274 = vunpack.c.l.b16 %v294
    %v1275 = vunpack.c.h.b16 %v294
    %v1276 = vunpack.c.l.b16 %v295
    %v1277 = vunpack.c.h.b16 %v295
    %v1278 = vunpack.c.l.b16 %v296
    %v1279 = vunpack.c.h.b16 %v296
    %v1280 = vunpack.c.l.b16 %v297
    %v1281 = vunpack.c.h.b16 %v297
    %v1282 = vunpack.c.l.b16 %v298
    %v1283 = vunpack.c.h.b16 %v298
    %v1284 = vunpack.c.l.b16 %v299
    %v1285 = vunpack.c.h.b16 %v299
    %v1286 = vunpack.c.l.b16 %v300
    %v1287 = vunpack.c.h.b16 %v300
    %v1288 = vunpack.c.l.b16 %v301
    %v1289 = vunpack.c.h.b16 %v301
    %v1290 = vunpack.c.l.b16 %v302
    %v1291 = vunpack.c.h.b16 %v302
    %v1292 = vunpack.c.l.b16 %v303
    %v1293 = vunpack.c.h.b16 %v303
    %v1294 = vunpack.c.l.b16 %v304
    %v1295 = vunpack.c.h.b16 %v304
    %v1296 = vunpack.c.l.b16 %v305
    %v1297 = vunpack.c.h.b16 %v305
    %v1298 = vunpack.c.l.b16 %v306
    %v1299 = vunpack.c.h.b16 %v306
    %v1300 = vunpack.c.l.b16 %v307
    %v1301 = vunpack.c.h.b16 %v307
    %v1302 = vunpack.c.l.b16 %v308
    %v1303 = vunpack.c.h.b16 %v308
    %v1304 = vunpack.c.l.b16 %v309
    %v1305 = vunpack.c.h.b16 %v309
    %v1306 = vunpack.c.l.b16 %v310
    %v1307 = vunpack.c.h.b16 %v310
    %v1308 = vunpack.c.l.b16 %v311
    %v1309 = vunpack.c.h.b16 %v311
    %v1310 = vunpack.c.l.b16 %v312
    %v1311 = vunpack.c.h.b16 %v312
    %v1312 = vunpack.c.l.b16 %v313
    %v1313 = vunpack.c.h.b16 %v313
    %v1314 = vunpack.c.l.b16 %v314
    %v1315 = vunpack.c.h.b16 %v314
    %v1316 = vunpack.c.l.b16 %v315
    %v1317 = vunpack.c.h.b16 %v315
    %v1318 = vunpack.c.l.b16 %v316
    %v1319 = vunpack.c.h.b16 %v316
    %v1320 = vunpack.c.l.b16 %v317
    %v1321 = vunpack.c.h.b16 %v317
    %v1322 = vunpack.c.l.b16 %v318
    %v1323 = vunpack.c.h.b16 %v318
    %v1324 = vunpack.c.l.b16 %v319
    %v1325 = vunpack.c.h.b16 %v319
    %v1326 = vunpack.c.l.b16 %v320
    %v1327 = vunpack.c.h.b16 %v320
    %v1328 = vunpack.c.l.b16 %v321
    %v1329 = vunpack.c.h.b16 %v321
    %v1330 = vunpack.c.l.b16 %v322
    %v1331 = vunpack.c.h.b16 %v322
    %v1332 = vunpack.c.l.b16 %v323
    %v1333 = vunpack.c.h.b16 %v323
    %v1334 = vunpack.c.l.b16 %v324
    %v1335 = vunpack.c.h.b16 %v324
    %v1336 = vunpack.c.l.b16 %v325
    %v1337 = vunpack.c.h.b16 %v325
    %v1338 = vunpack.c.l.b16 %v326
    %v1339 = vunpack.c.h.b16 %v326
    %v1340 = vunpack.c.l.b16 %v327
    %v1341 = vunpack.c.h.b16 %v327
    %v1342 = vunpack.c.l.b16 %v328
    %v1343 = vunpack.c.h.b16 %v328
    %v1344 = vunpack.c.l.b16 %v329
    %v1345 = vunpack.c.h.b16 %v329
    %v1346 = vunpack.c.l.b16 %v330
    %v1347 = vunpack.c.h.b16 %v330
    %v1348 = vunpack.c.l.b16 %v331
    %v1349 = vunpack.c.h.b16 %v331
    %v1350 = vunpack.c.l.b16 %v332
    %v1351 = vunpack.c.h.b16 %v332
    %v1352 = vunpack.c.l.b16 %v333
    %v1353 = vunpack.c.h.b16 %v333
    %v1354 = vunpack.c.l.b16 %v334
    %v1355 = vunpack.c.h.b16 %v334
    %v1356 = vunpack.c.l.b16 %v335
    %v1357 = vunpack.c.h.b16 %v335
    %v1358 = vunpack.c.l.b16 %v336
    %v1359 = vunpack.c.h.b16 %v336
    %v1360 = vunpack.c.l.b16 %v337
    %v1361 = vunpack.c.h.b16 %v337
    %v1362 = vunpack.c.l.b16 %v338
    %v1363 = vunpack.c.h.b16 %v338
    %v1364 = vunpack.c.l.b16 %v339
    %v1365 = vunpack.c.h.b16 %v339
    %v1366 = vunpack.c.l.b16 %v340
    %v1367 = vunpack.c.h.b16 %v340
    %v1368 = vunpack.c.l.b16 %v341
    %v1369 = vunpack.c.h.b16 %v341
    %v1370 = vunpack.c.l.b16 %v342
    %v1371 = vunpack.c.h.b16 %v342
    %v1372 = vunpack.c.l.b16 %v343
    %v1373 = vunpack.c.h.b16 %v343
    %v1374 = vunpack.c.l.b16 %v344
    %v1375 = vunpack.c.h.b16 %v344
    %v1376 = vunpack.c.l.b16 %v345
    %v1377 = vunpack.c.h.b16 %v345
    %v1378 = vunpack.c.l.b16 %v346
    %v1379 = vunpack.c.h.b16 %v346
    %v1380 = vunpack.c.l.b16 %v347
    %v1381 = vunpack.c.h.b16 %v347
    %v1382 = vunpack.c.l.b16 %v348
    %v1383 = vunpack.c.h.b16 %v348
    %v1384 = vunpack.c.l.b16 %v349
    %v1385 = vunpack.c.h.b16 %v349
    %v1386 = vunpack.c.l.b16 %v350
    %v1387 = vunpack.c.h.b16 %v350
    %v1388 = vunpack.c.l.b16 %v351
    %v1389 = vunpack.c.h.b16 %v351
    %v1390 = vunpack.c.l.b16 %v352
    %v1391 = vunpack.c.h.b16 %v352
    %v1392 = vunpack.c.l.b16 %v353
    %v1393 = vunpack.c.h.b16 %v353
    %v1394 = vunpack.c.l.b16 %v354
    %v1395 = vunpack.c.h.b16 %v354
    %v1396 = vunpack.c.l.b16 %v355
    %v1397 = vunpack.c.h.b16 %v355
    %v1398 = vunpack.c.l.b16 %v356
    %v1399 = vunpack.c.h.b16 %v356
    %v1400 = vunpack.c.l.b16 %v357
    %v1401 = vunpack.c.h.b16 %v357
    %v1402 = vunpack.c.l.b16 %v358
    %v1403 = vunpack.c.h.b16 %v358
    %v1404 = vunpack.c.l.b16 %v359
    %v1405 = vunpack.c.h.b16 %v359
    %v1406 = vunpack.c.l.b16 %v360
    %v1407 = vunpack.c.h.b16 %v360
    %v1408 = vunpack.c.l.b16 %v361
    %v1409 = vunpack.c.h.b16 %v361
    %v1410 = vunpack.c.l.b16 %v362
    %v1411 = vunpack.c.h.b16 %v362
    %v1412 = vunpack.c.l.b16 %v363
    %v1413 = vunpack.c.h.b16 %v363
    %v1414 = vunpack.c.l.b16 %v364
    %v1415 = vunpack.c.h.b16 %v364
    %v1416 = vunpack.c.l.b16 %v365
    %v1417 = vunpack.c.h.b16 %v365
    %v1418 = vunpack.c.l.b16 %v366
    %v1419 = vunpack.c.h.b16 %v366
    %v1420 = vunpack.c.l.b16 %v367
    %v1421 = vunpack.c.h.b16 %v367
    %v1422 = vunpack.c.l.b16 %v368
    %v1423 = vunpack.c.h.b16 %v368
    %v1424 = vunpack.c.l.b16 %v369
    %v1425 = vunpack.c.h.b16 %v369
    %v1426 = vunpack.c.l.b16 %v370
    %v1427 = vunpack.c.h.b16 %v370
    %v1428 = vunpack.c.l.b16 %v371
    %v1429 = vunpack.c.h.b16 %v371
    %v1430 = vunpack.c.l.b16 %v372
    %v1431 = vunpack.c.h.b16 %v372
    %v1432 = vunpack.c.l.b16 %v373
    %v1433 = vunpack.c.h.b16 %v373
    %v1434 = vunpack.c.l.b16 %v374
    %v1435 = vunpack.c.h.b16 %v374
    %v1436 = vunpack.c.l.b16 %v375
    %v1437 = vunpack.c.h.b16 %v375
    %v1438 = vunpack.c.l.b16 %v376
    %v1439 = vunpack.c.h.b16 %v376
    %v1440 = vunpack.c.l.b16 %v377
    %v1441 = vunpack.c.h.b16 %v377
    %v1442 = vunpack.c.l.b16 %v378
    %v1443 = vunpack.c.h.b16 %v378
    %v1444 = vunpack.c.l.b16 %v379
    %v1445 = vunpack.c.h.b16 %v379
    %v1446 = vunpack.c.l.b16 %v380
    %v1447 = vunpack.c.h.b16 %v380
    %v1448 = vunpack.c.l.b16 %v381
    %v1449 = vunpack.c.h.b16 %v381
    %v1450 = vunpack.c.l.b16 %v382
    %v1451 = vunpack.c.h.b16 %v382
    %v1452 = vunpack.c.l.b16 %v383
    %v1453 = vunpack.c.h.b16 %v383
    %v1454 = vunpack.c.l.b16 %v384
    %v1455 = vunpack.c.h.b16 %v384
    %v1456 = vunpack.c.l.b16 %v385
    %v1457 = vunpack.c.h.b16 %v385
    %v1458 = vunpack.c.l.b16 %v386
    %v1459 = vunpack.c.h.b16 %v386
    %v1460 = vunpack.c.l.b16 %v387
    %v1461 = vunpack.c.h.b16 %v387
    %v1462 = vunpack.c.l.b16 %v388
    %v1463 = vunpack.c.h.b16 %v388
    %v1464 = vunpack.c.l.b16 %v389
    %v1465 = vunpack.c.h.b16 %v389
    %v1466 = vunpack.c.l.b16 %v390
    %v1467 = vunpack.c.h.b16 %v390
    %v1468 = vunpack.c.l.b16 %v391
    %v1469 = vunpack.c.h.b16 %v391
    %v1470 = vunpack.c.l.b16 %v392
    %v1471 = vunpack.c.h.b16 %v392
    %v1472 = vunpack.c.l.b16 %v393
    %v1473 = vunpack.c.h.b16 %v393
    %v1474 = vunpack.c.l.b16 %v394
    %v1475 = vunpack.c.h.b16 %v394
    %v1476 = vunpack.c.l.b16 %v395
    %v1477 = vunpack.c.h.b16 %v395
    %v1478 = vunpack.c.l.b16 %v396
    %v1479 = vunpack.c.h.b16 %v396
    %v1480 = vunpack.c.l.b16 %v397
    %v1481 = vunpack.c.h.b16 %v397
    %v1482 = vunpack.c.l.b16 %v398
    %v1483 = vunpack.c.h.b16 %v398
    %v1484 = vunpack.c.l.b16 %v399
    %v1485 = vunpack.c.h.b16 %v399
    %v1486 = vunpack.c.l.b16 %v400
    %v1487 = vunpack.c.h.b16 %v400
    %v1488 = vunpack.c.l.b16 %v401
    %v1489 = vunpack.c.h.b16 %v401
    %v1490 = vunpack.c.l.b16 %v402
    %v1491 = vunpack.c.h.b16 %v402
    %v1492 = vunpack.c.l.b16 %v403
    %v1493 = vunpack.c.h.b16 %v403
    %v1494 = vunpack.c.l.b16 %v404
    %v1495 = vunpack.c.h.b16 %v404
    %v1496 = vunpack.c.l.b16 %v405
    %v1497 = vunpack.c.h.b16 %v405
    %v1498 = vunpack.c.l.b16 %v406
    %v1499 = vunpack.c.h.b16 %v406
    %v1500 = vunpack.c.l.b16 %v407
    %v1501 = vunpack.c.h.b16 %v407
    %v1502 = vunpack.c.l.b16 %v408
    %v1503 = vunpack.c.h.b16 %v408
    %v1504 = vunpack.c.l.b16 %v409
    %v1505 = vunpack.c.h.b16 %v409
    %v1506 = vunpack.c.l.b16 %v410
    %v1507 = vunpack.c.h.b16 %v410
    %v1508 = vunpack.c.l.b16 %v411
    %v1509 = vunpack.c.h.b16 %v411
    %v1510 = vunpack.c.l.b16 %v412
    %v1511 = vunpack.c.h.b16 %v412
    %v1512 = vunpack.c.l.b16 %v413
    %v1513 = vunpack.c.h.b16 %v413
    %v1514 = vunpack.c.l.b16 %v414
    %v1515 = vunpack.c.h.b16 %v414
    %v1516 = vunpack.c.l.b16 %v415
    %v1517 = vunpack.c.h.b16 %v415
    %v1518 = vunpack.c.l.b16 %v416
    %v1519 = vunpack.c.h.b16 %v416
    %v1520 = vunpack.c.l.b16 %v417
    %v1521 = vunpack.c.h.b16 %v417
    %v1522 = vunpack.c.l.b16 %v418
    %v1523 = vunpack.c.h.b16 %v418
    %v1524 = vunpack.c.l.b16 %v419
    %v1525 = vunpack.c.h.b16 %v419
    %v1526 = vunpack.c.l.b16 %v420
    %v1527 = vunpack.c.h.b16 %v420
    %v1528 = vunpack.c.l.b16 %v421
    %v1529 = vunpack.c.h.b16 %v421
    %v1530 = vunpack.c.l.b16 %v422
    %v1531 = vunpack.c.h.b16 %v422
    %v1532 = vunpack.c.l.b16 %v423
    %v1533 = vunpack.c.h.b16 %v423
    %v1534 = vunpack.c.l.b16 %v424
    %v1535 = vunpack.c.h.b16 %v424
    %v1536 = vunpack.c.l.b16 %v425
    %v1537 = vunpack.c.h.b16 %v425
    %v1538 = vunpack.c.l.b16 %v426
    %v1539 = vunpack.c.h.b16 %v426
    %v1540 = vunpack.c.l.b16 %v427
    %v1541 = vunpack.c.h.b16 %v427
    %v1542 = vunpack.c.l.b16 %v428
    %v1543 = vunpack.c.h.b16 %v428
    %v1544 = vunpack.c.l.b16 %v429
    %v1545 = vunpack.c.h.b16 %v429
    %v1546 = vunpack.c.l.b16 %v430
    %v1547 = vunpack.c.h.b16 %v430
    %v1548 = vunpack.c.l.b16 %v431
    %v1549 = vunpack.c.h.b16 %v431
    %v1550 = vunpack.c.l.b16 %v432
    %v1551 = vunpack.c.h.b16 %v432
    %v1552 = vunpack.c.l.b16 %v433
    %v1553 = vunpack.c.h.b16 %v433
    %v1554 = vunpack.c.l.b16 %v434
    %v1555 = vunpack.c.h.b16 %v434
    %v1556 = vunpack.c.l.b16 %v435
    %v1557 = vunpack.c.h.b16 %v435
    %v1558 = vunpack.c.l.b16 %v436
    %v1559 = vunpack.c.h.b16 %v436
    %v1560 = vunpack.c.l.b16 %v437
    %v1561 = vunpack.c.h.b16 %v437
    %v1562 = vunpack.c.l.b16 %v438
    %v1563 = vunpack.c.h.b16 %v438
    %v1564 = vunpack.c.l.b16 %v439
    %v1565 = vunpack.c.h.b16 %v439
    %v1566 = vunpack.c.l.b16 %v440
    %v1567 = vunpack.c.h.b16 %v440
    %v1568 = vunpack.c.l.b16 %v441
    %v1569 = vunpack.c.h.b16 %v441
    %v1570 = vunpack.c.l.b16 %v442
    %v1571 = vunpack.c.h.b16 %v442
    %v1572 = vunpack.c.l.b16 %v443
    %v1573 = vunpack.c.h.b16 %v443
    %v1574 = vunpack.c.l.b16 %v444
    %v1575 = vunpack.c.h.b16 %v444
    %v1576 = vunpack.c.l.b16 %v445
    %v1577 = vunpack.c.h.b16 %v445
    %v1578 = vunpack.c.l.b16 %v446
    %v1579 = vunpack.c.h.b16 %v446
    %v1580 = vunpack.c.l.b16 %v447
    %v1581 = vunpack.c.h.b16 %v447
    %v1582 = vunpack.c.l.b16 %v448
    %v1583 = vunpack.c.h.b16 %v448
    %v1584 = vunpack.c.l.b16 %v449
    %v1585 = vunpack.c.h.b16 %v449
    %v1586 = vunpack.c.l.b16 %v450
    %v1587 = vunpack.c.h.b16 %v450
    %v1588 = vunpack.c.l.b16 %v451
    %v1589 = vunpack.c.h.b16 %v451
    %v1590 = vunpack.c.l.b16 %v452
    %v1591 = vunpack.c.h.b16 %v452
    %v1592 = vunpack.c.l.b16 %v453
    %v1593 = vunpack.c.h.b16 %v453
    %v1594 = vunpack.c.l.b16 %v454
    %v1595 = vunpack.c.h.b16 %v454
    %v1596 = vunpack.c.l.b16 %v455
    %v1597 = vunpack.c.h.b16 %v455
    %v1598 = vunpack.c.l.b16 %v456
    %v1599 = vunpack.c.h.b16 %v456
    %v1600 = vunpack.c.l.b16 %v457
    %v1601 = vunpack.c.h.b16 %v457
    %v1602 = vunpack.c.l.b16 %v458
    %v1603 = vunpack.c.h.b16 %v458
    %v1604 = vunpack.c.l.b16 %v459
    %v1605 = vunpack.c.h.b16 %v459
    %v1606 = vunpack.c.l.b16 %v460
    %v1607 = vunpack.c.h.b16 %v460
    %v1608 = vunpack.c.l.b16 %v461
    %v1609 = vunpack.c.h.b16 %v461
    %v1610 = vunpack.c.l.b16 %v462
    %v1611 = vunpack.c.h.b16 %v462
    %v1612 = vunpack.c.l.b16 %v463
    %v1613 = vunpack.c.h.b16 %v463
    %v1614 = vunpack.c.l.b16 %v464
    %v1615 = vunpack.c.h.b16 %v464
    %v1616 = vunpack.c.l.b16 %v465
    %v1617 = vunpack.c.h.b16 %v465
    %v1618 = vunpack.c.l.b16 %v466
    %v1619 = vunpack.c.h.b16 %v466
    %v1620 = vunpack.c.l.b16 %v467
    %v1621 = vunpack.c.h.b16 %v467
    %v1622 = vunpack.c.l.b16 %v468
    %v1623 = vunpack.c.h.b16 %v468
    %v1624 = vunpack.c.l.b16 %v469
    %v1625 = vunpack.c.h.b16 %v469
    %v1626 = vunpack.c.l.b16 %v470
    %v1627 = vunpack.c.h.b16 %v470
    %v1628 = vunpack.c.l.b16 %v471
    %v1629 = vunpack.c.h.b16 %v471
    %v1630 = vunpack.c.l.b16 %v472
    %v1631 = vunpack.c.h.b16 %v472
    %v1632 = vunpack.c.l.b16 %v473
    %v1633 = vunpack.c.h.b16 %v473
    %v1634 = vunpack.c.l.b16 %v474
    %v1635 = vunpack.c.h.b16 %v474
    %v1636 = vunpack.c.l.b16 %v475
    %v1637 = vunpack.c.h.b16 %v475
    %v1638 = vunpack.c.l.b16 %v476
    %v1639 = vunpack.c.h.b16 %v476
    %v1640 = vunpack.c.l.b16 %v477
    %v1641 = vunpack.c.h.b16 %v477
    %v1642 = vunpack.c.l.b16 %v478
    %v1643 = vunpack.c.h.b16 %v478
    %v1644 = vunpack.c.l.b16 %v479
    %v1645 = vunpack.c.h.b16 %v479
    %v1646 = vunpack.c.l.b16 %v480
    %v1647 = vunpack.c.h.b16 %v480
    %v1648 = vunpack.c.l.b16 %v481
    %v1649 = vunpack.c.h.b16 %v481
    %v1650 = vunpack.c.l.b16 %v482
    %v1651 = vunpack.c.h.b16 %v482
    %v1652 = vunpack.c.l.b16 %v483
    %v1653 = vunpack.c.h.b16 %v483
    %v1654 = vunpack.c.l.b16 %v484
    %v1655 = vunpack.c.h.b16 %v484
    %v1656 = vunpack.c.l.b16 %v485
    %v1657 = vunpack.c.h.b16 %v485
    %v1658 = vunpack.c.l.b16 %v486
    %v1659 = vunpack.c.h.b16 %v486
    %v1660 = vunpack.c.l.b16 %v487
    %v1661 = vunpack.c.h.b16 %v487
    %v1662 = vunpack.c.l.b16 %v488
    %v1663 = vunpack.c.h.b16 %v488
    %v1664 = vunpack.c.l.b16 %v489
    %v1665 = vunpack.c.h.b16 %v489
    %v1666 = vunpack.c.l.b16 %v490
    %v1667 = vunpack.c.h.b16 %v490
    %v1668 = vunpack.c.l.b16 %v491
    %v1669 = vunpack.c.h.b16 %v491
    %v1670 = vunpack.c.l.b16 %v492
    %v1671 = vunpack.c.h.b16 %v492
    %v1672 = vunpack.c.l.b16 %v493
    %v1673 = vunpack.c.h.b16 %v493
    %v1674 = vunpack.c.l.b16 %v494
    %v1675 = vunpack.c.h.b16 %v494
    %v1676 = vunpack.c.l.b16 %v495
    %v1677 = vunpack.c.h.b16 %v495
    %v1678 = vunpack.c.l.b16 %v496
    %v1679 = vunpack.c.h.b16 %v496
    %v1680 = vunpack.c.l.b16 %v497
    %v1681 = vunpack.c.h.b16 %v497
    %v1682 = vunpack.c.l.b16 %v498
    %v1683 = vunpack.c.h.b16 %v498
    %v1684 = vunpack.c.l.b16 %v499
    %v1685 = vunpack.c.h.b16 %v499
    %v1686 = vunpack.c.l.b16 %v500
    %v1687 = vunpack.c.h.b16 %v500
    %v1688 = vunpack.c.l.b16 %v501
    %v1689 = vunpack.c.h.b16 %v501
    %v1690 = vunpack.c.l.b16 %v502
    %v1691 = vunpack.c.h.b16 %v502
    %v1692 = vunpack.c.l.b16 %v503
    %v1693 = vunpack.c.h.b16 %v503
    %v1694 = vunpack.c.l.b16 %v504
    %v1695 = vunpack.c.h.b16 %v504
    %v1696 = vunpack.c.l.b16 %v505
    %v1697 = vunpack.c.h.b16 %v505
    %v1698 = vunpack.c.l.b16 %v506
    %v1699 = vunpack.c.h.b16 %v506
    %v1700 = vunpack.c.l.b16 %v507
    %v1701 = vunpack.c.h.b16 %v507
    %v1702 = vunpack.c.l.b16 %v508
    %v1703 = vunpack.c.h.b16 %v508
    %v1704 = vunpack.c.l.b16 %v509
    %v1705 = vunpack.c.h.b16 %v509
    %v1706 = vunpack.c.l.b16 %v510
    %v1707 = vunpack.c.h.b16 %v510
    %v1708 = vunpack.c.l.b16 %v511
    %v1709 = vunpack.c.h.b16 %v511
    %v1710 = vpack.c.b16 %v950, %v942
    %v1711 = vpack.c.b16 %v951, %v943
    %v1712 = vpack.c.b16 %v952, %v944
    %v1713 = vpack.c.b16 %v953, %v945
    %v1714 = vpack.c.b16 %v954, %v946
    %v1715 = vpack.c.b16 %v955, %v947
    %v1716 = vpack.c.b16 %v956, %v948
    %v1717 = vpack.c.b16 %v957, %v949
    %v1718 = vpack.c.b16 %v966, %v958
    %v1719 = vpack.c.b16 %v967, %v959
    %v1720 = vpack.c.b16 %v968, %v960
    %v1721 = vpack.c.b16 %v969, %v961
    %v1722 = vpack.c.b16 %v970, %v962
    %v1723 = vpack.c.b16 %v971, %v963
    %v1724 = vpack.c.b16 %v972, %v964
    %v1725 = vpack.c.b16 %v973, %v965
    %v1726 = vpack.c.b16 %v982, %v974
    %v1727 = vpack.c.b16 %v983, %v975
    %v1728 = vpack.c.b16 %v984, %v976
    %v1729 = vpack.c.b16 %v985, %v977
    %v1730 = vpack.c.b16 %v986, %v978
    %v1731 = vpack.c.b16 %v987, %v979
    %v1732 = vpack.c.b16 %v988, %v980
    %v1733 = vpack.c.b16 %v989, %v981
    %v1734 = vpack.c.b16 %v998, %v990
    %v1735 = vpack.c.b16 %v999, %v991
    %v1736 = vpack.c.b16 %v1000, %v992
    %v1737 = vpack.c.b16 %v1001, %v993
    %v1738 = vpack.c.b16 %v1002, %v994
    %v1739 = vpack.c.b16 %v1003, %v995
    %v1740 = vpack.c.b16 %v1004, %v996
    %v1741 = vpack.c.b16 %v1005, %v997
    %v1742 = vpack.c.b16 %v1014, %v1006
    %v1743 = vpack.c.b16 %v1015, %v1007
    %v1744 = vpack.c.b16 %v1016, %v1008
    %v1745 = vpack.c.b16 %v1017, %v1009
    %v1746 = vpack.c.b16 %v1018, %v1010
    %v1747 = vpack.c.b16 %v1019, %v1011
    %v1748 = vpack.c.b16 %v1020, %v1012
    %v1749 = vpack.c.b16 %v1021, %v1013
    %v1750 = vpack.c.b16 %v1030, %v1022
    %v1751 = vpack.c.b16 %v1031, %v1023
    %v1752 = vpack.c.b16 %v1032, %v1024
    %v1753 = vpack.c.b16 %v1033, %v1025
    %v1754 = vpack.c.b16 %v1034, %v1026
    %v1755 = vpack.c.b16 %v1035, %v1027
    %v1756 = vpack.c.b16 %v1036, %v1028
    %v1757 = vpack.c.b16 %v1037, %v1029
    %v1758 = vpack.c.b16 %v1046, %v1038
    %v1759 = vpack.c.b16 %v1047, %v1039
    %v1760 = vpack.c.b16 %v1048, %v1040
    %v1761 = vpack.c.b16 %v1049, %v1041
    %v1762 = vpack.c.b16 %v1050, %v1042
    %v1763 = vpack.c.b16 %v1051, %v1043
    %v1764 = vpack.c.b16 %v1052, %v1044
    %v1765 = vpack.c.b16 %v1053, %v1045
    %v1766 = vpack.c.b16 %v1062, %v1054
    %v1767 = vpack.c.b16 %v1063, %v1055
    %v1768 = vpack.c.b16 %v1064, %v1056
    %v1769 = vpack.c.b16 %v1065, %v1057
    %v1770 = vpack.c.b16 %v1066, %v1058
    %v1771 = vpack.c.b16 %v1067, %v1059
    %v1772 = vpack.c.b16 %v1068, %v1060
    %v1773 = vpack.c.b16 %v1069, %v1061
    %v1774 = vpack.c.b16 %v1078, %v1070
    %v1775 = vpack.c.b16 %v1079, %v1071
    %v1776 = vpack.c.b16 %v1080, %v1072
    %v1777 = vpack.c.b16 %v1081, %v1073
    %v1778 = vpack.c.b16 %v1082, %v1074
    %v1779 = vpack.c.b16 %v1083, %v1075
    %v1780 = vpack.c.b16 %v1084, %v1076
    %v1781 = vpack.c.b16 %v1085, %v1077
    %v1782 = vpack.c.b16 %v1094, %v1086
    %v1783 = vpack.c.b16 %v1095, %v1087
    %v1784 = vpack.c.b16 %v1096, %v1088
    %v1785 = vpack.c.b16 %v1097, %v1089
    %v1786 = vpack.c.b16 %v1098, %v1090
    %v1787 = vpack.c.b16 %v1099, %v1091
    %v1788 = vpack.c.b16 %v1100, %v1092
    %v1789 = vpack.c.b16 %v1101, %v1093
    %v1790 = vpack.c.b16 %v1110, %v1102
    %v1791 = vpack.c.b16 %v1111, %v1103
    %v1792 = vpack.c.b16 %v1112, %v1104
    %v1793 = vpack.c.b16 %v1113, %v1105
    %v1794 = vpack.c.b16 %v1114, %v1106
    %v1795 = vpack.c.b16 %v1115, %v1107
    %v1796 = vpack.c.b16 %v1116, %v1108
    %v1797 = vpack.c.b16 %v1117, %v1109
    %v1798 = vpack.c.b16 %v1126, %v1118
    %v1799 = vpack.c.b16 %v1127, %v1119
    %v1800 = vpack.c.b16 %v1128, %v1120
    %v1801 = vpack.c.b16 %v1129, %v1121
    %v1802 = vpack.c.b16 %v1130, %v1122
    %v1803 = vpack.c.b16 %v1131, %v1123
    %v1804 = vpack.c.b16 %v1132, %v1124
    %v1805 = vpack.c.b16 %v1133, %v1125
    %v1806 = vpack.c.b16 %v1142, %v1134
    %v1807 = vpack.c.b16 %v1143, %v1135
    %v1808 = vpack.c.b16 %v1144, %v1136
    %v1809 = vpack.c.b16 %v1145, %v1137
    %v1810 = vpack.c.b16 %v1146, %v1138
    %v1811 = vpack.c.b16 %v1147, %v1139
    %v1812 = vpack.c.b16 %v1148, %v1140
    %v1813 = vpack.c.b16 %v1149, %v1141
    %v1814 = vpack.c.b16 %v1158, %v1150
    %v1815 = vpack.c.b16 %v1159, %v1151
    %v1816 = vpack.c.b16 %v1160, %v1152
    %v1817 = vpack.c.b16 %v1161, %v1153
    %v1818 = vpack.c.b16 %v1162, %v1154
    %v1819 = vpack.c.b16 %v1163, %v1155
    %v1820 = vpack.c.b16 %v1164, %v1156
    %v1821 = vpack.c.b16 %v1165, %v1157
    %v1822 = vpack.c.b16 %v1174, %v1166
    %v1823 = vpack.c.b16 %v1175, %v1167
    %v1824 = vpack.c.b16 %v1176, %v1168
    %v1825 = vpack.c.b16 %v1177, %v1169
    %v1826 = vpack.c.b16 %v1178, %v1170
    %v1827 = vpack.c.b16 %v1179, %v1171
    %v1828 = vpack.c.b16 %v1180, %v1172
    %v1829 = vpack.c.b16 %v1181, %v1173
    %v1830 = vpack.c.b16 %v1190, %v1182
    %v1831 = vpack.c.b16 %v1191, %v1183
    %v1832 = vpack.c.b16 %v1192, %v1184
    %v1833 = vpack.c.b16 %v1193, %v1185
    %v1834 = vpack.c.b16 %v1194, %v1186
    %v1835 = vpack.c.b16 %v1195, %v1187
    %v1836 = vpack.c.b16 %v1196, %v1188
    %v1837 = vpack.c.b16 %v1197, %v1189
    %v1838 = vpack.c.b16 %v1206, %v1198
    %v1839 = vpack.c.b16 %v1207, %v1199
    %v1840 = vpack.c.b16 %v1208, %v1200
    %v1841 = vpack.c.b16 %v1209, %v1201
    %v1842 = vpack.c.b16 %v1210, %v1202
    %v1843 = vpack.c.b16 %v1211, %v1203
    %v1844 = vpack.c.b16 %v1212, %v1204
    %v1845 = vpack.c.b16 %v1213, %v1205
    %v1846 = vpack.c.b16 %v1222, %v1214
    %v1847 = vpack.c.b16 %v1223, %v1215
    %v1848 = vpack.c.b16 %v1224, %v1216
    %v1849 = vpack.c.b16 %v1225, %v1217
    %v1850 = vpack.c.b16 %v1226, %v1218
    %v1851 = vpack.c.b16 %v1227, %v1219
    %v1852 = vpack.c.b16 %v1228, %v1220
    %v1853 = vpack.c.b16 %v1229, %v1221
    %v1854 = vpack.c.b16 %v1238, %v1230
    %v1855 = vpack.c.b16 %v1239, %v1231
    %v1856 = vpack.c.b16 %v1240, %v1232
    %v1857 = vpack.c.b16 %v1241, %v1233
    %v1858 = vpack.c.b16 %v1242, %v1234
    %v1859 = vpack.c.b16 %v1243, %v1235
    %v1860 = vpack.c.b16 %v1244, %v1236
    %v1861 = vpack.c.b16 %v1245, %v1237
    %v1862 = vpack.c.b16 %v1254, %v1246
    %v1863 = vpack.c.b16 %v1255, %v1247
    %v1864 = vpack.c.b16 %v1256, %v1248
    %v1865 = vpack.c.b16 %v1257, %v1249
    %v1866 = vpack.c.b16 %v1258, %v1250
    %v1867 = vpack.c.b16 %v1259, %v1251
    %v1868 = vpack.c.b16 %v1260, %v1252
    %v1869 = vpack.c.b16 %v1261, %v1253
    %v1870 = vpack.c.b16 %v1270, %v1262
    %v1871 = vpack.c.b16 %v1271, %v1263
    %v1872 = vpack.c.b16 %v1272, %v1264
    %v1873 = vpack.c.b16 %v1273, %v1265
    %v1874 = vpack.c.b16 %v1274, %v1266
    %v1875 = vpack.c.b16 %v1275, %v1267
    %v1876 = vpack.c.b16 %v1276, %v1268
    %v1877 = vpack.c.b16 %v1277, %v1269
    %v1878 = vpack.c.b16 %v1286, %v1278
    %v1879 = vpack.c.b16 %v1287, %v1279
    %v1880 = vpack.c.b16 %v1288, %v1280
    %v1881 = vpack.c.b16 %v1289, %v1281
    %v1882 = vpack.c.b16 %v1290, %v1282
    %v1883 = vpack.c.b16 %v1291, %v1283
    %v1884 = vpack.c.b16 %v1292, %v1284
    %v1885 = vpack.c.b16 %v1293, %v1285
    %v1886 = vpack.c.b16 %v1302, %v1294
    %v1887 = vpack.c.b16 %v1303, %v1295
    %v1888 = vpack.c.b16 %v1304, %v1296
    %v1889 = vpack.c.b16 %v1305, %v1297
    %v1890 = vpack.c.b16 %v1306, %v1298
    %v1891 = vpack.c.b16 %v1307, %v1299
    %v1892 = vpack.c.b16 %v1308, %v1300
    %v1893 = vpack.c.b16 %v1309, %v1301
    %v1894 = vpack.c.b16 %v1318, %v1310
    %v1895 = vpack.c.b16 %v1319, %v1311
    %v1896 = vpack.c.b16 %v1320, %v1312
    %v1897 = vpack.c.b16 %v1321, %v1313
    %v1898 = vpack.c.b16 %v1322, %v1314
    %v1899 = vpack.c.b16 %v1323, %v1315
    %v1900 = vpack.c.b16 %v1324, %v1316
    %v1901 = vpack.c.b16 %v1325, %v1317
    %v1902 = vpack.c.b16 %v1334, %v1326
    %v1903 = vpack.c.b16 %v1335, %v1327
    %v1904 = vpack.c.b16 %v1336, %v1328
    %v1905 = vpack.c.b16 %v1337, %v1329
    %v1906 = vpack.c.b16 %v1338, %v1330
    %v1907 = vpack.c.b16 %v1339, %v1331
    %v1908 = vpack.c.b16 %v1340, %v1332
    %v1909 = vpack.c.b16 %v1341, %v1333
    %v1910 = vpack.c.b16 %v1350, %v1342
    %v1911 = vpack.c.b16 %v1351, %v1343
    %v1912 = vpack.c.b16 %v1352, %v1344
    %v1913 = vpack.c.b16 %v1353, %v1345
    %v1914 = vpack.c.b16 %v1354, %v1346
    %v1915 = vpack.c.b16 %v1355, %v1347
    %v1916 = vpack.c.b16 %v1356, %v1348
    %v1917 = vpack.c.b16 %v1357, %v1349
    %v1918 = vpack.c.b16 %v1366, %v1358
    %v1919 = vpack.c.b16 %v1367, %v1359
    %v1920 = vpack.c.b16 %v1368, %v1360
    %v1921 = vpack.c.b16 %v1369, %v1361
    %v1922 = vpack.c.b16 %v1370, %v1362
    %v1923 = vpack.c.b16 %v1371, %v1363
    %v1924 = vpack.c.b16 %v1372, %v1364
    %v1925 = vpack.c.b16 %v1373, %v1365
    %v1926 = vpack.c.b16 %v1382, %v1374
    %v1927 = vpack.c.b16 %v1383, %v1375
    %v1928 = vpack.c.b16 %v1384, %v1376
    %v1929 = vpack.c.b16 %v1385, %v1377
    %v1930 = vpack.c.b16 %v1386, %v1378
    %v1931 = vpack.c.b16 %v1387, %v1379
    %v1932 = vpack.c.b16 %v1388, %v1380
    %v1933 = vpack.c.b16 %v1389, %v1381
    %v1934 = vpack.c.b16 %v1398, %v1390
    %v1935 = vpack.c.b16 %v1399, %v1391
    %v1936 = vpack.c.b16 %v1400, %v1392
    %v1937 = vpack.c.b16 %v1401, %v1393
    %v1938 = vpack.c.b16 %v1402, %v1394
    %v1939 = vpack.c.b16 %v1403, %v1395
    %v1940 = vpack.c.b16 %v1404, %v1396
    %v1941 = vpack.c.b16 %v1405, %v1397
    %v1942 = vpack.c.b16 %v1414, %v1406
    %v1943 = vpack.c.b16 %v1415, %v1407
    %v1944 = vpack.c.b16 %v1416, %v1408
    %v1945 = vpack.c.b16 %v1417, %v1409
    %v1946 = vpack.c.b16 %v1418, %v1410
    %v1947 = vpack.c.b16 %v1419, %v1411
    %v1948 = vpack.c.b16 %v1420, %v1412
    %v1949 = vpack.c.b16 %v1421, %v1413
    %v1950 = vpack.c.b16 %v1430, %v1422
    %v1951 = vpack.c.b16 %v1431, %v1423
    %v1952 = vpack.c.b16 %v1432, %v1424
    %v1953 = vpack.c.b16 %v1433, %v1425
    %v1954 = vpack.c.b16 %v1434, %v1426
    %v1955 = vpack.c.b16 %v1435, %v1427
    %v1956 = vpack.c.b16 %v1436, %v1428
    %v1957 = vpack.c.b16 %v1437, %v1429
    %v1958 = vpack.c.b16 %v1446, %v1438
    %v1959 = vpack.c.b16 %v1447, %v1439
    %v1960 = vpack.c.b16 %v1448, %v1440
    %v1961 = vpack.c.b16 %v1449, %v1441
    %v1962 = vpack.c.b16 %v1450, %v1442
    %v1963 = vpack.c.b16 %v1451, %v1443
    %v1964 = vpack.c.b16 %v1452, %v1444
    %v1965 = vpack.c.b16 %v1453, %v1445
    %v1966 = vpack.c.b16 %v1462, %v1454
    %v1967 = vpack.c.b16 %v1463, %v1455
    %v1968 = vpack.c.b16 %v1464, %v1456
    %v1969 = vpack.c.b16 %v1465, %v1457
    %v1970 = vpack.c.b16 %v1466, %v1458
    %v1971 = vpack.c.b16 %v1467, %v1459
    %v1972 = vpack.c.b16 %v1468, %v1460
    %v1973 = vpack.c.b16 %v1469, %v1461
    %v1974 = vpack.c.b16 %v1478, %v1470
    %v1975 = vpack.c.b16 %v1479, %v1471
    %v1976 = vpack.c.b16 %v1480, %v1472
    %v1977 = vpack.c.b16 %v1481, %v1473
    %v1978 = vpack.c.b16 %v1482, %v1474
    %v1979 = vpack.c.b16 %v1483, %v1475
    %v1980 = vpack.c.b16 %v1484, %v1476
    %v1981 = vpack.c.b16 %v1485, %v1477
    %v1982 = vpack.c.b16 %v1494, %v1486
    %v1983 = vpack.c.b16 %v1495, %v1487
    %v1984 = vpack.c.b16 %v1496, %v1488
    %v1985 = vpack.c.b16 %v1497, %v1489
    %v1986 = vpack.c.b16 %v1498, %v1490
    %v1987 = vpack.c.b16 %v1499, %v1491
    %v1988 = vpack.c.b16 %v1500, %v1492
    %v1989 = vpack.c.b16 %v1501, %v1493
    %v1990 = vpack.c.b16 %v1510, %v1502
    %v1991 = vpack.c.b16 %v1511, %v1503
    %v1992 = vpack.c.b16 %v1512, %v1504
    %v1993 = vpack.c.b16 %v1513, %v1505
    %v1994 = vpack.c.b16 %v1514, %v1506
    %v1995 = vpack.c.b16 %v1515, %v1507
    %v1996 = vpack.c.b16 %v1516, %v1508
    %v1997 = vpack.c.b16 %v1517, %v1509
    %v1998 = vpack.c.b16 %v1526, %v1518
    %v1999 = vpack.c.b16 %v1527, %v1519
    %v2000 = vpack.c.b16 %v1528, %v1520
    %v2001 = vpack.c.b16 %v1529, %v1521
    %v2002 = vpack.c.b16 %v1530, %v1522
    %v2003 = vpack.c.b16 %v1531, %v1523
    %v2004 = vpack.c.b16 %v1532, %v1524
    %v2005 = vpack.c.b16 %v1533, %v1525
    %v2006 = vpack.c.b16 %v1542, %v1534
    %v2007 = vpack.c.b16 %v1543, %v1535
    %v2008 = vpack.c.b16 %v1544, %v1536
    %v2009 = vpack.c.b16 %v1545, %v1537
    %v2010 = vpack.c.b16 %v1546, %v1538
    %v2011 = vpack.c.b16 %v1547, %v1539
    %v2012 = vpack.c.b16 %v1548, %v1540
    %v2013 = vpack.c.b16 %v1549, %v1541
    %v2014 = vpack.c.b16 %v1558, %v1550
    %v2015 = vpack.c.b16 %v1559, %v1551
    %v2016 = vpack.c.b16 %v1560, %v1552
    %v2017 = vpack.c.b16 %v1561, %v1553
    %v2018 = vpack.c.b16 %v1562, %v1554
    %v2019 = vpack.c.b16 %v1563, %v1555
    %v2020 = vpack.c.b16 %v1564, %v1556
    %v2021 = vpack.c.b16 %v1565, %v1557
    %v2022 = vpack.c.b16 %v1574, %v1566
    %v2023 = vpack.c.b16 %v1575, %v1567
    %v2024 = vpack.c.b16 %v1576, %v1568
    %v2025 = vpack.c.b16 %v1577, %v1569
    %v2026 = vpack.c.b16 %v1578, %v1570
    %v2027 = vpack.c.b16 %v1579, %v1571
    %v2028 = vpack.c.b16 %v1580, %v1572
    %v2029 = vpack.c.b16 %v1581, %v1573
    %v2030 = vpack.c.b16 %v1590, %v1582
    %v2031 = vpack.c.b16 %v1591, %v1583
    %v2032 = vpack.c.b16 %v1592, %v1584
    %v2033 = vpack.c.b16 %v1593, %v1585
    %v2034 = vpack.c.b16 %v1594, %v1586
    %v2035 = vpack.c.b16 %v1595, %v1587
    %v2036 = vpack.c.b16 %v1596, %v1588
    %v2037 = vpack.c.b16 %v1597, %v1589
    %v2038 = vpack.c.b16 %v1606, %v1598
    %v2039 = vpack.c.b16 %v1607, %v1599
    %v2040 = vpack.c.b16 %v1608, %v1600
    %v2041 = vpack.c.b16 %v1609, %v1601
    %v2042 = vpack.c.b16 %v1610, %v1602
    %v2043 = vpack.c.b16 %v1611, %v1603
    %v2044 = vpack.c.b16 %v1612, %v1604
    %v2045 = vpack.c.b16 %v1613, %v1605
    %v2046 = vpack.c.b16 %v1622, %v1614
    %v2047 = vpack.c.b16 %v1623, %v1615
    %v2048 = vpack.c.b16 %v1624, %v1616
    %v2049 = vpack.c.b16 %v1625, %v1617
    %v2050 = vpack.c.b16 %v1626, %v1618
    %v2051 = vpack.c.b16 %v1627, %v1619
    %v2052 = vpack.c.b16 %v1628, %v1620
    %v2053 = vpack.c.b16 %v1629, %v1621
    %v2054 = vpack.c.b16 %v1638, %v1630
    %v2055 = vpack.c.b16 %v1639, %v1631
    %v2056 = vpack.c.b16 %v1640, %v1632
    %v2057 = vpack.c.b16 %v1641, %v1633
    %v2058 = vpack.c.b16 %v1642, %v1634
    %v2059 = vpack.c.b16 %v1643, %v1635
    %v2060 = vpack.c.b16 %v1644, %v1636
    %v2061 = vpack.c.b16 %v1645, %v1637
    %v2062 = vpack.c.b16 %v1654, %v1646
    %v2063 = vpack.c.b16 %v1655, %v1647
    %v2064 = vpack.c.b16 %v1656, %v1648
    %v2065 = vpack.c.b16 %v1657, %v1649
    %v2066 = vpack.c.b16 %v1658, %v1650
    %v2067 = vpack.c.b16 %v1659, %v1651
    %v2068 = vpack.c.b16 %v1660, %v1652
    %v2069 = vpack.c.b16 %v1661, %v1653
    %v2070 = vpack.c.b16 %v1670, %v1662
    %v2071 = vpack.c.b16 %v1671, %v1663
    %v2072 = vpack.c.b16 %v1672, %v1664
    %v2073 = vpack.c.b16 %v1673, %v1665
    %v2074 = vpack.c.b16 %v1674, %v1666
    %v2075 = vpack.c.b16 %v1675, %v1667
    %v2076 = vpack.c.b16 %v1676, %v1668
    %v2077 = vpack.c.b16 %v1677, %v1669
    %v2078 = vpack.c.b16 %v1686, %v1678
    %v2079 = vpack.c.b16 %v1687, %v1679
    %v2080 = vpack.c.b16 %v1688, %v1680
    %v2081 = vpack.c.b16 %v1689, %v1681
    %v2082 = vpack.c.b16 %v1690, %v1682
    %v2083 = vpack.c.b16 %v1691, %v1683
    %v2084 = vpack.c.b16 %v1692, %v1684
    %v2085 = vpack.c.b16 %v1693, %v1685
    %v2086 = vpack.c.b16 %v1702, %v1694
    %v2087 = vpack.c.b16 %v1703, %v1695
    %v2088 = vpack.c.b16 %v1704, %v1696
    %v2089 = vpack.c.b16 %v1705, %v1697
    %v2090 = vpack.c.b16 %v1706, %v1698
    %v2091 = vpack.c.b16 %v1707, %v1699
    %v2092 = vpack.c.b16 %v1708, %v1700
    %v2093 = vpack.c.b16 %v1709, %v1701
    %2478 = vmatpush.bf16.msra.mxu0 %v1766
    %2479 = vmatpush.bf16.msra.mxu0 %v1758
    %2480 = vmatpush.bf16.msra.mxu0 %v1750
    %2481 = vmatpush.bf16.msra.mxu0 %v1742
    %2482 = vmatpush.bf16.msra.mxu0 %v1734
    %2483 = vmatpush.bf16.msra.mxu0 %v1726
    %2484 = vmatpush.bf16.msra.mxu0 %v1718
    %2485 = vmatpush.bf16.msra.mxu0 %v1710
    %2486 = vmatmul.bf16.gmra.mxu0 %v546
    %v2487 = vpop.f32.mrf.mxu0
    %v2488 = vadd.f32 %v512, %v2487
    %v2489 = vpop.f32.mrf.mxu0
    %v2490 = vadd.f32 %v520, %v2489
    %2491 = vdwg.mxu0
    %2492 = vmatpush.bf16.msra.mxu0 %v1830
    %2493 = vmatpush.bf16.msra.mxu0 %v1822
    %2494 = vmatpush.bf16.msra.mxu0 %v1814
    %2495 = vmatpush.bf16.msra.mxu0 %v1806
    %2496 = vmatpush.bf16.msra.mxu0 %v1798
    %2497 = vmatpush.bf16.msra.mxu0 %v1790
    %2498 = vmatpush.bf16.msra.mxu0 %v1782
    %2499 = vmatpush.bf16.msra.mxu0 %v1774
    %2500 = vmatmul.bf16.gmra.mxu0 %v547
    %v2501 = vpop.f32.mrf.mxu0
    %v2502 = vadd.f32 %v2488, %v2501
    %v2503 = vpop.f32.mrf.mxu0
    %v2504 = vadd.f32 %v2490, %v2503
    %2505 = vdwg.mxu0
    %2506 = vmatpush.bf16.msra.mxu0 %v1894
    %2507 = vmatpush.bf16.msra.mxu0 %v1886
    %2508 = vmatpush.bf16.msra.mxu0 %v1878
    %2509 = vmatpush.bf16.msra.mxu0 %v1870
    %2510 = vmatpush.bf16.msra.mxu0 %v1862
    %2511 = vmatpush.bf16.msra.mxu0 %v1854
    %2512 = vmatpush.bf16.msra.mxu0 %v1846
    %2513 = vmatpush.bf16.msra.mxu0 %v1838
    %2514 = vmatmul.bf16.gmra.mxu0 %v548
    %v2515 = vpop.f32.mrf.mxu0
    %v2516 = vadd.f32 %v2502, %v2515
    %v2517 = vpop.f32.mrf.mxu0
    %v2518 = vadd.f32 %v2504, %v2517
    %2519 = vdwg.mxu0
    %2520 = vmatpush.bf16.msra.mxu0 %v1958
    %2521 = vmatpush.bf16.msra.mxu0 %v1950
    %2522 = vmatpush.bf16.msra.mxu0 %v1942
    %2523 = vmatpush.bf16.msra.mxu0 %v1934
    %2524 = vmatpush.bf16.msra.mxu0 %v1926
    %2525 = vmatpush.bf16.msra.mxu0 %v1918
    %2526 = vmatpush.bf16.msra.mxu0 %v1910
    %2527 = vmatpush.bf16.msra.mxu0 %v1902
    %2528 = vmatmul.bf16.gmra.mxu0 %v549
    %v2529 = vpop.f32.mrf.mxu0
    %v2530 = vadd.f32 %v2516, %v2529
    %v2531 = vpop.f32.mrf.mxu0
    %v2532 = vadd.f32 %v2518, %v2531
    %2533 = vdwg.mxu0
    %2534 = vmatpush.bf16.msra.mxu0 %v2022
    %2535 = vmatpush.bf16.msra.mxu0 %v2014
    %2536 = vmatpush.bf16.msra.mxu0 %v2006
    %2537 = vmatpush.bf16.msra.mxu0 %v1998
    %2538 = vmatpush.bf16.msra.mxu0 %v1990
    %2539 = vmatpush.bf16.msra.mxu0 %v1982
    %2540 = vmatpush.bf16.msra.mxu0 %v1974
    %2541 = vmatpush.bf16.msra.mxu0 %v1966
    %2542 = vmatmul.bf16.gmra.mxu0 %v550
    %v2543 = vpop.f32.mrf.mxu0
    %v2544 = vadd.f32 %v2530, %v2543
    %v2545 = vpop.f32.mrf.mxu0
    %v2546 = vadd.f32 %v2532, %v2545
    %2547 = vdwg.mxu0
    %2548 = vmatpush.bf16.msra.mxu0 %v2086
    %2549 = vmatpush.bf16.msra.mxu0 %v2078
    %2550 = vmatpush.bf16.msra.mxu0 %v2070
    %2551 = vmatpush.bf16.msra.mxu0 %v2062
    %2552 = vmatpush.bf16.msra.mxu0 %v2054
    %2553 = vmatpush.bf16.msra.mxu0 %v2046
    %2554 = vmatpush.bf16.msra.mxu0 %v2038
    %2555 = vmatpush.bf16.msra.mxu0 %v2030
    %2556 = vmatmul.bf16.gmra.mxu0 %v551
    %v2557 = vpop.f32.mrf.mxu0
    %v2558 = vadd.f32 %v2544, %v2557
    %v2559 = vpop.f32.mrf.mxu0
    %v2560 = vadd.f32 %v2546, %v2559
    %2561 = vdwg.mxu0
    %2562 = vmatpush.bf16.msra.mxu0 %v1767
    %2563 = vmatpush.bf16.msra.mxu0 %v1759
    %2564 = vmatpush.bf16.msra.mxu0 %v1751
    %2565 = vmatpush.bf16.msra.mxu0 %v1743
    %2566 = vmatpush.bf16.msra.mxu0 %v1735
    %2567 = vmatpush.bf16.msra.mxu0 %v1727
    %2568 = vmatpush.bf16.msra.mxu0 %v1719
    %2569 = vmatpush.bf16.msra.mxu0 %v1711
    %2570 = vmatmul.bf16.gmra.mxu0 %v546
    %v2571 = vpop.f32.mrf.mxu0
    %v2572 = vadd.f32 %v513, %v2571
    %v2573 = vpop.f32.mrf.mxu0
    %v2574 = vadd.f32 %v521, %v2573
    %2575 = vdwg.mxu0
    %2576 = vmatpush.bf16.msra.mxu0 %v1831
    %2577 = vmatpush.bf16.msra.mxu0 %v1823
    %2578 = vmatpush.bf16.msra.mxu0 %v1815
    %2579 = vmatpush.bf16.msra.mxu0 %v1807
    %2580 = vmatpush.bf16.msra.mxu0 %v1799
    %2581 = vmatpush.bf16.msra.mxu0 %v1791
    %2582 = vmatpush.bf16.msra.mxu0 %v1783
    %2583 = vmatpush.bf16.msra.mxu0 %v1775
    %2584 = vmatmul.bf16.gmra.mxu0 %v547
    %v2585 = vpop.f32.mrf.mxu0
    %v2586 = vadd.f32 %v2572, %v2585
    %v2587 = vpop.f32.mrf.mxu0
    %v2588 = vadd.f32 %v2574, %v2587
    %2589 = vdwg.mxu0
    %2590 = vmatpush.bf16.msra.mxu0 %v1895
    %2591 = vmatpush.bf16.msra.mxu0 %v1887
    %2592 = vmatpush.bf16.msra.mxu0 %v1879
    %2593 = vmatpush.bf16.msra.mxu0 %v1871
    %2594 = vmatpush.bf16.msra.mxu0 %v1863
    %2595 = vmatpush.bf16.msra.mxu0 %v1855
    %2596 = vmatpush.bf16.msra.mxu0 %v1847
    %2597 = vmatpush.bf16.msra.mxu0 %v1839
    %2598 = vmatmul.bf16.gmra.mxu0 %v548
    %v2599 = vpop.f32.mrf.mxu0
    %v2600 = vadd.f32 %v2586, %v2599
    %v2601 = vpop.f32.mrf.mxu0
    %v2602 = vadd.f32 %v2588, %v2601
    %2603 = vdwg.mxu0
    %2604 = vmatpush.bf16.msra.mxu0 %v1959
    %2605 = vmatpush.bf16.msra.mxu0 %v1951
    %2606 = vmatpush.bf16.msra.mxu0 %v1943
    %2607 = vmatpush.bf16.msra.mxu0 %v1935
    %2608 = vmatpush.bf16.msra.mxu0 %v1927
    %2609 = vmatpush.bf16.msra.mxu0 %v1919
    %2610 = vmatpush.bf16.msra.mxu0 %v1911
    %2611 = vmatpush.bf16.msra.mxu0 %v1903
    %2612 = vmatmul.bf16.gmra.mxu0 %v549
    %v2613 = vpop.f32.mrf.mxu0
    %v2614 = vadd.f32 %v2600, %v2613
    %v2615 = vpop.f32.mrf.mxu0
    %v2616 = vadd.f32 %v2602, %v2615
    %2617 = vdwg.mxu0
    %2618 = vmatpush.bf16.msra.mxu0 %v2023
    %2619 = vmatpush.bf16.msra.mxu0 %v2015
    %2620 = vmatpush.bf16.msra.mxu0 %v2007
    %2621 = vmatpush.bf16.msra.mxu0 %v1999
    %2622 = vmatpush.bf16.msra.mxu0 %v1991
    %2623 = vmatpush.bf16.msra.mxu0 %v1983
    %2624 = vmatpush.bf16.msra.mxu0 %v1975
    %2625 = vmatpush.bf16.msra.mxu0 %v1967
    %2626 = vmatmul.bf16.gmra.mxu0 %v550
    %v2627 = vpop.f32.mrf.mxu0
    %v2628 = vadd.f32 %v2614, %v2627
    %v2629 = vpop.f32.mrf.mxu0
    %v2630 = vadd.f32 %v2616, %v2629
    %2631 = vdwg.mxu0
    %2632 = vmatpush.bf16.msra.mxu0 %v2087
    %2633 = vmatpush.bf16.msra.mxu0 %v2079
    %2634 = vmatpush.bf16.msra.mxu0 %v2071
    %2635 = vmatpush.bf16.msra.mxu0 %v2063
    %2636 = vmatpush.bf16.msra.mxu0 %v2055
    %2637 = vmatpush.bf16.msra.mxu0 %v2047
    %2638 = vmatpush.bf16.msra.mxu0 %v2039
    %2639 = vmatpush.bf16.msra.mxu0 %v2031
    %2640 = vmatmul.bf16.gmra.mxu0 %v551
    %v2641 = vpop.f32.mrf.mxu0
    %v2642 = vadd.f32 %v2628, %v2641
    %v2643 = vpop.f32.mrf.mxu0
    %v2644 = vadd.f32 %v2630, %v2643
    %2645 = vdwg.mxu0
    %2646 = vmatpush.bf16.msra.mxu0 %v1768
    %2647 = vmatpush.bf16.msra.mxu0 %v1760
    %2648 = vmatpush.bf16.msra.mxu0 %v1752
    %2649 = vmatpush.bf16.msra.mxu0 %v1744
    %2650 = vmatpush.bf16.msra.mxu0 %v1736
    %2651 = vmatpush.bf16.msra.mxu0 %v1728
    %2652 = vmatpush.bf16.msra.mxu0 %v1720
    %2653 = vmatpush.bf16.msra.mxu0 %v1712
    %2654 = vmatmul.bf16.gmra.mxu0 %v546
    %v2655 = vpop.f32.mrf.mxu0
    %v2656 = vadd.f32 %v514, %v2655
    %v2657 = vpop.f32.mrf.mxu0
    %v2658 = vadd.f32 %v522, %v2657
    %2659 = vdwg.mxu0
    %2660 = vmatpush.bf16.msra.mxu0 %v1832
    %2661 = vmatpush.bf16.msra.mxu0 %v1824
    %2662 = vmatpush.bf16.msra.mxu0 %v1816
    %2663 = vmatpush.bf16.msra.mxu0 %v1808
    %2664 = vmatpush.bf16.msra.mxu0 %v1800
    %2665 = vmatpush.bf16.msra.mxu0 %v1792
    %2666 = vmatpush.bf16.msra.mxu0 %v1784
    %2667 = vmatpush.bf16.msra.mxu0 %v1776
    %2668 = vmatmul.bf16.gmra.mxu0 %v547
    %v2669 = vpop.f32.mrf.mxu0
    %v2670 = vadd.f32 %v2656, %v2669
    %v2671 = vpop.f32.mrf.mxu0
    %v2672 = vadd.f32 %v2658, %v2671
    %2673 = vdwg.mxu0
    %2674 = vmatpush.bf16.msra.mxu0 %v1896
    %2675 = vmatpush.bf16.msra.mxu0 %v1888
    %2676 = vmatpush.bf16.msra.mxu0 %v1880
    %2677 = vmatpush.bf16.msra.mxu0 %v1872
    %2678 = vmatpush.bf16.msra.mxu0 %v1864
    %2679 = vmatpush.bf16.msra.mxu0 %v1856
    %2680 = vmatpush.bf16.msra.mxu0 %v1848
    %2681 = vmatpush.bf16.msra.mxu0 %v1840
    %2682 = vmatmul.bf16.gmra.mxu0 %v548
    %v2683 = vpop.f32.mrf.mxu0
    %v2684 = vadd.f32 %v2670, %v2683
    %v2685 = vpop.f32.mrf.mxu0
    %v2686 = vadd.f32 %v2672, %v2685
    %2687 = vdwg.mxu0
    %2688 = vmatpush.bf16.msra.mxu0 %v1960
    %2689 = vmatpush.bf16.msra.mxu0 %v1952
    %2690 = vmatpush.bf16.msra.mxu0 %v1944
    %2691 = vmatpush.bf16.msra.mxu0 %v1936
    %2692 = vmatpush.bf16.msra.mxu0 %v1928
    %2693 = vmatpush.bf16.msra.mxu0 %v1920
    %2694 = vmatpush.bf16.msra.mxu0 %v1912
    %2695 = vmatpush.bf16.msra.mxu0 %v1904
    %2696 = vmatmul.bf16.gmra.mxu0 %v549
    %v2697 = vpop.f32.mrf.mxu0
    %v2698 = vadd.f32 %v2684, %v2697
    %v2699 = vpop.f32.mrf.mxu0
    %v2700 = vadd.f32 %v2686, %v2699
    %2701 = vdwg.mxu0
    %2702 = vmatpush.bf16.msra.mxu0 %v2024
    %2703 = vmatpush.bf16.msra.mxu0 %v2016
    %2704 = vmatpush.bf16.msra.mxu0 %v2008
    %2705 = vmatpush.bf16.msra.mxu0 %v2000
    %2706 = vmatpush.bf16.msra.mxu0 %v1992
    %2707 = vmatpush.bf16.msra.mxu0 %v1984
    %2708 = vmatpush.bf16.msra.mxu0 %v1976
    %2709 = vmatpush.bf16.msra.mxu0 %v1968
    %2710 = vmatmul.bf16.gmra.mxu0 %v550
    %v2711 = vpop.f32.mrf.mxu0
    %v2712 = vadd.f32 %v2698, %v2711
    %v2713 = vpop.f32.mrf.mxu0
    %v2714 = vadd.f32 %v2700, %v2713
    %2715 = vdwg.mxu0
    %2716 = vmatpush.bf16.msra.mxu0 %v2088
    %2717 = vmatpush.bf16.msra.mxu0 %v2080
    %2718 = vmatpush.bf16.msra.mxu0 %v2072
    %2719 = vmatpush.bf16.msra.mxu0 %v2064
    %2720 = vmatpush.bf16.msra.mxu0 %v2056
    %2721 = vmatpush.bf16.msra.mxu0 %v2048
    %2722 = vmatpush.bf16.msra.mxu0 %v2040
    %2723 = vmatpush.bf16.msra.mxu0 %v2032
    %2724 = vmatmul.bf16.gmra.mxu0 %v551
    %v2725 = vpop.f32.mrf.mxu0
    %v2726 = vadd.f32 %v2712, %v2725
    %v2727 = vpop.f32.mrf.mxu0
    %v2728 = vadd.f32 %v2714, %v2727
    %2729 = vdwg.mxu0
    %2730 = vmatpush.bf16.msra.mxu0 %v1769
    %2731 = vmatpush.bf16.msra.mxu0 %v1761
    %2732 = vmatpush.bf16.msra.mxu0 %v1753
    %2733 = vmatpush.bf16.msra.mxu0 %v1745
    %2734 = vmatpush.bf16.msra.mxu0 %v1737
    %2735 = vmatpush.bf16.msra.mxu0 %v1729
    %2736 = vmatpush.bf16.msra.mxu0 %v1721
    %2737 = vmatpush.bf16.msra.mxu0 %v1713
    %2738 = vmatmul.bf16.gmra.mxu0 %v546
    %v2739 = vpop.f32.mrf.mxu0
    %v2740 = vadd.f32 %v515, %v2739
    %v2741 = vpop.f32.mrf.mxu0
    %v2742 = vadd.f32 %v523, %v2741
    %2743 = vdwg.mxu0
    %2744 = vmatpush.bf16.msra.mxu0 %v1833
    %2745 = vmatpush.bf16.msra.mxu0 %v1825
    %2746 = vmatpush.bf16.msra.mxu0 %v1817
    %2747 = vmatpush.bf16.msra.mxu0 %v1809
    %2748 = vmatpush.bf16.msra.mxu0 %v1801
    %2749 = vmatpush.bf16.msra.mxu0 %v1793
    %2750 = vmatpush.bf16.msra.mxu0 %v1785
    %2751 = vmatpush.bf16.msra.mxu0 %v1777
    %2752 = vmatmul.bf16.gmra.mxu0 %v547
    %v2753 = vpop.f32.mrf.mxu0
    %v2754 = vadd.f32 %v2740, %v2753
    %v2755 = vpop.f32.mrf.mxu0
    %v2756 = vadd.f32 %v2742, %v2755
    %2757 = vdwg.mxu0
    %2758 = vmatpush.bf16.msra.mxu0 %v1897
    %2759 = vmatpush.bf16.msra.mxu0 %v1889
    %2760 = vmatpush.bf16.msra.mxu0 %v1881
    %2761 = vmatpush.bf16.msra.mxu0 %v1873
    %2762 = vmatpush.bf16.msra.mxu0 %v1865
    %2763 = vmatpush.bf16.msra.mxu0 %v1857
    %2764 = vmatpush.bf16.msra.mxu0 %v1849
    %2765 = vmatpush.bf16.msra.mxu0 %v1841
    %2766 = vmatmul.bf16.gmra.mxu0 %v548
    %v2767 = vpop.f32.mrf.mxu0
    %v2768 = vadd.f32 %v2754, %v2767
    %v2769 = vpop.f32.mrf.mxu0
    %v2770 = vadd.f32 %v2756, %v2769
    %2771 = vdwg.mxu0
    %2772 = vmatpush.bf16.msra.mxu0 %v1961
    %2773 = vmatpush.bf16.msra.mxu0 %v1953
    %2774 = vmatpush.bf16.msra.mxu0 %v1945
    %2775 = vmatpush.bf16.msra.mxu0 %v1937
    %2776 = vmatpush.bf16.msra.mxu0 %v1929
    %2777 = vmatpush.bf16.msra.mxu0 %v1921
    %2778 = vmatpush.bf16.msra.mxu0 %v1913
    %2779 = vmatpush.bf16.msra.mxu0 %v1905
    %2780 = vmatmul.bf16.gmra.mxu0 %v549
    %v2781 = vpop.f32.mrf.mxu0
    %v2782 = vadd.f32 %v2768, %v2781
    %v2783 = vpop.f32.mrf.mxu0
    %v2784 = vadd.f32 %v2770, %v2783
    %2785 = vdwg.mxu0
    %2786 = vmatpush.bf16.msra.mxu0 %v2025
    %2787 = vmatpush.bf16.msra.mxu0 %v2017
    %2788 = vmatpush.bf16.msra.mxu0 %v2009
    %2789 = vmatpush.bf16.msra.mxu0 %v2001
    %2790 = vmatpush.bf16.msra.mxu0 %v1993
    %2791 = vmatpush.bf16.msra.mxu0 %v1985
    %2792 = vmatpush.bf16.msra.mxu0 %v1977
    %2793 = vmatpush.bf16.msra.mxu0 %v1969
    %2794 = vmatmul.bf16.gmra.mxu0 %v550
    %v2795 = vpop.f32.mrf.mxu0
    %v2796 = vadd.f32 %v2782, %v2795
    %v2797 = vpop.f32.mrf.mxu0
    %v2798 = vadd.f32 %v2784, %v2797
    %2799 = vdwg.mxu0
    %2800 = vmatpush.bf16.msra.mxu0 %v2089
    %2801 = vmatpush.bf16.msra.mxu0 %v2081
    %2802 = vmatpush.bf16.msra.mxu0 %v2073
    %2803 = vmatpush.bf16.msra.mxu0 %v2065
    %2804 = vmatpush.bf16.msra.mxu0 %v2057
    %2805 = vmatpush.bf16.msra.mxu0 %v2049
    %2806 = vmatpush.bf16.msra.mxu0 %v2041
    %2807 = vmatpush.bf16.msra.mxu0 %v2033
    %2808 = vmatmul.bf16.gmra.mxu0 %v551
    %v2809 = vpop.f32.mrf.mxu0
    %v2810 = vadd.f32 %v2796, %v2809
    %v2811 = vpop.f32.mrf.mxu0
    %v2812 = vadd.f32 %v2798, %v2811
    %2813 = vdwg.mxu0
    %2814 = vmatpush.bf16.msra.mxu0 %v1770
    %2815 = vmatpush.bf16.msra.mxu0 %v1762
    %2816 = vmatpush.bf16.msra.mxu0 %v1754
    %2817 = vmatpush.bf16.msra.mxu0 %v1746
    %2818 = vmatpush.bf16.msra.mxu0 %v1738
    %2819 = vmatpush.bf16.msra.mxu0 %v1730
    %2820 = vmatpush.bf16.msra.mxu0 %v1722
    %2821 = vmatpush.bf16.msra.mxu0 %v1714
    %2822 = vmatmul.bf16.gmra.mxu0 %v546
    %v2823 = vpop.f32.mrf.mxu0
    %v2824 = vadd.f32 %v516, %v2823
    %v2825 = vpop.f32.mrf.mxu0
    %v2826 = vadd.f32 %v524, %v2825
    %2827 = vdwg.mxu0
    %2828 = vmatpush.bf16.msra.mxu0 %v1834
    %2829 = vmatpush.bf16.msra.mxu0 %v1826
    %2830 = vmatpush.bf16.msra.mxu0 %v1818
    %2831 = vmatpush.bf16.msra.mxu0 %v1810
    %2832 = vmatpush.bf16.msra.mxu0 %v1802
    %2833 = vmatpush.bf16.msra.mxu0 %v1794
    %2834 = vmatpush.bf16.msra.mxu0 %v1786
    %2835 = vmatpush.bf16.msra.mxu0 %v1778
    %2836 = vmatmul.bf16.gmra.mxu0 %v547
    %v2837 = vpop.f32.mrf.mxu0
    %v2838 = vadd.f32 %v2824, %v2837
    %v2839 = vpop.f32.mrf.mxu0
    %v2840 = vadd.f32 %v2826, %v2839
    %2841 = vdwg.mxu0
    %2842 = vmatpush.bf16.msra.mxu0 %v1898
    %2843 = vmatpush.bf16.msra.mxu0 %v1890
    %2844 = vmatpush.bf16.msra.mxu0 %v1882
    %2845 = vmatpush.bf16.msra.mxu0 %v1874
    %2846 = vmatpush.bf16.msra.mxu0 %v1866
    %2847 = vmatpush.bf16.msra.mxu0 %v1858
    %2848 = vmatpush.bf16.msra.mxu0 %v1850
    %2849 = vmatpush.bf16.msra.mxu0 %v1842
    %2850 = vmatmul.bf16.gmra.mxu0 %v548
    %v2851 = vpop.f32.mrf.mxu0
    %v2852 = vadd.f32 %v2838, %v2851
    %v2853 = vpop.f32.mrf.mxu0
    %v2854 = vadd.f32 %v2840, %v2853
    %2855 = vdwg.mxu0
    %2856 = vmatpush.bf16.msra.mxu0 %v1962
    %2857 = vmatpush.bf16.msra.mxu0 %v1954
    %2858 = vmatpush.bf16.msra.mxu0 %v1946
    %2859 = vmatpush.bf16.msra.mxu0 %v1938
    %2860 = vmatpush.bf16.msra.mxu0 %v1930
    %2861 = vmatpush.bf16.msra.mxu0 %v1922
    %2862 = vmatpush.bf16.msra.mxu0 %v1914
    %2863 = vmatpush.bf16.msra.mxu0 %v1906
    %2864 = vmatmul.bf16.gmra.mxu0 %v549
    %v2865 = vpop.f32.mrf.mxu0
    %v2866 = vadd.f32 %v2852, %v2865
    %v2867 = vpop.f32.mrf.mxu0
    %v2868 = vadd.f32 %v2854, %v2867
    %2869 = vdwg.mxu0
    %2870 = vmatpush.bf16.msra.mxu0 %v2026
    %2871 = vmatpush.bf16.msra.mxu0 %v2018
    %2872 = vmatpush.bf16.msra.mxu0 %v2010
    %2873 = vmatpush.bf16.msra.mxu0 %v2002
    %2874 = vmatpush.bf16.msra.mxu0 %v1994
    %2875 = vmatpush.bf16.msra.mxu0 %v1986
    %2876 = vmatpush.bf16.msra.mxu0 %v1978
    %2877 = vmatpush.bf16.msra.mxu0 %v1970
    %2878 = vmatmul.bf16.gmra.mxu0 %v550
    %v2879 = vpop.f32.mrf.mxu0
    %v2880 = vadd.f32 %v2866, %v2879
    %v2881 = vpop.f32.mrf.mxu0
    %v2882 = vadd.f32 %v2868, %v2881
    %2883 = vdwg.mxu0
    %2884 = vmatpush.bf16.msra.mxu0 %v2090
    %2885 = vmatpush.bf16.msra.mxu0 %v2082
    %2886 = vmatpush.bf16.msra.mxu0 %v2074
    %2887 = vmatpush.bf16.msra.mxu0 %v2066
    %2888 = vmatpush.bf16.msra.mxu0 %v2058
    %2889 = vmatpush.bf16.msra.mxu0 %v2050
    %2890 = vmatpush.bf16.msra.mxu0 %v2042
    %2891 = vmatpush.bf16.msra.mxu0 %v2034
    %2892 = vmatmul.bf16.gmra.mxu0 %v551
    %v2893 = vpop.f32.mrf.mxu0
    %v2894 = vadd.f32 %v2880, %v2893
    %v2895 = vpop.f32.mrf.mxu0
    %v2896 = vadd.f32 %v2882, %v2895
    %2897 = vdwg.mxu0
    %2898 = vmatpush.bf16.msra.mxu0 %v1771
    %2899 = vmatpush.bf16.msra.mxu0 %v1763
    %2900 = vmatpush.bf16.msra.mxu0 %v1755
    %2901 = vmatpush.bf16.msra.mxu0 %v1747
    %2902 = vmatpush.bf16.msra.mxu0 %v1739
    %2903 = vmatpush.bf16.msra.mxu0 %v1731
    %2904 = vmatpush.bf16.msra.mxu0 %v1723
    %2905 = vmatpush.bf16.msra.mxu0 %v1715
    %2906 = vmatmul.bf16.gmra.mxu0 %v546
    %v2907 = vpop.f32.mrf.mxu0
    %v2908 = vadd.f32 %v517, %v2907
    %v2909 = vpop.f32.mrf.mxu0
    %v2910 = vadd.f32 %v525, %v2909
    %2911 = vdwg.mxu0
    %2912 = vmatpush.bf16.msra.mxu0 %v1835
    %2913 = vmatpush.bf16.msra.mxu0 %v1827
    %2914 = vmatpush.bf16.msra.mxu0 %v1819
    %2915 = vmatpush.bf16.msra.mxu0 %v1811
    %2916 = vmatpush.bf16.msra.mxu0 %v1803
    %2917 = vmatpush.bf16.msra.mxu0 %v1795
    %2918 = vmatpush.bf16.msra.mxu0 %v1787
    %2919 = vmatpush.bf16.msra.mxu0 %v1779
    %2920 = vmatmul.bf16.gmra.mxu0 %v547
    %v2921 = vpop.f32.mrf.mxu0
    %v2922 = vadd.f32 %v2908, %v2921
    %v2923 = vpop.f32.mrf.mxu0
    %v2924 = vadd.f32 %v2910, %v2923
    %2925 = vdwg.mxu0
    %2926 = vmatpush.bf16.msra.mxu0 %v1899
    %2927 = vmatpush.bf16.msra.mxu0 %v1891
    %2928 = vmatpush.bf16.msra.mxu0 %v1883
    %2929 = vmatpush.bf16.msra.mxu0 %v1875
    %2930 = vmatpush.bf16.msra.mxu0 %v1867
    %2931 = vmatpush.bf16.msra.mxu0 %v1859
    %2932 = vmatpush.bf16.msra.mxu0 %v1851
    %2933 = vmatpush.bf16.msra.mxu0 %v1843
    %2934 = vmatmul.bf16.gmra.mxu0 %v548
    %v2935 = vpop.f32.mrf.mxu0
    %v2936 = vadd.f32 %v2922, %v2935
    %v2937 = vpop.f32.mrf.mxu0
    %v2938 = vadd.f32 %v2924, %v2937
    %2939 = vdwg.mxu0
    %2940 = vmatpush.bf16.msra.mxu0 %v1963
    %2941 = vmatpush.bf16.msra.mxu0 %v1955
    %2942 = vmatpush.bf16.msra.mxu0 %v1947
    %2943 = vmatpush.bf16.msra.mxu0 %v1939
    %2944 = vmatpush.bf16.msra.mxu0 %v1931
    %2945 = vmatpush.bf16.msra.mxu0 %v1923
    %2946 = vmatpush.bf16.msra.mxu0 %v1915
    %2947 = vmatpush.bf16.msra.mxu0 %v1907
    %2948 = vmatmul.bf16.gmra.mxu0 %v549
    %v2949 = vpop.f32.mrf.mxu0
    %v2950 = vadd.f32 %v2936, %v2949
    %v2951 = vpop.f32.mrf.mxu0
    %v2952 = vadd.f32 %v2938, %v2951
    %2953 = vdwg.mxu0
    %2954 = vmatpush.bf16.msra.mxu0 %v2027
    %2955 = vmatpush.bf16.msra.mxu0 %v2019
    %2956 = vmatpush.bf16.msra.mxu0 %v2011
    %2957 = vmatpush.bf16.msra.mxu0 %v2003
    %2958 = vmatpush.bf16.msra.mxu0 %v1995
    %2959 = vmatpush.bf16.msra.mxu0 %v1987
    %2960 = vmatpush.bf16.msra.mxu0 %v1979
    %2961 = vmatpush.bf16.msra.mxu0 %v1971
    %2962 = vmatmul.bf16.gmra.mxu0 %v550
    %v2963 = vpop.f32.mrf.mxu0
    %v2964 = vadd.f32 %v2950, %v2963
    %v2965 = vpop.f32.mrf.mxu0
    %v2966 = vadd.f32 %v2952, %v2965
    %2967 = vdwg.mxu0
    %2968 = vmatpush.bf16.msra.mxu0 %v2091
    %2969 = vmatpush.bf16.msra.mxu0 %v2083
    %2970 = vmatpush.bf16.msra.mxu0 %v2075
    %2971 = vmatpush.bf16.msra.mxu0 %v2067
    %2972 = vmatpush.bf16.msra.mxu0 %v2059
    %2973 = vmatpush.bf16.msra.mxu0 %v2051
    %2974 = vmatpush.bf16.msra.mxu0 %v2043
    %2975 = vmatpush.bf16.msra.mxu0 %v2035
    %2976 = vmatmul.bf16.gmra.mxu0 %v551
    %v2977 = vpop.f32.mrf.mxu0
    %v2978 = vadd.f32 %v2964, %v2977
    %v2979 = vpop.f32.mrf.mxu0
    %v2980 = vadd.f32 %v2966, %v2979
    %2981 = vdwg.mxu0
    %2982 = vmatpush.bf16.msra.mxu0 %v1772
    %2983 = vmatpush.bf16.msra.mxu0 %v1764
    %2984 = vmatpush.bf16.msra.mxu0 %v1756
    %2985 = vmatpush.bf16.msra.mxu0 %v1748
    %2986 = vmatpush.bf16.msra.mxu0 %v1740
    %2987 = vmatpush.bf16.msra.mxu0 %v1732
    %2988 = vmatpush.bf16.msra.mxu0 %v1724
    %2989 = vmatpush.bf16.msra.mxu0 %v1716
    %2990 = vmatmul.bf16.gmra.mxu0 %v546
    %v2991 = vpop.f32.mrf.mxu0
    %v2992 = vadd.f32 %v518, %v2991
    %v2993 = vpop.f32.mrf.mxu0
    %v2994 = vadd.f32 %v526, %v2993
    %2995 = vdwg.mxu0
    %2996 = vmatpush.bf16.msra.mxu0 %v1836
    %2997 = vmatpush.bf16.msra.mxu0 %v1828
    %2998 = vmatpush.bf16.msra.mxu0 %v1820
    %2999 = vmatpush.bf16.msra.mxu0 %v1812
    %3000 = vmatpush.bf16.msra.mxu0 %v1804
    %3001 = vmatpush.bf16.msra.mxu0 %v1796
    %3002 = vmatpush.bf16.msra.mxu0 %v1788
    %3003 = vmatpush.bf16.msra.mxu0 %v1780
    %3004 = vmatmul.bf16.gmra.mxu0 %v547
    %v3005 = vpop.f32.mrf.mxu0
    %v3006 = vadd.f32 %v2992, %v3005
    %v3007 = vpop.f32.mrf.mxu0
    %v3008 = vadd.f32 %v2994, %v3007
    %3009 = vdwg.mxu0
    %3010 = vmatpush.bf16.msra.mxu0 %v1900
    %3011 = vmatpush.bf16.msra.mxu0 %v1892
    %3012 = vmatpush.bf16.msra.mxu0 %v1884
    %3013 = vmatpush.bf16.msra.mxu0 %v1876
    %3014 = vmatpush.bf16.msra.mxu0 %v1868
    %3015 = vmatpush.bf16.msra.mxu0 %v1860
    %3016 = vmatpush.bf16.msra.mxu0 %v1852
    %3017 = vmatpush.bf16.msra.mxu0 %v1844
    %3018 = vmatmul.bf16.gmra.mxu0 %v548
    %v3019 = vpop.f32.mrf.mxu0
    %v3020 = vadd.f32 %v3006, %v3019
    %v3021 = vpop.f32.mrf.mxu0
    %v3022 = vadd.f32 %v3008, %v3021
    %3023 = vdwg.mxu0
    %3024 = vmatpush.bf16.msra.mxu0 %v1964
    %3025 = vmatpush.bf16.msra.mxu0 %v1956
    %3026 = vmatpush.bf16.msra.mxu0 %v1948
    %3027 = vmatpush.bf16.msra.mxu0 %v1940
    %3028 = vmatpush.bf16.msra.mxu0 %v1932
    %3029 = vmatpush.bf16.msra.mxu0 %v1924
    %3030 = vmatpush.bf16.msra.mxu0 %v1916
    %3031 = vmatpush.bf16.msra.mxu0 %v1908
    %3032 = vmatmul.bf16.gmra.mxu0 %v549
    %v3033 = vpop.f32.mrf.mxu0
    %v3034 = vadd.f32 %v3020, %v3033
    %v3035 = vpop.f32.mrf.mxu0
    %v3036 = vadd.f32 %v3022, %v3035
    %3037 = vdwg.mxu0
    %3038 = vmatpush.bf16.msra.mxu0 %v2028
    %3039 = vmatpush.bf16.msra.mxu0 %v2020
    %3040 = vmatpush.bf16.msra.mxu0 %v2012
    %3041 = vmatpush.bf16.msra.mxu0 %v2004
    %3042 = vmatpush.bf16.msra.mxu0 %v1996
    %3043 = vmatpush.bf16.msra.mxu0 %v1988
    %3044 = vmatpush.bf16.msra.mxu0 %v1980
    %3045 = vmatpush.bf16.msra.mxu0 %v1972
    %3046 = vmatmul.bf16.gmra.mxu0 %v550
    %v3047 = vpop.f32.mrf.mxu0
    %v3048 = vadd.f32 %v3034, %v3047
    %v3049 = vpop.f32.mrf.mxu0
    %v3050 = vadd.f32 %v3036, %v3049
    %3051 = vdwg.mxu0
    %3052 = vmatpush.bf16.msra.mxu0 %v2092
    %3053 = vmatpush.bf16.msra.mxu0 %v2084
    %3054 = vmatpush.bf16.msra.mxu0 %v2076
    %3055 = vmatpush.bf16.msra.mxu0 %v2068
    %3056 = vmatpush.bf16.msra.mxu0 %v2060
    %3057 = vmatpush.bf16.msra.mxu0 %v2052
    %3058 = vmatpush.bf16.msra.mxu0 %v2044
    %3059 = vmatpush.bf16.msra.mxu0 %v2036
    %3060 = vmatmul.bf16.gmra.mxu0 %v551
    %v3061 = vpop.f32.mrf.mxu0
    %v3062 = vadd.f32 %v3048, %v3061
    %v3063 = vpop.f32.mrf.mxu0
    %v3064 = vadd.f32 %v3050, %v3063
    %3065 = vdwg.mxu0
    %3066 = vmatpush.bf16.msra.mxu0 %v1773
    %3067 = vmatpush.bf16.msra.mxu0 %v1765
    %3068 = vmatpush.bf16.msra.mxu0 %v1757
    %3069 = vmatpush.bf16.msra.mxu0 %v1749
    %3070 = vmatpush.bf16.msra.mxu0 %v1741
    %3071 = vmatpush.bf16.msra.mxu0 %v1733
    %3072 = vmatpush.bf16.msra.mxu0 %v1725
    %3073 = vmatpush.bf16.msra.mxu0 %v1717
    %3074 = vmatmul.bf16.gmra.mxu0 %v546
    %v3075 = vpop.f32.mrf.mxu0
    %v3076 = vadd.f32 %v519, %v3075
    %v3077 = vpop.f32.mrf.mxu0
    %v3078 = vadd.f32 %v527, %v3077
    %3079 = vdwg.mxu0
    %3080 = vmatpush.bf16.msra.mxu0 %v1837
    %3081 = vmatpush.bf16.msra.mxu0 %v1829
    %3082 = vmatpush.bf16.msra.mxu0 %v1821
    %3083 = vmatpush.bf16.msra.mxu0 %v1813
    %3084 = vmatpush.bf16.msra.mxu0 %v1805
    %3085 = vmatpush.bf16.msra.mxu0 %v1797
    %3086 = vmatpush.bf16.msra.mxu0 %v1789
    %3087 = vmatpush.bf16.msra.mxu0 %v1781
    %3088 = vmatmul.bf16.gmra.mxu0 %v547
    %v3089 = vpop.f32.mrf.mxu0
    %v3090 = vadd.f32 %v3076, %v3089
    %v3091 = vpop.f32.mrf.mxu0
    %v3092 = vadd.f32 %v3078, %v3091
    %3093 = vdwg.mxu0
    %3094 = vmatpush.bf16.msra.mxu0 %v1901
    %3095 = vmatpush.bf16.msra.mxu0 %v1893
    %3096 = vmatpush.bf16.msra.mxu0 %v1885
    %3097 = vmatpush.bf16.msra.mxu0 %v1877
    %3098 = vmatpush.bf16.msra.mxu0 %v1869
    %3099 = vmatpush.bf16.msra.mxu0 %v1861
    %3100 = vmatpush.bf16.msra.mxu0 %v1853
    %3101 = vmatpush.bf16.msra.mxu0 %v1845
    %3102 = vmatmul.bf16.gmra.mxu0 %v548
    %v3103 = vpop.f32.mrf.mxu0
    %v3104 = vadd.f32 %v3090, %v3103
    %v3105 = vpop.f32.mrf.mxu0
    %v3106 = vadd.f32 %v3092, %v3105
    %3107 = vdwg.mxu0
    %3108 = vmatpush.bf16.msra.mxu0 %v1965
    %3109 = vmatpush.bf16.msra.mxu0 %v1957
    %3110 = vmatpush.bf16.msra.mxu0 %v1949
    %3111 = vmatpush.bf16.msra.mxu0 %v1941
    %3112 = vmatpush.bf16.msra.mxu0 %v1933
    %3113 = vmatpush.bf16.msra.mxu0 %v1925
    %3114 = vmatpush.bf16.msra.mxu0 %v1917
    %3115 = vmatpush.bf16.msra.mxu0 %v1909
    %3116 = vmatmul.bf16.gmra.mxu0 %v549
    %v3117 = vpop.f32.mrf.mxu0
    %v3118 = vadd.f32 %v3104, %v3117
    %v3119 = vpop.f32.mrf.mxu0
    %v3120 = vadd.f32 %v3106, %v3119
    %3121 = vdwg.mxu0
    %3122 = vmatpush.bf16.msra.mxu0 %v2029
    %3123 = vmatpush.bf16.msra.mxu0 %v2021
    %3124 = vmatpush.bf16.msra.mxu0 %v2013
    %3125 = vmatpush.bf16.msra.mxu0 %v2005
    %3126 = vmatpush.bf16.msra.mxu0 %v1997
    %3127 = vmatpush.bf16.msra.mxu0 %v1989
    %3128 = vmatpush.bf16.msra.mxu0 %v1981
    %3129 = vmatpush.bf16.msra.mxu0 %v1973
    %3130 = vmatmul.bf16.gmra.mxu0 %v550
    %v3131 = vpop.f32.mrf.mxu0
    %v3132 = vadd.f32 %v3118, %v3131
    %v3133 = vpop.f32.mrf.mxu0
    %v3134 = vadd.f32 %v3120, %v3133
    %3135 = vdwg.mxu0
    %3136 = vmatpush.bf16.msra.mxu0 %v2093
    %3137 = vmatpush.bf16.msra.mxu0 %v2085
    %3138 = vmatpush.bf16.msra.mxu0 %v2077
    %3139 = vmatpush.bf16.msra.mxu0 %v2069
    %3140 = vmatpush.bf16.msra.mxu0 %v2061
    %3141 = vmatpush.bf16.msra.mxu0 %v2053
    %3142 = vmatpush.bf16.msra.mxu0 %v2045
    %3143 = vmatpush.bf16.msra.mxu0 %v2037
    %3144 = vmatmul.bf16.gmra.mxu0 %v551
    %v3145 = vpop.f32.mrf.mxu0
    %v3146 = vadd.f32 %v3132, %v3145
    %v3147 = vpop.f32.mrf.mxu0
    %v3148 = vadd.f32 %v3134, %v3147
    %3149 = vdwg.mxu0
    %vm3150 = vcmp.gt.f32.partialorder %v2558, 0.0
    %vm3151 = vcmp.gt.f32.partialorder %v2642, 0.0
    %vm3152 = vcmp.gt.f32.partialorder %v2726, 0.0
    %vm3153 = vcmp.gt.f32.partialorder %v2810, 0.0
    %vm3154 = vcmp.gt.f32.partialorder %v2894, 0.0
    %vm3155 = vcmp.gt.f32.partialorder %v2978, 0.0
    %vm3156 = vcmp.gt.f32.partialorder %v3062, 0.0
    %vm3157 = vcmp.gt.f32.partialorder %v3146, 0.0
    %vm3158 = vcmp.gt.f32.partialorder %v2560, 0.0
    %vm3159 = vcmp.gt.f32.partialorder %v2644, 0.0
    %vm3160 = vcmp.gt.f32.partialorder %v2728, 0.0
    %vm3161 = vcmp.gt.f32.partialorder %v2812, 0.0
    %vm3162 = vcmp.gt.f32.partialorder %v2896, 0.0
    %vm3163 = vcmp.gt.f32.partialorder %v2980, 0.0
    %vm3164 = vcmp.gt.f32.partialorder %v3064, 0.0
    %vm3165 = vcmp.gt.f32.partialorder %v3148, 0.0
    %v3166 = vmul.f32 %v2558, 0.2
    %v3167 = vmul.f32 %v2642, 0.2
    %v3168 = vmul.f32 %v2726, 0.2
    %v3169 = vmul.f32 %v2810, 0.2
    %v3170 = vmul.f32 %v2894, 0.2
    %v3171 = vmul.f32 %v2978, 0.2
    %v3172 = vmul.f32 %v3062, 0.2
    %v3173 = vmul.f32 %v3146, 0.2
    %v3174 = vmul.f32 %v2560, 0.2
    %v3175 = vmul.f32 %v2644, 0.2
    %v3176 = vmul.f32 %v2728, 0.2
    %v3177 = vmul.f32 %v2812, 0.2
    %v3178 = vmul.f32 %v2896, 0.2
    %v3179 = vmul.f32 %v2980, 0.2
    %v3180 = vmul.f32 %v3064, 0.2
    %v3181 = vmul.f32 %v3148, 0.2
    %v3182 = vsel %vm3150, %v2558, %v3166
    %v3183 = vsel %vm3151, %v2642, %v3167
    %v3184 = vsel %vm3152, %v2726, %v3168
    %v3185 = vsel %vm3153, %v2810, %v3169
    %v3186 = vsel %vm3154, %v2894, %v3170
    %v3187 = vsel %vm3155, %v2978, %v3171
    %v3188 = vsel %vm3156, %v3062, %v3172
    %v3189 = vsel %vm3157, %v3146, %v3173
    %v3190 = vsel %vm3158, %v2560, %v3174
    %v3191 = vsel %vm3159, %v2644, %v3175
    %v3192 = vsel %vm3160, %v2728, %v3176
    %v3193 = vsel %vm3161, %v2812, %v3177
    %v3194 = vsel %vm3162, %v2896, %v3178
    %v3195 = vsel %vm3163, %v2980, %v3179
    %v3196 = vsel %vm3164, %v3064, %v3180
    %v3197 = vsel %vm3165, %v3148, %v3181
    %v3198 = vpack.c.bf16 %v3190, %v3182
    %v3199 = vpack.c.bf16 %v3191, %v3183
    %v3200 = vpack.c.bf16 %v3192, %v3184
    %v3201 = vpack.c.bf16 %v3193, %v3185
    %v3202 = vpack.c.bf16 %v3194, %v3186
    %v3203 = vpack.c.bf16 %v3195, %v3187
    %v3204 = vpack.c.bf16 %v3196, %v3188
    %v3205 = vpack.c.bf16 %v3197, %v3189
    %v3206 = vld [vmem:[#allocation5] sm:$0xff]
    %v3207 = vld [vmem:[#allocation5 + $0x8] sm:$0xff]
    %v3208 = vld [vmem:[#allocation5 + $0x10] sm:$0xff]
    %v3209 = vld [vmem:[#allocation5 + $0x18] sm:$0xff]
    %v3210 = vld [vmem:[#allocation5 + $0x20] sm:$0xff]
    %v3211 = vld [vmem:[#allocation5 + $0x28] sm:$0xff]
    %v3212 = vld [vmem:[#allocation5 + $0x30] sm:$0xff]
    %v3213 = vld [vmem:[#allocation5 + $0x38] sm:$0xff]
    %v3214 = vld [vmem:[#allocation5 + $0x40] sm:$0xff]
    %v3215 = vld [vmem:[#allocation5 + $0x48] sm:$0xff]
    %v3216 = vld [vmem:[#allocation5 + $0x50] sm:$0xff]
    %v3217 = vld [vmem:[#allocation5 + $0x58] sm:$0xff]
    %v3218 = vld [vmem:[#allocation5 + $0x60] sm:$0xff]
    %v3219 = vld [vmem:[#allocation5 + $0x68] sm:$0xff]
    %v3220 = vld [vmem:[#allocation5 + $0x70] sm:$0xff]
    %v3221 = vld [vmem:[#allocation5 + $0x78] sm:$0xff]
    %v3222 = vld [vmem:[#allocation5 + $0x80] sm:$0xff]
    %v3223 = vld [vmem:[#allocation5 + $0x88] sm:$0xff]
    %v3224 = vld [vmem:[#allocation5 + $0x90] sm:$0xff]
    %v3225 = vld [vmem:[#allocation5 + $0x98] sm:$0xff]
    %v3226 = vld [vmem:[#allocation5 + $0xa0] sm:$0xff]
    %v3227 = vld [vmem:[#allocation5 + $0xa8] sm:$0xff]
    %v3228 = vld [vmem:[#allocation5 + $0xb0] sm:$0xff]
    %v3229 = vld [vmem:[#allocation5 + $0xb8] sm:$0xff]
    %v3230 = vld [vmem:[#allocation5 + $0xc0] sm:$0xff]
    %v3231 = vld [vmem:[#allocation5 + $0xc8] sm:$0xff]
    %v3232 = vld [vmem:[#allocation5 + $0xd0] sm:$0xff]
    %v3233 = vld [vmem:[#allocation5 + $0xd8] sm:$0xff]
    %v3234 = vld [vmem:[#allocation5 + $0xe0] sm:$0xff]
    %v3235 = vld [vmem:[#allocation5 + $0xe8] sm:$0xff]
    %v3236 = vld [vmem:[#allocation5 + $0xf0] sm:$0xff]
    %v3237 = vld [vmem:[#allocation5 + $0xf8] sm:$0xff]
    %v3238 = vld [vmem:[#allocation5 + $0x100] sm:$0xff]
    %v3239 = vld [vmem:[#allocation5 + $0x108] sm:$0xff]
    %v3240 = vld [vmem:[#allocation5 + $0x110] sm:$0xff]
    %v3241 = vld [vmem:[#allocation5 + $0x118] sm:$0xff]
    %v3242 = vld [vmem:[#allocation5 + $0x120] sm:$0xff]
    %v3243 = vld [vmem:[#allocation5 + $0x128] sm:$0xff]
    %v3244 = vld [vmem:[#allocation5 + $0x130] sm:$0xff]
    %v3245 = vld [vmem:[#allocation5 + $0x138] sm:$0xff]
    %v3246 = vld [vmem:[#allocation5 + $0x140] sm:$0xff]
    %v3247 = vld [vmem:[#allocation5 + $0x148] sm:$0xff]
    %v3248 = vld [vmem:[#allocation5 + $0x150] sm:$0xff]
    %v3249 = vld [vmem:[#allocation5 + $0x158] sm:$0xff]
    %v3250 = vld [vmem:[#allocation5 + $0x160] sm:$0xff]
    %v3251 = vld [vmem:[#allocation5 + $0x168] sm:$0xff]
    %v3252 = vld [vmem:[#allocation5 + $0x170] sm:$0xff]
    %v3253 = vld [vmem:[#allocation5 + $0x178] sm:$0xff]
    %v3254 = vld [vmem:[#allocation5 + $0x180] sm:$0xff]
    %v3255 = vld [vmem:[#allocation5 + $0x188] sm:$0xff]
    %v3256 = vld [vmem:[#allocation5 + $0x190] sm:$0xff]
    %v3257 = vld [vmem:[#allocation5 + $0x198] sm:$0xff]
    %v3258 = vld [vmem:[#allocation5 + $0x1a0] sm:$0xff]
    %v3259 = vld [vmem:[#allocation5 + $0x1a8] sm:$0xff]
    %v3260 = vld [vmem:[#allocation5 + $0x1b0] sm:$0xff]
    %v3261 = vld [vmem:[#allocation5 + $0x1b8] sm:$0xff]
    %v3262 = vld [vmem:[#allocation5 + $0x1c0] sm:$0xff]
    %v3263 = vld [vmem:[#allocation5 + $0x1c8] sm:$0xff]
    %v3264 = vld [vmem:[#allocation5 + $0x1d0] sm:$0xff]
    %v3265 = vld [vmem:[#allocation5 + $0x1d8] sm:$0xff]
    %v3266 = vld [vmem:[#allocation5 + $0x1e0] sm:$0xff]
    %v3267 = vld [vmem:[#allocation5 + $0x1e8] sm:$0xff]
    %v3268 = vld [vmem:[#allocation5 + $0x1f0] sm:$0xff]
    %v3269 = vld [vmem:[#allocation5 + $0x1f8] sm:$0xff]
    %v3270 = vld [vmem:[#allocation5 + $0x200] sm:$0xff]
    %v3271 = vld [vmem:[#allocation5 + $0x208] sm:$0xff]
    %v3272 = vld [vmem:[#allocation5 + $0x210] sm:$0xff]
    %v3273 = vld [vmem:[#allocation5 + $0x218] sm:$0xff]
    %v3274 = vld [vmem:[#allocation5 + $0x220] sm:$0xff]
    %v3275 = vld [vmem:[#allocation5 + $0x228] sm:$0xff]
    %v3276 = vld [vmem:[#allocation5 + $0x230] sm:$0xff]
    %v3277 = vld [vmem:[#allocation5 + $0x238] sm:$0xff]
    %v3278 = vld [vmem:[#allocation5 + $0x240] sm:$0xff]
    %v3279 = vld [vmem:[#allocation5 + $0x248] sm:$0xff]
    %v3280 = vld [vmem:[#allocation5 + $0x250] sm:$0xff]
    %v3281 = vld [vmem:[#allocation5 + $0x258] sm:$0xff]
    %v3282 = vld [vmem:[#allocation5 + $0x260] sm:$0xff]
    %v3283 = vld [vmem:[#allocation5 + $0x268] sm:$0xff]
    %v3284 = vld [vmem:[#allocation5 + $0x270] sm:$0xff]
    %v3285 = vld [vmem:[#allocation5 + $0x278] sm:$0xff]
    %v3286 = vld [vmem:[#allocation5 + $0x280] sm:$0xff]
    %v3287 = vld [vmem:[#allocation5 + $0x288] sm:$0xff]
    %v3288 = vld [vmem:[#allocation5 + $0x290] sm:$0xff]
    %v3289 = vld [vmem:[#allocation5 + $0x298] sm:$0xff]
    %v3290 = vld [vmem:[#allocation5 + $0x2a0] sm:$0xff]
    %v3291 = vld [vmem:[#allocation5 + $0x2a8] sm:$0xff]
    %v3292 = vld [vmem:[#allocation5 + $0x2b0] sm:$0xff]
    %v3293 = vld [vmem:[#allocation5 + $0x2b8] sm:$0xff]
    %v3294 = vld [vmem:[#allocation5 + $0x2c0] sm:$0xff]
    %v3295 = vld [vmem:[#allocation5 + $0x2c8] sm:$0xff]
    %v3296 = vld [vmem:[#allocation5 + $0x2d0] sm:$0xff]
    %v3297 = vld [vmem:[#allocation5 + $0x2d8] sm:$0xff]
    %v3298 = vld [vmem:[#allocation5 + $0x2e0] sm:$0xff]
    %v3299 = vld [vmem:[#allocation5 + $0x2e8] sm:$0xff]
    %v3300 = vld [vmem:[#allocation5 + $0x2f0] sm:$0xff]
    %v3301 = vld [vmem:[#allocation5 + $0x2f8] sm:$0xff]
    %v3302 = vld [vmem:[#allocation5 + $0x300] sm:$0xff]
    %v3303 = vld [vmem:[#allocation5 + $0x308] sm:$0xff]
    %v3304 = vld [vmem:[#allocation5 + $0x310] sm:$0xff]
    %v3305 = vld [vmem:[#allocation5 + $0x318] sm:$0xff]
    %v3306 = vld [vmem:[#allocation5 + $0x320] sm:$0xff]
    %v3307 = vld [vmem:[#allocation5 + $0x328] sm:$0xff]
    %v3308 = vld [vmem:[#allocation5 + $0x330] sm:$0xff]
    %v3309 = vld [vmem:[#allocation5 + $0x338] sm:$0xff]
    %v3310 = vld [vmem:[#allocation5 + $0x340] sm:$0xff]
    %v3311 = vld [vmem:[#allocation5 + $0x348] sm:$0xff]
    %v3312 = vld [vmem:[#allocation5 + $0x350] sm:$0xff]
    %v3313 = vld [vmem:[#allocation5 + $0x358] sm:$0xff]
    %v3314 = vld [vmem:[#allocation5 + $0x360] sm:$0xff]
    %v3315 = vld [vmem:[#allocation5 + $0x368] sm:$0xff]
    %v3316 = vld [vmem:[#allocation5 + $0x370] sm:$0xff]
    %v3317 = vld [vmem:[#allocation5 + $0x378] sm:$0xff]
    %v3318 = vld [vmem:[#allocation5 + $0x380] sm:$0xff]
    %v3319 = vld [vmem:[#allocation5 + $0x388] sm:$0xff]
    %v3320 = vld [vmem:[#allocation5 + $0x390] sm:$0xff]
    %v3321 = vld [vmem:[#allocation5 + $0x398] sm:$0xff]
    %v3322 = vld [vmem:[#allocation5 + $0x3a0] sm:$0xff]
    %v3323 = vld [vmem:[#allocation5 + $0x3a8] sm:$0xff]
    %v3324 = vld [vmem:[#allocation5 + $0x3b0] sm:$0xff]
    %v3325 = vld [vmem:[#allocation5 + $0x3b8] sm:$0xff]
    %v3326 = vld [vmem:[#allocation5 + $0x3c0] sm:$0xff]
    %v3327 = vld [vmem:[#allocation5 + $0x3c8] sm:$0xff]
    %v3328 = vld [vmem:[#allocation5 + $0x3d0] sm:$0xff]
    %v3329 = vld [vmem:[#allocation5 + $0x3d8] sm:$0xff]
    %v3330 = vld [vmem:[#allocation5 + $0x3e0] sm:$0xff]
    %v3331 = vld [vmem:[#allocation5 + $0x3e8] sm:$0xff]
    %v3332 = vld [vmem:[#allocation5 + $0x3f0] sm:$0xff]
    %v3333 = vld [vmem:[#allocation5 + $0x3f8] sm:$0xff]
    %v3334 = vld [vmem:[#allocation5 + $0x400] sm:$0xff]
    %v3335 = vld [vmem:[#allocation5 + $0x408] sm:$0xff]
    %v3336 = vld [vmem:[#allocation5 + $0x410] sm:$0xff]
    %v3337 = vld [vmem:[#allocation5 + $0x418] sm:$0xff]
    %v3338 = vld [vmem:[#allocation5 + $0x420] sm:$0xff]
    %v3339 = vld [vmem:[#allocation5 + $0x428] sm:$0xff]
    %v3340 = vld [vmem:[#allocation5 + $0x430] sm:$0xff]
    %v3341 = vld [vmem:[#allocation5 + $0x438] sm:$0xff]
    %v3342 = vld [vmem:[#allocation5 + $0x440] sm:$0xff]
    %v3343 = vld [vmem:[#allocation5 + $0x448] sm:$0xff]
    %v3344 = vld [vmem:[#allocation5 + $0x450] sm:$0xff]
    %v3345 = vld [vmem:[#allocation5 + $0x458] sm:$0xff]
    %v3346 = vld [vmem:[#allocation5 + $0x460] sm:$0xff]
    %v3347 = vld [vmem:[#allocation5 + $0x468] sm:$0xff]
    %v3348 = vld [vmem:[#allocation5 + $0x470] sm:$0xff]
    %v3349 = vld [vmem:[#allocation5 + $0x478] sm:$0xff]
    %v3350 = vld [vmem:[#allocation5 + $0x480] sm:$0xff]
    %v3351 = vld [vmem:[#allocation5 + $0x488] sm:$0xff]
    %v3352 = vld [vmem:[#allocation5 + $0x490] sm:$0xff]
    %v3353 = vld [vmem:[#allocation5 + $0x498] sm:$0xff]
    %v3354 = vld [vmem:[#allocation5 + $0x4a0] sm:$0xff]
    %v3355 = vld [vmem:[#allocation5 + $0x4a8] sm:$0xff]
    %v3356 = vld [vmem:[#allocation5 + $0x4b0] sm:$0xff]
    %v3357 = vld [vmem:[#allocation5 + $0x4b8] sm:$0xff]
    %v3358 = vld [vmem:[#allocation5 + $0x4c0] sm:$0xff]
    %v3359 = vld [vmem:[#allocation5 + $0x4c8] sm:$0xff]
    %v3360 = vld [vmem:[#allocation5 + $0x4d0] sm:$0xff]
    %v3361 = vld [vmem:[#allocation5 + $0x4d8] sm:$0xff]
    %v3362 = vld [vmem:[#allocation5 + $0x4e0] sm:$0xff]
    %v3363 = vld [vmem:[#allocation5 + $0x4e8] sm:$0xff]
    %v3364 = vld [vmem:[#allocation5 + $0x4f0] sm:$0xff]
    %v3365 = vld [vmem:[#allocation5 + $0x4f8] sm:$0xff]
    %v3366 = vld [vmem:[#allocation5 + $0x500] sm:$0xff]
    %v3367 = vld [vmem:[#allocation5 + $0x508] sm:$0xff]
    %v3368 = vld [vmem:[#allocation5 + $0x510] sm:$0xff]
    %v3369 = vld [vmem:[#allocation5 + $0x518] sm:$0xff]
    %v3370 = vld [vmem:[#allocation5 + $0x520] sm:$0xff]
    %v3371 = vld [vmem:[#allocation5 + $0x528] sm:$0xff]
    %v3372 = vld [vmem:[#allocation5 + $0x530] sm:$0xff]
    %v3373 = vld [vmem:[#allocation5 + $0x538] sm:$0xff]
    %v3374 = vld [vmem:[#allocation5 + $0x540] sm:$0xff]
    %v3375 = vld [vmem:[#allocation5 + $0x548] sm:$0xff]
    %v3376 = vld [vmem:[#allocation5 + $0x550] sm:$0xff]
    %v3377 = vld [vmem:[#allocation5 + $0x558] sm:$0xff]
    %v3378 = vld [vmem:[#allocation5 + $0x560] sm:$0xff]
    %v3379 = vld [vmem:[#allocation5 + $0x568] sm:$0xff]
    %v3380 = vld [vmem:[#allocation5 + $0x570] sm:$0xff]
    %v3381 = vld [vmem:[#allocation5 + $0x578] sm:$0xff]
    %v3382 = vld [vmem:[#allocation5 + $0x580] sm:$0xff]
    %v3383 = vld [vmem:[#allocation5 + $0x588] sm:$0xff]
    %v3384 = vld [vmem:[#allocation5 + $0x590] sm:$0xff]
    %v3385 = vld [vmem:[#allocation5 + $0x598] sm:$0xff]
    %v3386 = vld [vmem:[#allocation5 + $0x5a0] sm:$0xff]
    %v3387 = vld [vmem:[#allocation5 + $0x5a8] sm:$0xff]
    %v3388 = vld [vmem:[#allocation5 + $0x5b0] sm:$0xff]
    %v3389 = vld [vmem:[#allocation5 + $0x5b8] sm:$0xff]
    %v3390 = vld [vmem:[#allocation5 + $0x5c0] sm:$0xff]
    %v3391 = vld [vmem:[#allocation5 + $0x5c8] sm:$0xff]
    %v3392 = vld [vmem:[#allocation5 + $0x5d0] sm:$0xff]
    %v3393 = vld [vmem:[#allocation5 + $0x5d8] sm:$0xff]
    %v3394 = vld [vmem:[#allocation5 + $0x5e0] sm:$0xff]
    %v3395 = vld [vmem:[#allocation5 + $0x5e8] sm:$0xff]
    %v3396 = vld [vmem:[#allocation5 + $0x5f0] sm:$0xff]
    %v3397 = vld [vmem:[#allocation5 + $0x5f8] sm:$0xff]
    %v3398 = vld [vmem:[#allocation5 + $0x600] sm:$0xff]
    %v3399 = vld [vmem:[#allocation5 + $0x608] sm:$0xff]
    %v3400 = vld [vmem:[#allocation5 + $0x610] sm:$0xff]
    %v3401 = vld [vmem:[#allocation5 + $0x618] sm:$0xff]
    %v3402 = vld [vmem:[#allocation5 + $0x620] sm:$0xff]
    %v3403 = vld [vmem:[#allocation5 + $0x628] sm:$0xff]
    %v3404 = vld [vmem:[#allocation5 + $0x630] sm:$0xff]
    %v3405 = vld [vmem:[#allocation5 + $0x638] sm:$0xff]
    %v3406 = vld [vmem:[#allocation5 + $0x640] sm:$0xff]
    %v3407 = vld [vmem:[#allocation5 + $0x648] sm:$0xff]
    %v3408 = vld [vmem:[#allocation5 + $0x650] sm:$0xff]
    %v3409 = vld [vmem:[#allocation5 + $0x658] sm:$0xff]
    %v3410 = vld [vmem:[#allocation5 + $0x660] sm:$0xff]
    %v3411 = vld [vmem:[#allocation5 + $0x668] sm:$0xff]
    %v3412 = vld [vmem:[#allocation5 + $0x670] sm:$0xff]
    %v3413 = vld [vmem:[#allocation5 + $0x678] sm:$0xff]
    %v3414 = vld [vmem:[#allocation5 + $0x680] sm:$0xff]
    %v3415 = vld [vmem:[#allocation5 + $0x688] sm:$0xff]
    %v3416 = vld [vmem:[#allocation5 + $0x690] sm:$0xff]
    %v3417 = vld [vmem:[#allocation5 + $0x698] sm:$0xff]
    %v3418 = vld [vmem:[#allocation5 + $0x6a0] sm:$0xff]
    %v3419 = vld [vmem:[#allocation5 + $0x6a8] sm:$0xff]
    %v3420 = vld [vmem:[#allocation5 + $0x6b0] sm:$0xff]
    %v3421 = vld [vmem:[#allocation5 + $0x6b8] sm:$0xff]
    %v3422 = vld [vmem:[#allocation5 + $0x6c0] sm:$0xff]
    %v3423 = vld [vmem:[#allocation5 + $0x6c8] sm:$0xff]
    %v3424 = vld [vmem:[#allocation5 + $0x6d0] sm:$0xff]
    %v3425 = vld [vmem:[#allocation5 + $0x6d8] sm:$0xff]
    %v3426 = vld [vmem:[#allocation5 + $0x6e0] sm:$0xff]
    %v3427 = vld [vmem:[#allocation5 + $0x6e8] sm:$0xff]
    %v3428 = vld [vmem:[#allocation5 + $0x6f0] sm:$0xff]
    %v3429 = vld [vmem:[#allocation5 + $0x6f8] sm:$0xff]
    %v3430 = vld [vmem:[#allocation5 + $0x700] sm:$0xff]
    %v3431 = vld [vmem:[#allocation5 + $0x708] sm:$0xff]
    %v3432 = vld [vmem:[#allocation5 + $0x710] sm:$0xff]
    %v3433 = vld [vmem:[#allocation5 + $0x718] sm:$0xff]
    %v3434 = vld [vmem:[#allocation5 + $0x720] sm:$0xff]
    %v3435 = vld [vmem:[#allocation5 + $0x728] sm:$0xff]
    %v3436 = vld [vmem:[#allocation5 + $0x730] sm:$0xff]
    %v3437 = vld [vmem:[#allocation5 + $0x738] sm:$0xff]
    %v3438 = vld [vmem:[#allocation5 + $0x740] sm:$0xff]
    %v3439 = vld [vmem:[#allocation5 + $0x748] sm:$0xff]
    %v3440 = vld [vmem:[#allocation5 + $0x750] sm:$0xff]
    %v3441 = vld [vmem:[#allocation5 + $0x758] sm:$0xff]
    %v3442 = vld [vmem:[#allocation5 + $0x760] sm:$0xff]
    %v3443 = vld [vmem:[#allocation5 + $0x768] sm:$0xff]
    %v3444 = vld [vmem:[#allocation5 + $0x770] sm:$0xff]
    %v3445 = vld [vmem:[#allocation5 + $0x778] sm:$0xff]
    %v3446 = vld [vmem:[#allocation5 + $0x780] sm:$0xff]
    %v3447 = vld [vmem:[#allocation5 + $0x788] sm:$0xff]
    %v3448 = vld [vmem:[#allocation5 + $0x790] sm:$0xff]
    %v3449 = vld [vmem:[#allocation5 + $0x798] sm:$0xff]
    %v3450 = vld [vmem:[#allocation5 + $0x7a0] sm:$0xff]
    %v3451 = vld [vmem:[#allocation5 + $0x7a8] sm:$0xff]
    %v3452 = vld [vmem:[#allocation5 + $0x7b0] sm:$0xff]
    %v3453 = vld [vmem:[#allocation5 + $0x7b8] sm:$0xff]
    %v3454 = vld [vmem:[#allocation5 + $0x7c0] sm:$0xff]
    %v3455 = vld [vmem:[#allocation5 + $0x7c8] sm:$0xff]
    %v3456 = vld [vmem:[#allocation5 + $0x7d0] sm:$0xff]
    %v3457 = vld [vmem:[#allocation5 + $0x7d8] sm:$0xff]
    %v3458 = vld [vmem:[#allocation5 + $0x7e0] sm:$0xff]
    %v3459 = vld [vmem:[#allocation5 + $0x7e8] sm:$0xff]
    %v3460 = vld [vmem:[#allocation5 + $0x7f0] sm:$0xff]
    %v3461 = vld [vmem:[#allocation5 + $0x7f8] sm:$0xff]
    %v3462 = vld [vmem:[#allocation7] sm:$0xf]
    %v3464 = vperm.slane %v3462, 0
    %v3465 = vperm.slane %v3462, 1
    %v3466 = vperm.slane %v3462, 2
    %v3467 = vperm.slane %v3462, 3
    %v3728 = vunpack.c.l.b16 %v3206
    %v3729 = vunpack.c.h.b16 %v3206
    %v3730 = vunpack.c.l.b16 %v3207
    %v3731 = vunpack.c.h.b16 %v3207
    %v3732 = vunpack.c.l.b16 %v3208
    %v3733 = vunpack.c.h.b16 %v3208
    %v3734 = vunpack.c.l.b16 %v3209
    %v3735 = vunpack.c.h.b16 %v3209
    %v3736 = vunpack.c.l.b16 %v3210
    %v3737 = vunpack.c.h.b16 %v3210
    %v3738 = vunpack.c.l.b16 %v3211
    %v3739 = vunpack.c.h.b16 %v3211
    %v3740 = vunpack.c.l.b16 %v3212
    %v3741 = vunpack.c.h.b16 %v3212
    %v3742 = vunpack.c.l.b16 %v3213
    %v3743 = vunpack.c.h.b16 %v3213
    %v3744 = vunpack.c.l.b16 %v3214
    %v3745 = vunpack.c.h.b16 %v3214
    %v3746 = vunpack.c.l.b16 %v3215
    %v3747 = vunpack.c.h.b16 %v3215
    %v3748 = vunpack.c.l.b16 %v3216
    %v3749 = vunpack.c.h.b16 %v3216
    %v3750 = vunpack.c.l.b16 %v3217
    %v3751 = vunpack.c.h.b16 %v3217
    %v3752 = vunpack.c.l.b16 %v3218
    %v3753 = vunpack.c.h.b16 %v3218
    %v3754 = vunpack.c.l.b16 %v3219
    %v3755 = vunpack.c.h.b16 %v3219
    %v3756 = vunpack.c.l.b16 %v3220
    %v3757 = vunpack.c.h.b16 %v3220
    %v3758 = vunpack.c.l.b16 %v3221
    %v3759 = vunpack.c.h.b16 %v3221
    %v3760 = vunpack.c.l.b16 %v3222
    %v3761 = vunpack.c.h.b16 %v3222
    %v3762 = vunpack.c.l.b16 %v3223
    %v3763 = vunpack.c.h.b16 %v3223
    %v3764 = vunpack.c.l.b16 %v3224
    %v3765 = vunpack.c.h.b16 %v3224
    %v3766 = vunpack.c.l.b16 %v3225
    %v3767 = vunpack.c.h.b16 %v3225
    %v3768 = vunpack.c.l.b16 %v3226
    %v3769 = vunpack.c.h.b16 %v3226
    %v3770 = vunpack.c.l.b16 %v3227
    %v3771 = vunpack.c.h.b16 %v3227
    %v3772 = vunpack.c.l.b16 %v3228
    %v3773 = vunpack.c.h.b16 %v3228
    %v3774 = vunpack.c.l.b16 %v3229
    %v3775 = vunpack.c.h.b16 %v3229
    %v3776 = vunpack.c.l.b16 %v3230
    %v3777 = vunpack.c.h.b16 %v3230
    %v3778 = vunpack.c.l.b16 %v3231
    %v3779 = vunpack.c.h.b16 %v3231
    %v3780 = vunpack.c.l.b16 %v3232
    %v3781 = vunpack.c.h.b16 %v3232
    %v3782 = vunpack.c.l.b16 %v3233
    %v3783 = vunpack.c.h.b16 %v3233
    %v3784 = vunpack.c.l.b16 %v3234
    %v3785 = vunpack.c.h.b16 %v3234
    %v3786 = vunpack.c.l.b16 %v3235
    %v3787 = vunpack.c.h.b16 %v3235
    %v3788 = vunpack.c.l.b16 %v3236
    %v3789 = vunpack.c.h.b16 %v3236
    %v3790 = vunpack.c.l.b16 %v3237
    %v3791 = vunpack.c.h.b16 %v3237
    %v3792 = vunpack.c.l.b16 %v3238
    %v3793 = vunpack.c.h.b16 %v3238
    %v3794 = vunpack.c.l.b16 %v3239
    %v3795 = vunpack.c.h.b16 %v3239
    %v3796 = vunpack.c.l.b16 %v3240
    %v3797 = vunpack.c.h.b16 %v3240
    %v3798 = vunpack.c.l.b16 %v3241
    %v3799 = vunpack.c.h.b16 %v3241
    %v3800 = vunpack.c.l.b16 %v3242
    %v3801 = vunpack.c.h.b16 %v3242
    %v3802 = vunpack.c.l.b16 %v3243
    %v3803 = vunpack.c.h.b16 %v3243
    %v3804 = vunpack.c.l.b16 %v3244
    %v3805 = vunpack.c.h.b16 %v3244
    %v3806 = vunpack.c.l.b16 %v3245
    %v3807 = vunpack.c.h.b16 %v3245
    %v3808 = vunpack.c.l.b16 %v3246
    %v3809 = vunpack.c.h.b16 %v3246
    %v3810 = vunpack.c.l.b16 %v3247
    %v3811 = vunpack.c.h.b16 %v3247
    %v3812 = vunpack.c.l.b16 %v3248
    %v3813 = vunpack.c.h.b16 %v3248
    %v3814 = vunpack.c.l.b16 %v3249
    %v3815 = vunpack.c.h.b16 %v3249
    %v3816 = vunpack.c.l.b16 %v3250
    %v3817 = vunpack.c.h.b16 %v3250
    %v3818 = vunpack.c.l.b16 %v3251
    %v3819 = vunpack.c.h.b16 %v3251
    %v3820 = vunpack.c.l.b16 %v3252
    %v3821 = vunpack.c.h.b16 %v3252
    %v3822 = vunpack.c.l.b16 %v3253
    %v3823 = vunpack.c.h.b16 %v3253
    %v3824 = vunpack.c.l.b16 %v3254
    %v3825 = vunpack.c.h.b16 %v3254
    %v3826 = vunpack.c.l.b16 %v3255
    %v3827 = vunpack.c.h.b16 %v3255
    %v3828 = vunpack.c.l.b16 %v3256
    %v3829 = vunpack.c.h.b16 %v3256
    %v3830 = vunpack.c.l.b16 %v3257
    %v3831 = vunpack.c.h.b16 %v3257
    %v3832 = vunpack.c.l.b16 %v3258
    %v3833 = vunpack.c.h.b16 %v3258
    %v3834 = vunpack.c.l.b16 %v3259
    %v3835 = vunpack.c.h.b16 %v3259
    %v3836 = vunpack.c.l.b16 %v3260
    %v3837 = vunpack.c.h.b16 %v3260
    %v3838 = vunpack.c.l.b16 %v3261
    %v3839 = vunpack.c.h.b16 %v3261
    %v3840 = vunpack.c.l.b16 %v3262
    %v3841 = vunpack.c.h.b16 %v3262
    %v3842 = vunpack.c.l.b16 %v3263
    %v3843 = vunpack.c.h.b16 %v3263
    %v3844 = vunpack.c.l.b16 %v3264
    %v3845 = vunpack.c.h.b16 %v3264
    %v3846 = vunpack.c.l.b16 %v3265
    %v3847 = vunpack.c.h.b16 %v3265
    %v3848 = vunpack.c.l.b16 %v3266
    %v3849 = vunpack.c.h.b16 %v3266
    %v3850 = vunpack.c.l.b16 %v3267
    %v3851 = vunpack.c.h.b16 %v3267
    %v3852 = vunpack.c.l.b16 %v3268
    %v3853 = vunpack.c.h.b16 %v3268
    %v3854 = vunpack.c.l.b16 %v3269
    %v3855 = vunpack.c.h.b16 %v3269
    %v3856 = vunpack.c.l.b16 %v3270
    %v3857 = vunpack.c.h.b16 %v3270
    %v3858 = vunpack.c.l.b16 %v3271
    %v3859 = vunpack.c.h.b16 %v3271
    %v3860 = vunpack.c.l.b16 %v3272
    %v3861 = vunpack.c.h.b16 %v3272
    %v3862 = vunpack.c.l.b16 %v3273
    %v3863 = vunpack.c.h.b16 %v3273
    %v3864 = vunpack.c.l.b16 %v3274
    %v3865 = vunpack.c.h.b16 %v3274
    %v3866 = vunpack.c.l.b16 %v3275
    %v3867 = vunpack.c.h.b16 %v3275
    %v3868 = vunpack.c.l.b16 %v3276
    %v3869 = vunpack.c.h.b16 %v3276
    %v3870 = vunpack.c.l.b16 %v3277
    %v3871 = vunpack.c.h.b16 %v3277
    %v3872 = vunpack.c.l.b16 %v3278
    %v3873 = vunpack.c.h.b16 %v3278
    %v3874 = vunpack.c.l.b16 %v3279
    %v3875 = vunpack.c.h.b16 %v3279
    %v3876 = vunpack.c.l.b16 %v3280
    %v3877 = vunpack.c.h.b16 %v3280
    %v3878 = vunpack.c.l.b16 %v3281
    %v3879 = vunpack.c.h.b16 %v3281
    %v3880 = vunpack.c.l.b16 %v3282
    %v3881 = vunpack.c.h.b16 %v3282
    %v3882 = vunpack.c.l.b16 %v3283
    %v3883 = vunpack.c.h.b16 %v3283
    %v3884 = vunpack.c.l.b16 %v3284
    %v3885 = vunpack.c.h.b16 %v3284
    %v3886 = vunpack.c.l.b16 %v3285
    %v3887 = vunpack.c.h.b16 %v3285
    %v3888 = vunpack.c.l.b16 %v3286
    %v3889 = vunpack.c.h.b16 %v3286
    %v3890 = vunpack.c.l.b16 %v3287
    %v3891 = vunpack.c.h.b16 %v3287
    %v3892 = vunpack.c.l.b16 %v3288
    %v3893 = vunpack.c.h.b16 %v3288
    %v3894 = vunpack.c.l.b16 %v3289
    %v3895 = vunpack.c.h.b16 %v3289
    %v3896 = vunpack.c.l.b16 %v3290
    %v3897 = vunpack.c.h.b16 %v3290
    %v3898 = vunpack.c.l.b16 %v3291
    %v3899 = vunpack.c.h.b16 %v3291
    %v3900 = vunpack.c.l.b16 %v3292
    %v3901 = vunpack.c.h.b16 %v3292
    %v3902 = vunpack.c.l.b16 %v3293
    %v3903 = vunpack.c.h.b16 %v3293
    %v3904 = vunpack.c.l.b16 %v3294
    %v3905 = vunpack.c.h.b16 %v3294
    %v3906 = vunpack.c.l.b16 %v3295
    %v3907 = vunpack.c.h.b16 %v3295
    %v3908 = vunpack.c.l.b16 %v3296
    %v3909 = vunpack.c.h.b16 %v3296
    %v3910 = vunpack.c.l.b16 %v3297
    %v3911 = vunpack.c.h.b16 %v3297
    %v3912 = vunpack.c.l.b16 %v3298
    %v3913 = vunpack.c.h.b16 %v3298
    %v3914 = vunpack.c.l.b16 %v3299
    %v3915 = vunpack.c.h.b16 %v3299
    %v3916 = vunpack.c.l.b16 %v3300
    %v3917 = vunpack.c.h.b16 %v3300
    %v3918 = vunpack.c.l.b16 %v3301
    %v3919 = vunpack.c.h.b16 %v3301
    %v3920 = vunpack.c.l.b16 %v3302
    %v3921 = vunpack.c.h.b16 %v3302
    %v3922 = vunpack.c.l.b16 %v3303
    %v3923 = vunpack.c.h.b16 %v3303
    %v3924 = vunpack.c.l.b16 %v3304
    %v3925 = vunpack.c.h.b16 %v3304
    %v3926 = vunpack.c.l.b16 %v3305
    %v3927 = vunpack.c.h.b16 %v3305
    %v3928 = vunpack.c.l.b16 %v3306
    %v3929 = vunpack.c.h.b16 %v3306
    %v3930 = vunpack.c.l.b16 %v3307
    %v3931 = vunpack.c.h.b16 %v3307
    %v3932 = vunpack.c.l.b16 %v3308
    %v3933 = vunpack.c.h.b16 %v3308
    %v3934 = vunpack.c.l.b16 %v3309
    %v3935 = vunpack.c.h.b16 %v3309
    %v3936 = vunpack.c.l.b16 %v3310
    %v3937 = vunpack.c.h.b16 %v3310
    %v3938 = vunpack.c.l.b16 %v3311
    %v3939 = vunpack.c.h.b16 %v3311
    %v3940 = vunpack.c.l.b16 %v3312
    %v3941 = vunpack.c.h.b16 %v3312
    %v3942 = vunpack.c.l.b16 %v3313
    %v3943 = vunpack.c.h.b16 %v3313
    %v3944 = vunpack.c.l.b16 %v3314
    %v3945 = vunpack.c.h.b16 %v3314
    %v3946 = vunpack.c.l.b16 %v3315
    %v3947 = vunpack.c.h.b16 %v3315
    %v3948 = vunpack.c.l.b16 %v3316
    %v3949 = vunpack.c.h.b16 %v3316
    %v3950 = vunpack.c.l.b16 %v3317
    %v3951 = vunpack.c.h.b16 %v3317
    %v3952 = vunpack.c.l.b16 %v3318
    %v3953 = vunpack.c.h.b16 %v3318
    %v3954 = vunpack.c.l.b16 %v3319
    %v3955 = vunpack.c.h.b16 %v3319
    %v3956 = vunpack.c.l.b16 %v3320
    %v3957 = vunpack.c.h.b16 %v3320
    %v3958 = vunpack.c.l.b16 %v3321
    %v3959 = vunpack.c.h.b16 %v3321
    %v3960 = vunpack.c.l.b16 %v3322
    %v3961 = vunpack.c.h.b16 %v3322
    %v3962 = vunpack.c.l.b16 %v3323
    %v3963 = vunpack.c.h.b16 %v3323
    %v3964 = vunpack.c.l.b16 %v3324
    %v3965 = vunpack.c.h.b16 %v3324
    %v3966 = vunpack.c.l.b16 %v3325
    %v3967 = vunpack.c.h.b16 %v3325
    %v3968 = vunpack.c.l.b16 %v3326
    %v3969 = vunpack.c.h.b16 %v3326
    %v3970 = vunpack.c.l.b16 %v3327
    %v3971 = vunpack.c.h.b16 %v3327
    %v3972 = vunpack.c.l.b16 %v3328
    %v3973 = vunpack.c.h.b16 %v3328
    %v3974 = vunpack.c.l.b16 %v3329
    %v3975 = vunpack.c.h.b16 %v3329
    %v3976 = vunpack.c.l.b16 %v3330
    %v3977 = vunpack.c.h.b16 %v3330
    %v3978 = vunpack.c.l.b16 %v3331
    %v3979 = vunpack.c.h.b16 %v3331
    %v3980 = vunpack.c.l.b16 %v3332
    %v3981 = vunpack.c.h.b16 %v3332
    %v3982 = vunpack.c.l.b16 %v3333
    %v3983 = vunpack.c.h.b16 %v3333
    %v3984 = vunpack.c.l.b16 %v3334
    %v3985 = vunpack.c.h.b16 %v3334
    %v3986 = vunpack.c.l.b16 %v3335
    %v3987 = vunpack.c.h.b16 %v3335
    %v3988 = vunpack.c.l.b16 %v3336
    %v3989 = vunpack.c.h.b16 %v3336
    %v3990 = vunpack.c.l.b16 %v3337
    %v3991 = vunpack.c.h.b16 %v3337
    %v3992 = vunpack.c.l.b16 %v3338
    %v3993 = vunpack.c.h.b16 %v3338
    %v3994 = vunpack.c.l.b16 %v3339
    %v3995 = vunpack.c.h.b16 %v3339
    %v3996 = vunpack.c.l.b16 %v3340
    %v3997 = vunpack.c.h.b16 %v3340
    %v3998 = vunpack.c.l.b16 %v3341
    %v3999 = vunpack.c.h.b16 %v3341
    %v4000 = vunpack.c.l.b16 %v3342
    %v4001 = vunpack.c.h.b16 %v3342
    %v4002 = vunpack.c.l.b16 %v3343
    %v4003 = vunpack.c.h.b16 %v3343
    %v4004 = vunpack.c.l.b16 %v3344
    %v4005 = vunpack.c.h.b16 %v3344
    %v4006 = vunpack.c.l.b16 %v3345
    %v4007 = vunpack.c.h.b16 %v3345
    %v4008 = vunpack.c.l.b16 %v3346
    %v4009 = vunpack.c.h.b16 %v3346
    %v4010 = vunpack.c.l.b16 %v3347
    %v4011 = vunpack.c.h.b16 %v3347
    %v4012 = vunpack.c.l.b16 %v3348
    %v4013 = vunpack.c.h.b16 %v3348
    %v4014 = vunpack.c.l.b16 %v3349
    %v4015 = vunpack.c.h.b16 %v3349
    %v4016 = vunpack.c.l.b16 %v3350
    %v4017 = vunpack.c.h.b16 %v3350
    %v4018 = vunpack.c.l.b16 %v3351
    %v4019 = vunpack.c.h.b16 %v3351
    %v4020 = vunpack.c.l.b16 %v3352
    %v4021 = vunpack.c.h.b16 %v3352
    %v4022 = vunpack.c.l.b16 %v3353
    %v4023 = vunpack.c.h.b16 %v3353
    %v4024 = vunpack.c.l.b16 %v3354
    %v4025 = vunpack.c.h.b16 %v3354
    %v4026 = vunpack.c.l.b16 %v3355
    %v4027 = vunpack.c.h.b16 %v3355
    %v4028 = vunpack.c.l.b16 %v3356
    %v4029 = vunpack.c.h.b16 %v3356
    %v4030 = vunpack.c.l.b16 %v3357
    %v4031 = vunpack.c.h.b16 %v3357
    %v4032 = vunpack.c.l.b16 %v3358
    %v4033 = vunpack.c.h.b16 %v3358
    %v4034 = vunpack.c.l.b16 %v3359
    %v4035 = vunpack.c.h.b16 %v3359
    %v4036 = vunpack.c.l.b16 %v3360
    %v4037 = vunpack.c.h.b16 %v3360
    %v4038 = vunpack.c.l.b16 %v3361
    %v4039 = vunpack.c.h.b16 %v3361
    %v4040 = vunpack.c.l.b16 %v3362
    %v4041 = vunpack.c.h.b16 %v3362
    %v4042 = vunpack.c.l.b16 %v3363
    %v4043 = vunpack.c.h.b16 %v3363
    %v4044 = vunpack.c.l.b16 %v3364
    %v4045 = vunpack.c.h.b16 %v3364
    %v4046 = vunpack.c.l.b16 %v3365
    %v4047 = vunpack.c.h.b16 %v3365
    %v4048 = vunpack.c.l.b16 %v3366
    %v4049 = vunpack.c.h.b16 %v3366
    %v4050 = vunpack.c.l.b16 %v3367
    %v4051 = vunpack.c.h.b16 %v3367
    %v4052 = vunpack.c.l.b16 %v3368
    %v4053 = vunpack.c.h.b16 %v3368
    %v4054 = vunpack.c.l.b16 %v3369
    %v4055 = vunpack.c.h.b16 %v3369
    %v4056 = vunpack.c.l.b16 %v3370
    %v4057 = vunpack.c.h.b16 %v3370
    %v4058 = vunpack.c.l.b16 %v3371
    %v4059 = vunpack.c.h.b16 %v3371
    %v4060 = vunpack.c.l.b16 %v3372
    %v4061 = vunpack.c.h.b16 %v3372
    %v4062 = vunpack.c.l.b16 %v3373
    %v4063 = vunpack.c.h.b16 %v3373
    %v4064 = vunpack.c.l.b16 %v3374
    %v4065 = vunpack.c.h.b16 %v3374
    %v4066 = vunpack.c.l.b16 %v3375
    %v4067 = vunpack.c.h.b16 %v3375
    %v4068 = vunpack.c.l.b16 %v3376
    %v4069 = vunpack.c.h.b16 %v3376
    %v4070 = vunpack.c.l.b16 %v3377
    %v4071 = vunpack.c.h.b16 %v3377
    %v4072 = vunpack.c.l.b16 %v3378
    %v4073 = vunpack.c.h.b16 %v3378
    %v4074 = vunpack.c.l.b16 %v3379
    %v4075 = vunpack.c.h.b16 %v3379
    %v4076 = vunpack.c.l.b16 %v3380
    %v4077 = vunpack.c.h.b16 %v3380
    %v4078 = vunpack.c.l.b16 %v3381
    %v4079 = vunpack.c.h.b16 %v3381
    %v4080 = vunpack.c.l.b16 %v3382
    %v4081 = vunpack.c.h.b16 %v3382
    %v4082 = vunpack.c.l.b16 %v3383
    %v4083 = vunpack.c.h.b16 %v3383
    %v4084 = vunpack.c.l.b16 %v3384
    %v4085 = vunpack.c.h.b16 %v3384
    %v4086 = vunpack.c.l.b16 %v3385
    %v4087 = vunpack.c.h.b16 %v3385
    %v4088 = vunpack.c.l.b16 %v3386
    %v4089 = vunpack.c.h.b16 %v3386
    %v4090 = vunpack.c.l.b16 %v3387
    %v4091 = vunpack.c.h.b16 %v3387
    %v4092 = vunpack.c.l.b16 %v3388
    %v4093 = vunpack.c.h.b16 %v3388
    %v4094 = vunpack.c.l.b16 %v3389
    %v4095 = vunpack.c.h.b16 %v3389
    %v4096 = vunpack.c.l.b16 %v3390
    %v4097 = vunpack.c.h.b16 %v3390
    %v4098 = vunpack.c.l.b16 %v3391
    %v4099 = vunpack.c.h.b16 %v3391
    %v4100 = vunpack.c.l.b16 %v3392
    %v4101 = vunpack.c.h.b16 %v3392
    %v4102 = vunpack.c.l.b16 %v3393
    %v4103 = vunpack.c.h.b16 %v3393
    %v4104 = vunpack.c.l.b16 %v3394
    %v4105 = vunpack.c.h.b16 %v3394
    %v4106 = vunpack.c.l.b16 %v3395
    %v4107 = vunpack.c.h.b16 %v3395
    %v4108 = vunpack.c.l.b16 %v3396
    %v4109 = vunpack.c.h.b16 %v3396
    %v4110 = vunpack.c.l.b16 %v3397
    %v4111 = vunpack.c.h.b16 %v3397
    %v4112 = vunpack.c.l.b16 %v3398
    %v4113 = vunpack.c.h.b16 %v3398
    %v4114 = vunpack.c.l.b16 %v3399
    %v4115 = vunpack.c.h.b16 %v3399
    %v4116 = vunpack.c.l.b16 %v3400
    %v4117 = vunpack.c.h.b16 %v3400
    %v4118 = vunpack.c.l.b16 %v3401
    %v4119 = vunpack.c.h.b16 %v3401
    %v4120 = vunpack.c.l.b16 %v3402
    %v4121 = vunpack.c.h.b16 %v3402
    %v4122 = vunpack.c.l.b16 %v3403
    %v4123 = vunpack.c.h.b16 %v3403
    %v4124 = vunpack.c.l.b16 %v3404
    %v4125 = vunpack.c.h.b16 %v3404
    %v4126 = vunpack.c.l.b16 %v3405
    %v4127 = vunpack.c.h.b16 %v3405
    %v4128 = vunpack.c.l.b16 %v3406
    %v4129 = vunpack.c.h.b16 %v3406
    %v4130 = vunpack.c.l.b16 %v3407
    %v4131 = vunpack.c.h.b16 %v3407
    %v4132 = vunpack.c.l.b16 %v3408
    %v4133 = vunpack.c.h.b16 %v3408
    %v4134 = vunpack.c.l.b16 %v3409
    %v4135 = vunpack.c.h.b16 %v3409
    %v4136 = vunpack.c.l.b16 %v3410
    %v4137 = vunpack.c.h.b16 %v3410
    %v4138 = vunpack.c.l.b16 %v3411
    %v4139 = vunpack.c.h.b16 %v3411
    %v4140 = vunpack.c.l.b16 %v3412
    %v4141 = vunpack.c.h.b16 %v3412
    %v4142 = vunpack.c.l.b16 %v3413
    %v4143 = vunpack.c.h.b16 %v3413
    %v4144 = vunpack.c.l.b16 %v3414
    %v4145 = vunpack.c.h.b16 %v3414
    %v4146 = vunpack.c.l.b16 %v3415
    %v4147 = vunpack.c.h.b16 %v3415
    %v4148 = vunpack.c.l.b16 %v3416
    %v4149 = vunpack.c.h.b16 %v3416
    %v4150 = vunpack.c.l.b16 %v3417
    %v4151 = vunpack.c.h.b16 %v3417
    %v4152 = vunpack.c.l.b16 %v3418
    %v4153 = vunpack.c.h.b16 %v3418
    %v4154 = vunpack.c.l.b16 %v3419
    %v4155 = vunpack.c.h.b16 %v3419
    %v4156 = vunpack.c.l.b16 %v3420
    %v4157 = vunpack.c.h.b16 %v3420
    %v4158 = vunpack.c.l.b16 %v3421
    %v4159 = vunpack.c.h.b16 %v3421
    %v4160 = vunpack.c.l.b16 %v3422
    %v4161 = vunpack.c.h.b16 %v3422
    %v4162 = vunpack.c.l.b16 %v3423
    %v4163 = vunpack.c.h.b16 %v3423
    %v4164 = vunpack.c.l.b16 %v3424
    %v4165 = vunpack.c.h.b16 %v3424
    %v4166 = vunpack.c.l.b16 %v3425
    %v4167 = vunpack.c.h.b16 %v3425
    %v4168 = vunpack.c.l.b16 %v3426
    %v4169 = vunpack.c.h.b16 %v3426
    %v4170 = vunpack.c.l.b16 %v3427
    %v4171 = vunpack.c.h.b16 %v3427
    %v4172 = vunpack.c.l.b16 %v3428
    %v4173 = vunpack.c.h.b16 %v3428
    %v4174 = vunpack.c.l.b16 %v3429
    %v4175 = vunpack.c.h.b16 %v3429
    %v4176 = vunpack.c.l.b16 %v3430
    %v4177 = vunpack.c.h.b16 %v3430
    %v4178 = vunpack.c.l.b16 %v3431
    %v4179 = vunpack.c.h.b16 %v3431
    %v4180 = vunpack.c.l.b16 %v3432
    %v4181 = vunpack.c.h.b16 %v3432
    %v4182 = vunpack.c.l.b16 %v3433
    %v4183 = vunpack.c.h.b16 %v3433
    %v4184 = vunpack.c.l.b16 %v3434
    %v4185 = vunpack.c.h.b16 %v3434
    %v4186 = vunpack.c.l.b16 %v3435
    %v4187 = vunpack.c.h.b16 %v3435
    %v4188 = vunpack.c.l.b16 %v3436
    %v4189 = vunpack.c.h.b16 %v3436
    %v4190 = vunpack.c.l.b16 %v3437
    %v4191 = vunpack.c.h.b16 %v3437
    %v4192 = vunpack.c.l.b16 %v3438
    %v4193 = vunpack.c.h.b16 %v3438
    %v4194 = vunpack.c.l.b16 %v3439
    %v4195 = vunpack.c.h.b16 %v3439
    %v4196 = vunpack.c.l.b16 %v3440
    %v4197 = vunpack.c.h.b16 %v3440
    %v4198 = vunpack.c.l.b16 %v3441
    %v4199 = vunpack.c.h.b16 %v3441
    %v4200 = vunpack.c.l.b16 %v3442
    %v4201 = vunpack.c.h.b16 %v3442
    %v4202 = vunpack.c.l.b16 %v3443
    %v4203 = vunpack.c.h.b16 %v3443
    %v4204 = vunpack.c.l.b16 %v3444
    %v4205 = vunpack.c.h.b16 %v3444
    %v4206 = vunpack.c.l.b16 %v3445
    %v4207 = vunpack.c.h.b16 %v3445
    %v4208 = vunpack.c.l.b16 %v3446
    %v4209 = vunpack.c.h.b16 %v3446
    %v4210 = vunpack.c.l.b16 %v3447
    %v4211 = vunpack.c.h.b16 %v3447
    %v4212 = vunpack.c.l.b16 %v3448
    %v4213 = vunpack.c.h.b16 %v3448
    %v4214 = vunpack.c.l.b16 %v3449
    %v4215 = vunpack.c.h.b16 %v3449
    %v4216 = vunpack.c.l.b16 %v3450
    %v4217 = vunpack.c.h.b16 %v3450
    %v4218 = vunpack.c.l.b16 %v3451
    %v4219 = vunpack.c.h.b16 %v3451
    %v4220 = vunpack.c.l.b16 %v3452
    %v4221 = vunpack.c.h.b16 %v3452
    %v4222 = vunpack.c.l.b16 %v3453
    %v4223 = vunpack.c.h.b16 %v3453
    %v4224 = vunpack.c.l.b16 %v3454
    %v4225 = vunpack.c.h.b16 %v3454
    %v4226 = vunpack.c.l.b16 %v3455
    %v4227 = vunpack.c.h.b16 %v3455
    %v4228 = vunpack.c.l.b16 %v3456
    %v4229 = vunpack.c.h.b16 %v3456
    %v4230 = vunpack.c.l.b16 %v3457
    %v4231 = vunpack.c.h.b16 %v3457
    %v4232 = vunpack.c.l.b16 %v3458
    %v4233 = vunpack.c.h.b16 %v3458
    %v4234 = vunpack.c.l.b16 %v3459
    %v4235 = vunpack.c.h.b16 %v3459
    %v4236 = vunpack.c.l.b16 %v3460
    %v4237 = vunpack.c.h.b16 %v3460
    %v4238 = vunpack.c.l.b16 %v3461
    %v4239 = vunpack.c.h.b16 %v3461
    %v4240 = vpack.c.b16 %v3732, %v3728
    %v4241 = vpack.c.b16 %v3733, %v3729
    %v4242 = vpack.c.b16 %v3734, %v3730
    %v4243 = vpack.c.b16 %v3735, %v3731
    %v4244 = vpack.c.b16 %v3740, %v3736
    %v4245 = vpack.c.b16 %v3741, %v3737
    %v4246 = vpack.c.b16 %v3742, %v3738
    %v4247 = vpack.c.b16 %v3743, %v3739
    %v4248 = vpack.c.b16 %v3748, %v3744
    %v4249 = vpack.c.b16 %v3749, %v3745
    %v4250 = vpack.c.b16 %v3750, %v3746
    %v4251 = vpack.c.b16 %v3751, %v3747
    %v4252 = vpack.c.b16 %v3756, %v3752
    %v4253 = vpack.c.b16 %v3757, %v3753
    %v4254 = vpack.c.b16 %v3758, %v3754
    %v4255 = vpack.c.b16 %v3759, %v3755
    %v4256 = vpack.c.b16 %v3764, %v3760
    %v4257 = vpack.c.b16 %v3765, %v3761
    %v4258 = vpack.c.b16 %v3766, %v3762
    %v4259 = vpack.c.b16 %v3767, %v3763
    %v4260 = vpack.c.b16 %v3772, %v3768
    %v4261 = vpack.c.b16 %v3773, %v3769
    %v4262 = vpack.c.b16 %v3774, %v3770
    %v4263 = vpack.c.b16 %v3775, %v3771
    %v4264 = vpack.c.b16 %v3780, %v3776
    %v4265 = vpack.c.b16 %v3781, %v3777
    %v4266 = vpack.c.b16 %v3782, %v3778
    %v4267 = vpack.c.b16 %v3783, %v3779
    %v4268 = vpack.c.b16 %v3788, %v3784
    %v4269 = vpack.c.b16 %v3789, %v3785
    %v4270 = vpack.c.b16 %v3790, %v3786
    %v4271 = vpack.c.b16 %v3791, %v3787
    %v4272 = vpack.c.b16 %v3796, %v3792
    %v4273 = vpack.c.b16 %v3797, %v3793
    %v4274 = vpack.c.b16 %v3798, %v3794
    %v4275 = vpack.c.b16 %v3799, %v3795
    %v4276 = vpack.c.b16 %v3804, %v3800
    %v4277 = vpack.c.b16 %v3805, %v3801
    %v4278 = vpack.c.b16 %v3806, %v3802
    %v4279 = vpack.c.b16 %v3807, %v3803
    %v4280 = vpack.c.b16 %v3812, %v3808
    %v4281 = vpack.c.b16 %v3813, %v3809
    %v4282 = vpack.c.b16 %v3814, %v3810
    %v4283 = vpack.c.b16 %v3815, %v3811
    %v4284 = vpack.c.b16 %v3820, %v3816
    %v4285 = vpack.c.b16 %v3821, %v3817
    %v4286 = vpack.c.b16 %v3822, %v3818
    %v4287 = vpack.c.b16 %v3823, %v3819
    %v4288 = vpack.c.b16 %v3828, %v3824
    %v4289 = vpack.c.b16 %v3829, %v3825
    %v4290 = vpack.c.b16 %v3830, %v3826
    %v4291 = vpack.c.b16 %v3831, %v3827
    %v4292 = vpack.c.b16 %v3836, %v3832
    %v4293 = vpack.c.b16 %v3837, %v3833
    %v4294 = vpack.c.b16 %v3838, %v3834
    %v4295 = vpack.c.b16 %v3839, %v3835
    %v4296 = vpack.c.b16 %v3844, %v3840
    %v4297 = vpack.c.b16 %v3845, %v3841
    %v4298 = vpack.c.b16 %v3846, %v3842
    %v4299 = vpack.c.b16 %v3847, %v3843
    %v4300 = vpack.c.b16 %v3852, %v3848
    %v4301 = vpack.c.b16 %v3853, %v3849
    %v4302 = vpack.c.b16 %v3854, %v3850
    %v4303 = vpack.c.b16 %v3855, %v3851
    %v4304 = vpack.c.b16 %v3860, %v3856
    %v4305 = vpack.c.b16 %v3861, %v3857
    %v4306 = vpack.c.b16 %v3862, %v3858
    %v4307 = vpack.c.b16 %v3863, %v3859
    %v4308 = vpack.c.b16 %v3868, %v3864
    %v4309 = vpack.c.b16 %v3869, %v3865
    %v4310 = vpack.c.b16 %v3870, %v3866
    %v4311 = vpack.c.b16 %v3871, %v3867
    %v4312 = vpack.c.b16 %v3876, %v3872
    %v4313 = vpack.c.b16 %v3877, %v3873
    %v4314 = vpack.c.b16 %v3878, %v3874
    %v4315 = vpack.c.b16 %v3879, %v3875
    %v4316 = vpack.c.b16 %v3884, %v3880
    %v4317 = vpack.c.b16 %v3885, %v3881
    %v4318 = vpack.c.b16 %v3886, %v3882
    %v4319 = vpack.c.b16 %v3887, %v3883
    %v4320 = vpack.c.b16 %v3892, %v3888
    %v4321 = vpack.c.b16 %v3893, %v3889
    %v4322 = vpack.c.b16 %v3894, %v3890
    %v4323 = vpack.c.b16 %v3895, %v3891
    %v4324 = vpack.c.b16 %v3900, %v3896
    %v4325 = vpack.c.b16 %v3901, %v3897
    %v4326 = vpack.c.b16 %v3902, %v3898
    %v4327 = vpack.c.b16 %v3903, %v3899
    %v4328 = vpack.c.b16 %v3908, %v3904
    %v4329 = vpack.c.b16 %v3909, %v3905
    %v4330 = vpack.c.b16 %v3910, %v3906
    %v4331 = vpack.c.b16 %v3911, %v3907
    %v4332 = vpack.c.b16 %v3916, %v3912
    %v4333 = vpack.c.b16 %v3917, %v3913
    %v4334 = vpack.c.b16 %v3918, %v3914
    %v4335 = vpack.c.b16 %v3919, %v3915
    %v4336 = vpack.c.b16 %v3924, %v3920
    %v4337 = vpack.c.b16 %v3925, %v3921
    %v4338 = vpack.c.b16 %v3926, %v3922
    %v4339 = vpack.c.b16 %v3927, %v3923
    %v4340 = vpack.c.b16 %v3932, %v3928
    %v4341 = vpack.c.b16 %v3933, %v3929
    %v4342 = vpack.c.b16 %v3934, %v3930
    %v4343 = vpack.c.b16 %v3935, %v3931
    %v4344 = vpack.c.b16 %v3940, %v3936
    %v4345 = vpack.c.b16 %v3941, %v3937
    %v4346 = vpack.c.b16 %v3942, %v3938
    %v4347 = vpack.c.b16 %v3943, %v3939
    %v4348 = vpack.c.b16 %v3948, %v3944
    %v4349 = vpack.c.b16 %v3949, %v3945
    %v4350 = vpack.c.b16 %v3950, %v3946
    %v4351 = vpack.c.b16 %v3951, %v3947
    %v4352 = vpack.c.b16 %v3956, %v3952
    %v4353 = vpack.c.b16 %v3957, %v3953
    %v4354 = vpack.c.b16 %v3958, %v3954
    %v4355 = vpack.c.b16 %v3959, %v3955
    %v4356 = vpack.c.b16 %v3964, %v3960
    %v4357 = vpack.c.b16 %v3965, %v3961
    %v4358 = vpack.c.b16 %v3966, %v3962
    %v4359 = vpack.c.b16 %v3967, %v3963
    %v4360 = vpack.c.b16 %v3972, %v3968
    %v4361 = vpack.c.b16 %v3973, %v3969
    %v4362 = vpack.c.b16 %v3974, %v3970
    %v4363 = vpack.c.b16 %v3975, %v3971
    %v4364 = vpack.c.b16 %v3980, %v3976
    %v4365 = vpack.c.b16 %v3981, %v3977
    %v4366 = vpack.c.b16 %v3982, %v3978
    %v4367 = vpack.c.b16 %v3983, %v3979
    %v4368 = vpack.c.b16 %v3988, %v3984
    %v4369 = vpack.c.b16 %v3989, %v3985
    %v4370 = vpack.c.b16 %v3990, %v3986
    %v4371 = vpack.c.b16 %v3991, %v3987
    %v4372 = vpack.c.b16 %v3996, %v3992
    %v4373 = vpack.c.b16 %v3997, %v3993
    %v4374 = vpack.c.b16 %v3998, %v3994
    %v4375 = vpack.c.b16 %v3999, %v3995
    %v4376 = vpack.c.b16 %v4004, %v4000
    %v4377 = vpack.c.b16 %v4005, %v4001
    %v4378 = vpack.c.b16 %v4006, %v4002
    %v4379 = vpack.c.b16 %v4007, %v4003
    %v4380 = vpack.c.b16 %v4012, %v4008
    %v4381 = vpack.c.b16 %v4013, %v4009
    %v4382 = vpack.c.b16 %v4014, %v4010
    %v4383 = vpack.c.b16 %v4015, %v4011
    %v4384 = vpack.c.b16 %v4020, %v4016
    %v4385 = vpack.c.b16 %v4021, %v4017
    %v4386 = vpack.c.b16 %v4022, %v4018
    %v4387 = vpack.c.b16 %v4023, %v4019
    %v4388 = vpack.c.b16 %v4028, %v4024
    %v4389 = vpack.c.b16 %v4029, %v4025
    %v4390 = vpack.c.b16 %v4030, %v4026
    %v4391 = vpack.c.b16 %v4031, %v4027
    %v4392 = vpack.c.b16 %v4036, %v4032
    %v4393 = vpack.c.b16 %v4037, %v4033
    %v4394 = vpack.c.b16 %v4038, %v4034
    %v4395 = vpack.c.b16 %v4039, %v4035
    %v4396 = vpack.c.b16 %v4044, %v4040
    %v4397 = vpack.c.b16 %v4045, %v4041
    %v4398 = vpack.c.b16 %v4046, %v4042
    %v4399 = vpack.c.b16 %v4047, %v4043
    %v4400 = vpack.c.b16 %v4052, %v4048
    %v4401 = vpack.c.b16 %v4053, %v4049
    %v4402 = vpack.c.b16 %v4054, %v4050
    %v4403 = vpack.c.b16 %v4055, %v4051
    %v4404 = vpack.c.b16 %v4060, %v4056
    %v4405 = vpack.c.b16 %v4061, %v4057
    %v4406 = vpack.c.b16 %v4062, %v4058
    %v4407 = vpack.c.b16 %v4063, %v4059
    %v4408 = vpack.c.b16 %v4068, %v4064
    %v4409 = vpack.c.b16 %v4069, %v4065
    %v4410 = vpack.c.b16 %v4070, %v4066
    %v4411 = vpack.c.b16 %v4071, %v4067
    %v4412 = vpack.c.b16 %v4076, %v4072
    %v4413 = vpack.c.b16 %v4077, %v4073
    %v4414 = vpack.c.b16 %v4078, %v4074
    %v4415 = vpack.c.b16 %v4079, %v4075
    %v4416 = vpack.c.b16 %v4084, %v4080
    %v4417 = vpack.c.b16 %v4085, %v4081
    %v4418 = vpack.c.b16 %v4086, %v4082
    %v4419 = vpack.c.b16 %v4087, %v4083
    %v4420 = vpack.c.b16 %v4092, %v4088
    %v4421 = vpack.c.b16 %v4093, %v4089
    %v4422 = vpack.c.b16 %v4094, %v4090
    %v4423 = vpack.c.b16 %v4095, %v4091
    %v4424 = vpack.c.b16 %v4100, %v4096
    %v4425 = vpack.c.b16 %v4101, %v4097
    %v4426 = vpack.c.b16 %v4102, %v4098
    %v4427 = vpack.c.b16 %v4103, %v4099
    %v4428 = vpack.c.b16 %v4108, %v4104
    %v4429 = vpack.c.b16 %v4109, %v4105
    %v4430 = vpack.c.b16 %v4110, %v4106
    %v4431 = vpack.c.b16 %v4111, %v4107
    %v4432 = vpack.c.b16 %v4116, %v4112
    %v4433 = vpack.c.b16 %v4117, %v4113
    %v4434 = vpack.c.b16 %v4118, %v4114
    %v4435 = vpack.c.b16 %v4119, %v4115
    %v4436 = vpack.c.b16 %v4124, %v4120
    %v4437 = vpack.c.b16 %v4125, %v4121
    %v4438 = vpack.c.b16 %v4126, %v4122
    %v4439 = vpack.c.b16 %v4127, %v4123
    %v4440 = vpack.c.b16 %v4132, %v4128
    %v4441 = vpack.c.b16 %v4133, %v4129
    %v4442 = vpack.c.b16 %v4134, %v4130
    %v4443 = vpack.c.b16 %v4135, %v4131
    %v4444 = vpack.c.b16 %v4140, %v4136
    %v4445 = vpack.c.b16 %v4141, %v4137
    %v4446 = vpack.c.b16 %v4142, %v4138
    %v4447 = vpack.c.b16 %v4143, %v4139
    %v4448 = vpack.c.b16 %v4148, %v4144
    %v4449 = vpack.c.b16 %v4149, %v4145
    %v4450 = vpack.c.b16 %v4150, %v4146
    %v4451 = vpack.c.b16 %v4151, %v4147
    %v4452 = vpack.c.b16 %v4156, %v4152
    %v4453 = vpack.c.b16 %v4157, %v4153
    %v4454 = vpack.c.b16 %v4158, %v4154
    %v4455 = vpack.c.b16 %v4159, %v4155
    %v4456 = vpack.c.b16 %v4164, %v4160
    %v4457 = vpack.c.b16 %v4165, %v4161
    %v4458 = vpack.c.b16 %v4166, %v4162
    %v4459 = vpack.c.b16 %v4167, %v4163
    %v4460 = vpack.c.b16 %v4172, %v4168
    %v4461 = vpack.c.b16 %v4173, %v4169
    %v4462 = vpack.c.b16 %v4174, %v4170
    %v4463 = vpack.c.b16 %v4175, %v4171
    %v4464 = vpack.c.b16 %v4180, %v4176
    %v4465 = vpack.c.b16 %v4181, %v4177
    %v4466 = vpack.c.b16 %v4182, %v4178
    %v4467 = vpack.c.b16 %v4183, %v4179
    %v4468 = vpack.c.b16 %v4188, %v4184
    %v4469 = vpack.c.b16 %v4189, %v4185
    %v4470 = vpack.c.b16 %v4190, %v4186
    %v4471 = vpack.c.b16 %v4191, %v4187
    %v4472 = vpack.c.b16 %v4196, %v4192
    %v4473 = vpack.c.b16 %v4197, %v4193
    %v4474 = vpack.c.b16 %v4198, %v4194
    %v4475 = vpack.c.b16 %v4199, %v4195
    %v4476 = vpack.c.b16 %v4204, %v4200
    %v4477 = vpack.c.b16 %v4205, %v4201
    %v4478 = vpack.c.b16 %v4206, %v4202
    %v4479 = vpack.c.b16 %v4207, %v4203
    %v4480 = vpack.c.b16 %v4212, %v4208
    %v4481 = vpack.c.b16 %v4213, %v4209
    %v4482 = vpack.c.b16 %v4214, %v4210
    %v4483 = vpack.c.b16 %v4215, %v4211
    %v4484 = vpack.c.b16 %v4220, %v4216
    %v4485 = vpack.c.b16 %v4221, %v4217
    %v4486 = vpack.c.b16 %v4222, %v4218
    %v4487 = vpack.c.b16 %v4223, %v4219
    %v4488 = vpack.c.b16 %v4228, %v4224
    %v4489 = vpack.c.b16 %v4229, %v4225
    %v4490 = vpack.c.b16 %v4230, %v4226
    %v4491 = vpack.c.b16 %v4231, %v4227
    %v4492 = vpack.c.b16 %v4236, %v4232
    %v4493 = vpack.c.b16 %v4237, %v4233
    %v4494 = vpack.c.b16 %v4238, %v4234
    %v4495 = vpack.c.b16 %v4239, %v4235
    %4752 = vmatpush.bf16.msra.mxu0 %v4268
    %4753 = vmatpush.bf16.msra.mxu0 %v4264
    %4754 = vmatpush.bf16.msra.mxu0 %v4260
    %4755 = vmatpush.bf16.msra.mxu0 %v4256
    %4756 = vmatpush.bf16.msra.mxu0 %v4252
    %4757 = vmatpush.bf16.msra.mxu0 %v4248
    %4758 = vmatpush.bf16.msra.mxu0 %v4244
    %4759 = vmatpush.bf16.msra.mxu0 %v4240
    %4760 = vmatmul.bf16.gmra.mxu0 %v3198
    %v4761 = vpop.f32.mrf.mxu0
    %v4762 = vadd.f32 %v3464, %v4761
    %v4763 = vpop.f32.mrf.mxu0
    %v4764 = vadd.f32 %v3464, %v4763
    %4765 = vdwg.mxu0
    %4766 = vmatpush.bf16.msra.mxu0 %v4300
    %4767 = vmatpush.bf16.msra.mxu0 %v4296
    %4768 = vmatpush.bf16.msra.mxu0 %v4292
    %4769 = vmatpush.bf16.msra.mxu0 %v4288
    %4770 = vmatpush.bf16.msra.mxu0 %v4284
    %4771 = vmatpush.bf16.msra.mxu0 %v4280
    %4772 = vmatpush.bf16.msra.mxu0 %v4276
    %4773 = vmatpush.bf16.msra.mxu0 %v4272
    %4774 = vmatmul.bf16.gmra.mxu0 %v3199
    %v4775 = vpop.f32.mrf.mxu0
    %v4776 = vadd.f32 %v4762, %v4775
    %v4777 = vpop.f32.mrf.mxu0
    %v4778 = vadd.f32 %v4764, %v4777
    %4779 = vdwg.mxu0
    %4780 = vmatpush.bf16.msra.mxu0 %v4332
    %4781 = vmatpush.bf16.msra.mxu0 %v4328
    %4782 = vmatpush.bf16.msra.mxu0 %v4324
    %4783 = vmatpush.bf16.msra.mxu0 %v4320
    %4784 = vmatpush.bf16.msra.mxu0 %v4316
    %4785 = vmatpush.bf16.msra.mxu0 %v4312
    %4786 = vmatpush.bf16.msra.mxu0 %v4308
    %4787 = vmatpush.bf16.msra.mxu0 %v4304
    %4788 = vmatmul.bf16.gmra.mxu0 %v3200
    %v4789 = vpop.f32.mrf.mxu0
    %v4790 = vadd.f32 %v4776, %v4789
    %v4791 = vpop.f32.mrf.mxu0
    %v4792 = vadd.f32 %v4778, %v4791
    %4793 = vdwg.mxu0
    %4794 = vmatpush.bf16.msra.mxu0 %v4364
    %4795 = vmatpush.bf16.msra.mxu0 %v4360
    %4796 = vmatpush.bf16.msra.mxu0 %v4356
    %4797 = vmatpush.bf16.msra.mxu0 %v4352
    %4798 = vmatpush.bf16.msra.mxu0 %v4348
    %4799 = vmatpush.bf16.msra.mxu0 %v4344
    %4800 = vmatpush.bf16.msra.mxu0 %v4340
    %4801 = vmatpush.bf16.msra.mxu0 %v4336
    %4802 = vmatmul.bf16.gmra.mxu0 %v3201
    %v4803 = vpop.f32.mrf.mxu0
    %v4804 = vadd.f32 %v4790, %v4803
    %v4805 = vpop.f32.mrf.mxu0
    %v4806 = vadd.f32 %v4792, %v4805
    %4807 = vdwg.mxu0
    %4808 = vmatpush.bf16.msra.mxu0 %v4396
    %4809 = vmatpush.bf16.msra.mxu0 %v4392
    %4810 = vmatpush.bf16.msra.mxu0 %v4388
    %4811 = vmatpush.bf16.msra.mxu0 %v4384
    %4812 = vmatpush.bf16.msra.mxu0 %v4380
    %4813 = vmatpush.bf16.msra.mxu0 %v4376
    %4814 = vmatpush.bf16.msra.mxu0 %v4372
    %4815 = vmatpush.bf16.msra.mxu0 %v4368
    %4816 = vmatmul.bf16.gmra.mxu0 %v3202
    %v4817 = vpop.f32.mrf.mxu0
    %v4818 = vadd.f32 %v4804, %v4817
    %v4819 = vpop.f32.mrf.mxu0
    %v4820 = vadd.f32 %v4806, %v4819
    %4821 = vdwg.mxu0
    %4822 = vmatpush.bf16.msra.mxu0 %v4428
    %4823 = vmatpush.bf16.msra.mxu0 %v4424
    %4824 = vmatpush.bf16.msra.mxu0 %v4420
    %4825 = vmatpush.bf16.msra.mxu0 %v4416
    %4826 = vmatpush.bf16.msra.mxu0 %v4412
    %4827 = vmatpush.bf16.msra.mxu0 %v4408
    %4828 = vmatpush.bf16.msra.mxu0 %v4404
    %4829 = vmatpush.bf16.msra.mxu0 %v4400
    %4830 = vmatmul.bf16.gmra.mxu0 %v3203
    %v4831 = vpop.f32.mrf.mxu0
    %v4832 = vadd.f32 %v4818, %v4831
    %v4833 = vpop.f32.mrf.mxu0
    %v4834 = vadd.f32 %v4820, %v4833
    %4835 = vdwg.mxu0
    %4836 = vmatpush.bf16.msra.mxu0 %v4460
    %4837 = vmatpush.bf16.msra.mxu0 %v4456
    %4838 = vmatpush.bf16.msra.mxu0 %v4452
    %4839 = vmatpush.bf16.msra.mxu0 %v4448
    %4840 = vmatpush.bf16.msra.mxu0 %v4444
    %4841 = vmatpush.bf16.msra.mxu0 %v4440
    %4842 = vmatpush.bf16.msra.mxu0 %v4436
    %4843 = vmatpush.bf16.msra.mxu0 %v4432
    %4844 = vmatmul.bf16.gmra.mxu0 %v3204
    %v4845 = vpop.f32.mrf.mxu0
    %v4846 = vadd.f32 %v4832, %v4845
    %v4847 = vpop.f32.mrf.mxu0
    %v4848 = vadd.f32 %v4834, %v4847
    %4849 = vdwg.mxu0
    %4850 = vmatpush.bf16.msra.mxu0 %v4492
    %4851 = vmatpush.bf16.msra.mxu0 %v4488
    %4852 = vmatpush.bf16.msra.mxu0 %v4484
    %4853 = vmatpush.bf16.msra.mxu0 %v4480
    %4854 = vmatpush.bf16.msra.mxu0 %v4476
    %4855 = vmatpush.bf16.msra.mxu0 %v4472
    %4856 = vmatpush.bf16.msra.mxu0 %v4468
    %4857 = vmatpush.bf16.msra.mxu0 %v4464
    %4858 = vmatmul.bf16.gmra.mxu0 %v3205
    %v4859 = vpop.f32.mrf.mxu0
    %v4860 = vadd.f32 %v4846, %v4859
    %v4861 = vpop.f32.mrf.mxu0
    %v4862 = vadd.f32 %v4848, %v4861
    %4863 = vdwg.mxu0
    %4864 = vmatpush.bf16.msra.mxu0 %v4269
    %4865 = vmatpush.bf16.msra.mxu0 %v4265
    %4866 = vmatpush.bf16.msra.mxu0 %v4261
    %4867 = vmatpush.bf16.msra.mxu0 %v4257
    %4868 = vmatpush.bf16.msra.mxu0 %v4253
    %4869 = vmatpush.bf16.msra.mxu0 %v4249
    %4870 = vmatpush.bf16.msra.mxu0 %v4245
    %4871 = vmatpush.bf16.msra.mxu0 %v4241
    %4872 = vmatmul.bf16.gmra.mxu0 %v3198
    %v4873 = vpop.f32.mrf.mxu0
    %v4874 = vadd.f32 %v3465, %v4873
    %v4875 = vpop.f32.mrf.mxu0
    %v4876 = vadd.f32 %v3465, %v4875
    %4877 = vdwg.mxu0
    %4878 = vmatpush.bf16.msra.mxu0 %v4301
    %4879 = vmatpush.bf16.msra.mxu0 %v4297
    %4880 = vmatpush.bf16.msra.mxu0 %v4293
    %4881 = vmatpush.bf16.msra.mxu0 %v4289
    %4882 = vmatpush.bf16.msra.mxu0 %v4285
    %4883 = vmatpush.bf16.msra.mxu0 %v4281
    %4884 = vmatpush.bf16.msra.mxu0 %v4277
    %4885 = vmatpush.bf16.msra.mxu0 %v4273
    %4886 = vmatmul.bf16.gmra.mxu0 %v3199
    %v4887 = vpop.f32.mrf.mxu0
    %v4888 = vadd.f32 %v4874, %v4887
    %v4889 = vpop.f32.mrf.mxu0
    %v4890 = vadd.f32 %v4876, %v4889
    %4891 = vdwg.mxu0
    %4892 = vmatpush.bf16.msra.mxu0 %v4333
    %4893 = vmatpush.bf16.msra.mxu0 %v4329
    %4894 = vmatpush.bf16.msra.mxu0 %v4325
    %4895 = vmatpush.bf16.msra.mxu0 %v4321
    %4896 = vmatpush.bf16.msra.mxu0 %v4317
    %4897 = vmatpush.bf16.msra.mxu0 %v4313
    %4898 = vmatpush.bf16.msra.mxu0 %v4309
    %4899 = vmatpush.bf16.msra.mxu0 %v4305
    %4900 = vmatmul.bf16.gmra.mxu0 %v3200
    %v4901 = vpop.f32.mrf.mxu0
    %v4902 = vadd.f32 %v4888, %v4901
    %v4903 = vpop.f32.mrf.mxu0
    %v4904 = vadd.f32 %v4890, %v4903
    %4905 = vdwg.mxu0
    %4906 = vmatpush.bf16.msra.mxu0 %v4365
    %4907 = vmatpush.bf16.msra.mxu0 %v4361
    %4908 = vmatpush.bf16.msra.mxu0 %v4357
    %4909 = vmatpush.bf16.msra.mxu0 %v4353
    %4910 = vmatpush.bf16.msra.mxu0 %v4349
    %4911 = vmatpush.bf16.msra.mxu0 %v4345
    %4912 = vmatpush.bf16.msra.mxu0 %v4341
    %4913 = vmatpush.bf16.msra.mxu0 %v4337
    %4914 = vmatmul.bf16.gmra.mxu0 %v3201
    %v4915 = vpop.f32.mrf.mxu0
    %v4916 = vadd.f32 %v4902, %v4915
    %v4917 = vpop.f32.mrf.mxu0
    %v4918 = vadd.f32 %v4904, %v4917
    %4919 = vdwg.mxu0
    %4920 = vmatpush.bf16.msra.mxu0 %v4397
    %4921 = vmatpush.bf16.msra.mxu0 %v4393
    %4922 = vmatpush.bf16.msra.mxu0 %v4389
    %4923 = vmatpush.bf16.msra.mxu0 %v4385
    %4924 = vmatpush.bf16.msra.mxu0 %v4381
    %4925 = vmatpush.bf16.msra.mxu0 %v4377
    %4926 = vmatpush.bf16.msra.mxu0 %v4373
    %4927 = vmatpush.bf16.msra.mxu0 %v4369
    %4928 = vmatmul.bf16.gmra.mxu0 %v3202
    %v4929 = vpop.f32.mrf.mxu0
    %v4930 = vadd.f32 %v4916, %v4929
    %v4931 = vpop.f32.mrf.mxu0
    %v4932 = vadd.f32 %v4918, %v4931
    %4933 = vdwg.mxu0
    %4934 = vmatpush.bf16.msra.mxu0 %v4429
    %4935 = vmatpush.bf16.msra.mxu0 %v4425
    %4936 = vmatpush.bf16.msra.mxu0 %v4421
    %4937 = vmatpush.bf16.msra.mxu0 %v4417
    %4938 = vmatpush.bf16.msra.mxu0 %v4413
    %4939 = vmatpush.bf16.msra.mxu0 %v4409
    %4940 = vmatpush.bf16.msra.mxu0 %v4405
    %4941 = vmatpush.bf16.msra.mxu0 %v4401
    %4942 = vmatmul.bf16.gmra.mxu0 %v3203
    %v4943 = vpop.f32.mrf.mxu0
    %v4944 = vadd.f32 %v4930, %v4943
    %v4945 = vpop.f32.mrf.mxu0
    %v4946 = vadd.f32 %v4932, %v4945
    %4947 = vdwg.mxu0
    %4948 = vmatpush.bf16.msra.mxu0 %v4461
    %4949 = vmatpush.bf16.msra.mxu0 %v4457
    %4950 = vmatpush.bf16.msra.mxu0 %v4453
    %4951 = vmatpush.bf16.msra.mxu0 %v4449
    %4952 = vmatpush.bf16.msra.mxu0 %v4445
    %4953 = vmatpush.bf16.msra.mxu0 %v4441
    %4954 = vmatpush.bf16.msra.mxu0 %v4437
    %4955 = vmatpush.bf16.msra.mxu0 %v4433
    %4956 = vmatmul.bf16.gmra.mxu0 %v3204
    %v4957 = vpop.f32.mrf.mxu0
    %v4958 = vadd.f32 %v4944, %v4957
    %v4959 = vpop.f32.mrf.mxu0
    %v4960 = vadd.f32 %v4946, %v4959
    %4961 = vdwg.mxu0
    %4962 = vmatpush.bf16.msra.mxu0 %v4493
    %4963 = vmatpush.bf16.msra.mxu0 %v4489
    %4964 = vmatpush.bf16.msra.mxu0 %v4485
    %4965 = vmatpush.bf16.msra.mxu0 %v4481
    %4966 = vmatpush.bf16.msra.mxu0 %v4477
    %4967 = vmatpush.bf16.msra.mxu0 %v4473
    %4968 = vmatpush.bf16.msra.mxu0 %v4469
    %4969 = vmatpush.bf16.msra.mxu0 %v4465
    %4970 = vmatmul.bf16.gmra.mxu0 %v3205
    %v4971 = vpop.f32.mrf.mxu0
    %v4972 = vadd.f32 %v4958, %v4971
    %v4973 = vpop.f32.mrf.mxu0
    %v4974 = vadd.f32 %v4960, %v4973
    %4975 = vdwg.mxu0
    %4976 = vmatpush.bf16.msra.mxu0 %v4270
    %4977 = vmatpush.bf16.msra.mxu0 %v4266
    %4978 = vmatpush.bf16.msra.mxu0 %v4262
    %4979 = vmatpush.bf16.msra.mxu0 %v4258
    %4980 = vmatpush.bf16.msra.mxu0 %v4254
    %4981 = vmatpush.bf16.msra.mxu0 %v4250
    %4982 = vmatpush.bf16.msra.mxu0 %v4246
    %4983 = vmatpush.bf16.msra.mxu0 %v4242
    %4984 = vmatmul.bf16.gmra.mxu0 %v3198
    %v4985 = vpop.f32.mrf.mxu0
    %v4986 = vadd.f32 %v3466, %v4985
    %v4987 = vpop.f32.mrf.mxu0
    %v4988 = vadd.f32 %v3466, %v4987
    %4989 = vdwg.mxu0
    %4990 = vmatpush.bf16.msra.mxu0 %v4302
    %4991 = vmatpush.bf16.msra.mxu0 %v4298
    %4992 = vmatpush.bf16.msra.mxu0 %v4294
    %4993 = vmatpush.bf16.msra.mxu0 %v4290
    %4994 = vmatpush.bf16.msra.mxu0 %v4286
    %4995 = vmatpush.bf16.msra.mxu0 %v4282
    %4996 = vmatpush.bf16.msra.mxu0 %v4278
    %4997 = vmatpush.bf16.msra.mxu0 %v4274
    %4998 = vmatmul.bf16.gmra.mxu0 %v3199
    %v4999 = vpop.f32.mrf.mxu0
    %v5000 = vadd.f32 %v4986, %v4999
    %v5001 = vpop.f32.mrf.mxu0
    %v5002 = vadd.f32 %v4988, %v5001
    %5003 = vdwg.mxu0
    %5004 = vmatpush.bf16.msra.mxu0 %v4334
    %5005 = vmatpush.bf16.msra.mxu0 %v4330
    %5006 = vmatpush.bf16.msra.mxu0 %v4326
    %5007 = vmatpush.bf16.msra.mxu0 %v4322
    %5008 = vmatpush.bf16.msra.mxu0 %v4318
    %5009 = vmatpush.bf16.msra.mxu0 %v4314
    %5010 = vmatpush.bf16.msra.mxu0 %v4310
    %5011 = vmatpush.bf16.msra.mxu0 %v4306
    %5012 = vmatmul.bf16.gmra.mxu0 %v3200
    %v5013 = vpop.f32.mrf.mxu0
    %v5014 = vadd.f32 %v5000, %v5013
    %v5015 = vpop.f32.mrf.mxu0
    %v5016 = vadd.f32 %v5002, %v5015
    %5017 = vdwg.mxu0
    %5018 = vmatpush.bf16.msra.mxu0 %v4366
    %5019 = vmatpush.bf16.msra.mxu0 %v4362
    %5020 = vmatpush.bf16.msra.mxu0 %v4358
    %5021 = vmatpush.bf16.msra.mxu0 %v4354
    %5022 = vmatpush.bf16.msra.mxu0 %v4350
    %5023 = vmatpush.bf16.msra.mxu0 %v4346
    %5024 = vmatpush.bf16.msra.mxu0 %v4342
    %5025 = vmatpush.bf16.msra.mxu0 %v4338
    %5026 = vmatmul.bf16.gmra.mxu0 %v3201
    %v5027 = vpop.f32.mrf.mxu0
    %v5028 = vadd.f32 %v5014, %v5027
    %v5029 = vpop.f32.mrf.mxu0
    %v5030 = vadd.f32 %v5016, %v5029
    %5031 = vdwg.mxu0
    %5032 = vmatpush.bf16.msra.mxu0 %v4398
    %5033 = vmatpush.bf16.msra.mxu0 %v4394
    %5034 = vmatpush.bf16.msra.mxu0 %v4390
    %5035 = vmatpush.bf16.msra.mxu0 %v4386
    %5036 = vmatpush.bf16.msra.mxu0 %v4382
    %5037 = vmatpush.bf16.msra.mxu0 %v4378
    %5038 = vmatpush.bf16.msra.mxu0 %v4374
    %5039 = vmatpush.bf16.msra.mxu0 %v4370
    %5040 = vmatmul.bf16.gmra.mxu0 %v3202
    %v5041 = vpop.f32.mrf.mxu0
    %v5042 = vadd.f32 %v5028, %v5041
    %v5043 = vpop.f32.mrf.mxu0
    %v5044 = vadd.f32 %v5030, %v5043
    %5045 = vdwg.mxu0
    %5046 = vmatpush.bf16.msra.mxu0 %v4430
    %5047 = vmatpush.bf16.msra.mxu0 %v4426
    %5048 = vmatpush.bf16.msra.mxu0 %v4422
    %5049 = vmatpush.bf16.msra.mxu0 %v4418
    %5050 = vmatpush.bf16.msra.mxu0 %v4414
    %5051 = vmatpush.bf16.msra.mxu0 %v4410
    %5052 = vmatpush.bf16.msra.mxu0 %v4406
    %5053 = vmatpush.bf16.msra.mxu0 %v4402
    %5054 = vmatmul.bf16.gmra.mxu0 %v3203
    %v5055 = vpop.f32.mrf.mxu0
    %v5056 = vadd.f32 %v5042, %v5055
    %v5057 = vpop.f32.mrf.mxu0
    %v5058 = vadd.f32 %v5044, %v5057
    %5059 = vdwg.mxu0
    %5060 = vmatpush.bf16.msra.mxu0 %v4462
    %5061 = vmatpush.bf16.msra.mxu0 %v4458
    %5062 = vmatpush.bf16.msra.mxu0 %v4454
    %5063 = vmatpush.bf16.msra.mxu0 %v4450
    %5064 = vmatpush.bf16.msra.mxu0 %v4446
    %5065 = vmatpush.bf16.msra.mxu0 %v4442
    %5066 = vmatpush.bf16.msra.mxu0 %v4438
    %5067 = vmatpush.bf16.msra.mxu0 %v4434
    %5068 = vmatmul.bf16.gmra.mxu0 %v3204
    %v5069 = vpop.f32.mrf.mxu0
    %v5070 = vadd.f32 %v5056, %v5069
    %v5071 = vpop.f32.mrf.mxu0
    %v5072 = vadd.f32 %v5058, %v5071
    %5073 = vdwg.mxu0
    %5074 = vmatpush.bf16.msra.mxu0 %v4494
    %5075 = vmatpush.bf16.msra.mxu0 %v4490
    %5076 = vmatpush.bf16.msra.mxu0 %v4486
    %5077 = vmatpush.bf16.msra.mxu0 %v4482
    %5078 = vmatpush.bf16.msra.mxu0 %v4478
    %5079 = vmatpush.bf16.msra.mxu0 %v4474
    %5080 = vmatpush.bf16.msra.mxu0 %v4470
    %5081 = vmatpush.bf16.msra.mxu0 %v4466
    %5082 = vmatmul.bf16.gmra.mxu0 %v3205
    %v5083 = vpop.f32.mrf.mxu0
    %v5084 = vadd.f32 %v5070, %v5083
    %v5085 = vpop.f32.mrf.mxu0
    %v5086 = vadd.f32 %v5072, %v5085
    %5087 = vdwg.mxu0
    %5088 = vmatpush.bf16.msra.mxu0 %v4271
    %5089 = vmatpush.bf16.msra.mxu0 %v4267
    %5090 = vmatpush.bf16.msra.mxu0 %v4263
    %5091 = vmatpush.bf16.msra.mxu0 %v4259
    %5092 = vmatpush.bf16.msra.mxu0 %v4255
    %5093 = vmatpush.bf16.msra.mxu0 %v4251
    %5094 = vmatpush.bf16.msra.mxu0 %v4247
    %5095 = vmatpush.bf16.msra.mxu0 %v4243
    %5096 = vmatmul.bf16.gmra.mxu0 %v3198
    %v5097 = vpop.f32.mrf.mxu0
    %v5098 = vadd.f32 %v3467, %v5097
    %v5099 = vpop.f32.mrf.mxu0
    %v5100 = vadd.f32 %v3467, %v5099
    %5101 = vdwg.mxu0
    %5102 = vmatpush.bf16.msra.mxu0 %v4303
    %5103 = vmatpush.bf16.msra.mxu0 %v4299
    %5104 = vmatpush.bf16.msra.mxu0 %v4295
    %5105 = vmatpush.bf16.msra.mxu0 %v4291
    %5106 = vmatpush.bf16.msra.mxu0 %v4287
    %5107 = vmatpush.bf16.msra.mxu0 %v4283
    %5108 = vmatpush.bf16.msra.mxu0 %v4279
    %5109 = vmatpush.bf16.msra.mxu0 %v4275
    %5110 = vmatmul.bf16.gmra.mxu0 %v3199
    %v5111 = vpop.f32.mrf.mxu0
    %v5112 = vadd.f32 %v5098, %v5111
    %v5113 = vpop.f32.mrf.mxu0
    %v5114 = vadd.f32 %v5100, %v5113
    %5115 = vdwg.mxu0
    %5116 = vmatpush.bf16.msra.mxu0 %v4335
    %5117 = vmatpush.bf16.msra.mxu0 %v4331
    %5118 = vmatpush.bf16.msra.mxu0 %v4327
    %5119 = vmatpush.bf16.msra.mxu0 %v4323
    %5120 = vmatpush.bf16.msra.mxu0 %v4319
    %5121 = vmatpush.bf16.msra.mxu0 %v4315
    %5122 = vmatpush.bf16.msra.mxu0 %v4311
    %5123 = vmatpush.bf16.msra.mxu0 %v4307
    %5124 = vmatmul.bf16.gmra.mxu0 %v3200
    %v5125 = vpop.f32.mrf.mxu0
    %v5126 = vadd.f32 %v5112, %v5125
    %v5127 = vpop.f32.mrf.mxu0
    %v5128 = vadd.f32 %v5114, %v5127
    %5129 = vdwg.mxu0
    %5130 = vmatpush.bf16.msra.mxu0 %v4367
    %5131 = vmatpush.bf16.msra.mxu0 %v4363
    %5132 = vmatpush.bf16.msra.mxu0 %v4359
    %5133 = vmatpush.bf16.msra.mxu0 %v4355
    %5134 = vmatpush.bf16.msra.mxu0 %v4351
    %5135 = vmatpush.bf16.msra.mxu0 %v4347
    %5136 = vmatpush.bf16.msra.mxu0 %v4343
    %5137 = vmatpush.bf16.msra.mxu0 %v4339
    %5138 = vmatmul.bf16.gmra.mxu0 %v3201
    %v5139 = vpop.f32.mrf.mxu0
    %v5140 = vadd.f32 %v5126, %v5139
    %v5141 = vpop.f32.mrf.mxu0
    %v5142 = vadd.f32 %v5128, %v5141
    %5143 = vdwg.mxu0
    %5144 = vmatpush.bf16.msra.mxu0 %v4399
    %5145 = vmatpush.bf16.msra.mxu0 %v4395
    %5146 = vmatpush.bf16.msra.mxu0 %v4391
    %5147 = vmatpush.bf16.msra.mxu0 %v4387
    %5148 = vmatpush.bf16.msra.mxu0 %v4383
    %5149 = vmatpush.bf16.msra.mxu0 %v4379
    %5150 = vmatpush.bf16.msra.mxu0 %v4375
    %5151 = vmatpush.bf16.msra.mxu0 %v4371
    %5152 = vmatmul.bf16.gmra.mxu0 %v3202
    %v5153 = vpop.f32.mrf.mxu0
    %v5154 = vadd.f32 %v5140, %v5153
    %v5155 = vpop.f32.mrf.mxu0
    %v5156 = vadd.f32 %v5142, %v5155
    %5157 = vdwg.mxu0
    %5158 = vmatpush.bf16.msra.mxu0 %v4431
    %5159 = vmatpush.bf16.msra.mxu0 %v4427
    %5160 = vmatpush.bf16.msra.mxu0 %v4423
    %5161 = vmatpush.bf16.msra.mxu0 %v4419
    %5162 = vmatpush.bf16.msra.mxu0 %v4415
    %5163 = vmatpush.bf16.msra.mxu0 %v4411
    %5164 = vmatpush.bf16.msra.mxu0 %v4407
    %5165 = vmatpush.bf16.msra.mxu0 %v4403
    %5166 = vmatmul.bf16.gmra.mxu0 %v3203
    %v5167 = vpop.f32.mrf.mxu0
    %v5168 = vadd.f32 %v5154, %v5167
    %v5169 = vpop.f32.mrf.mxu0
    %v5170 = vadd.f32 %v5156, %v5169
    %5171 = vdwg.mxu0
    %5172 = vmatpush.bf16.msra.mxu0 %v4463
    %5173 = vmatpush.bf16.msra.mxu0 %v4459
    %5174 = vmatpush.bf16.msra.mxu0 %v4455
    %5175 = vmatpush.bf16.msra.mxu0 %v4451
    %5176 = vmatpush.bf16.msra.mxu0 %v4447
    %5177 = vmatpush.bf16.msra.mxu0 %v4443
    %5178 = vmatpush.bf16.msra.mxu0 %v4439
    %5179 = vmatpush.bf16.msra.mxu0 %v4435
    %5180 = vmatmul.bf16.gmra.mxu0 %v3204
    %v5181 = vpop.f32.mrf.mxu0
    %v5182 = vadd.f32 %v5168, %v5181
    %v5183 = vpop.f32.mrf.mxu0
    %v5184 = vadd.f32 %v5170, %v5183
    %5185 = vdwg.mxu0
    %5186 = vmatpush.bf16.msra.mxu0 %v4495
    %5187 = vmatpush.bf16.msra.mxu0 %v4491
    %5188 = vmatpush.bf16.msra.mxu0 %v4487
    %5189 = vmatpush.bf16.msra.mxu0 %v4483
    %5190 = vmatpush.bf16.msra.mxu0 %v4479
    %5191 = vmatpush.bf16.msra.mxu0 %v4475
    %5192 = vmatpush.bf16.msra.mxu0 %v4471
    %5193 = vmatpush.bf16.msra.mxu0 %v4467
    %5194 = vmatmul.bf16.gmra.mxu0 %v3205
    %v5195 = vpop.f32.mrf.mxu0
    %v5196 = vadd.f32 %v5182, %v5195
    %v5197 = vpop.f32.mrf.mxu0
    %v5198 = vadd.f32 %v5184, %v5197
    %5199 = vdwg.mxu0
    %vm5200 = vcmp.gt.f32.partialorder %v4860, 0.0
    %vm5201 = vcmp.gt.f32.partialorder %v4972, 0.0
    %vm5202 = vcmp.gt.f32.partialorder %v5084, 0.0
    %vm5203 = vcmp.gt.f32.partialorder %v5196, 0.0
    %vm5204 = vcmp.gt.f32.partialorder %v4862, 0.0
    %vm5205 = vcmp.gt.f32.partialorder %v4974, 0.0
    %vm5206 = vcmp.gt.f32.partialorder %v5086, 0.0
    %vm5207 = vcmp.gt.f32.partialorder %v5198, 0.0
    %v5208 = vmul.f32 %v4860, 0.2
    %v5209 = vmul.f32 %v4972, 0.2
    %v5210 = vmul.f32 %v5084, 0.2
    %v5211 = vmul.f32 %v5196, 0.2
    %v5212 = vmul.f32 %v4862, 0.2
    %v5213 = vmul.f32 %v4974, 0.2
    %v5214 = vmul.f32 %v5086, 0.2
    %v5215 = vmul.f32 %v5198, 0.2
    %v5216 = vsel %vm5200, %v4860, %v5208
    %v5217 = vsel %vm5201, %v4972, %v5209
    %v5218 = vsel %vm5202, %v5084, %v5210
    %v5219 = vsel %vm5203, %v5196, %v5211
    %v5220 = vsel %vm5204, %v4862, %v5212
    %v5221 = vsel %vm5205, %v4974, %v5213
    %v5222 = vsel %vm5206, %v5086, %v5214
    %v5223 = vsel %vm5207, %v5198, %v5215
    %v5224 = vpack.c.bf16 %v5220, %v5216
    %v5225 = vpack.c.bf16 %v5221, %v5217
    %v5226 = vpack.c.bf16 %v5222, %v5218
    %v5227 = vpack.c.bf16 %v5223, %v5219
    %v5228 = vld [vmem:[#allocation8] sm:$0xff]
    %v5229 = vld [vmem:[#allocation8 + $0x8] sm:$0xff]
    %v5230 = vld [vmem:[#allocation8 + $0x10] sm:$0xff]
    %v5231 = vld [vmem:[#allocation8 + $0x18] sm:$0xff]
    %v5232 = vld [vmem:[#allocation8 + $0x20] sm:$0xff]
    %v5233 = vld [vmem:[#allocation8 + $0x28] sm:$0xff]
    %v5234 = vld [vmem:[#allocation8 + $0x30] sm:$0xff]
    %v5235 = vld [vmem:[#allocation8 + $0x38] sm:$0xff]
    %v5236 = vld [vmem:[#allocation8 + $0x40] sm:$0xff]
    %v5237 = vld [vmem:[#allocation8 + $0x48] sm:$0xff]
    %v5238 = vld [vmem:[#allocation8 + $0x50] sm:$0xff]
    %v5239 = vld [vmem:[#allocation8 + $0x58] sm:$0xff]
    %v5240 = vld [vmem:[#allocation8 + $0x60] sm:$0xff]
    %v5241 = vld [vmem:[#allocation8 + $0x68] sm:$0xff]
    %v5242 = vld [vmem:[#allocation8 + $0x70] sm:$0xff]
    %v5243 = vld [vmem:[#allocation8 + $0x78] sm:$0xff]
    %v5244 = vld [vmem:[#allocation8 + $0x80] sm:$0xff]
    %v5245 = vld [vmem:[#allocation8 + $0x88] sm:$0xff]
    %v5246 = vld [vmem:[#allocation8 + $0x90] sm:$0xff]
    %v5247 = vld [vmem:[#allocation8 + $0x98] sm:$0xff]
    %v5248 = vld [vmem:[#allocation8 + $0xa0] sm:$0xff]
    %v5249 = vld [vmem:[#allocation8 + $0xa8] sm:$0xff]
    %v5250 = vld [vmem:[#allocation8 + $0xb0] sm:$0xff]
    %v5251 = vld [vmem:[#allocation8 + $0xb8] sm:$0xff]
    %v5252 = vld [vmem:[#allocation8 + $0xc0] sm:$0xff]
    %v5253 = vld [vmem:[#allocation8 + $0xc8] sm:$0xff]
    %v5254 = vld [vmem:[#allocation8 + $0xd0] sm:$0xff]
    %v5255 = vld [vmem:[#allocation8 + $0xd8] sm:$0xff]
    %v5256 = vld [vmem:[#allocation8 + $0xe0] sm:$0xff]
    %v5257 = vld [vmem:[#allocation8 + $0xe8] sm:$0xff]
    %v5258 = vld [vmem:[#allocation8 + $0xf0] sm:$0xff]
    %v5259 = vld [vmem:[#allocation8 + $0xf8] sm:$0xff]
    %v5260 = vld [vmem:[#allocation8 + $0x100] sm:$0xff]
    %v5261 = vld [vmem:[#allocation8 + $0x108] sm:$0xff]
    %v5262 = vld [vmem:[#allocation8 + $0x110] sm:$0xff]
    %v5263 = vld [vmem:[#allocation8 + $0x118] sm:$0xff]
    %v5264 = vld [vmem:[#allocation8 + $0x120] sm:$0xff]
    %v5265 = vld [vmem:[#allocation8 + $0x128] sm:$0xff]
    %v5266 = vld [vmem:[#allocation8 + $0x130] sm:$0xff]
    %v5267 = vld [vmem:[#allocation8 + $0x138] sm:$0xff]
    %v5268 = vld [vmem:[#allocation8 + $0x140] sm:$0xff]
    %v5269 = vld [vmem:[#allocation8 + $0x148] sm:$0xff]
    %v5270 = vld [vmem:[#allocation8 + $0x150] sm:$0xff]
    %v5271 = vld [vmem:[#allocation8 + $0x158] sm:$0xff]
    %v5272 = vld [vmem:[#allocation8 + $0x160] sm:$0xff]
    %v5273 = vld [vmem:[#allocation8 + $0x168] sm:$0xff]
    %v5274 = vld [vmem:[#allocation8 + $0x170] sm:$0xff]
    %v5275 = vld [vmem:[#allocation8 + $0x178] sm:$0xff]
    %v5276 = vld [vmem:[#allocation8 + $0x180] sm:$0xff]
    %v5277 = vld [vmem:[#allocation8 + $0x188] sm:$0xff]
    %v5278 = vld [vmem:[#allocation8 + $0x190] sm:$0xff]
    %v5279 = vld [vmem:[#allocation8 + $0x198] sm:$0xff]
    %v5280 = vld [vmem:[#allocation8 + $0x1a0] sm:$0xff]
    %v5281 = vld [vmem:[#allocation8 + $0x1a8] sm:$0xff]
    %v5282 = vld [vmem:[#allocation8 + $0x1b0] sm:$0xff]
    %v5283 = vld [vmem:[#allocation8 + $0x1b8] sm:$0xff]
    %v5284 = vld [vmem:[#allocation8 + $0x1c0] sm:$0xff]
    %v5285 = vld [vmem:[#allocation8 + $0x1c8] sm:$0xff]
    %v5286 = vld [vmem:[#allocation8 + $0x1d0] sm:$0xff]
    %v5287 = vld [vmem:[#allocation8 + $0x1d8] sm:$0xff]
    %v5288 = vld [vmem:[#allocation8 + $0x1e0] sm:$0xff]
    %v5289 = vld [vmem:[#allocation8 + $0x1e8] sm:$0xff]
    %v5290 = vld [vmem:[#allocation8 + $0x1f0] sm:$0xff]
    %v5291 = vld [vmem:[#allocation8 + $0x1f8] sm:$0xff]
    %v5292 = vld [vmem:[#allocation10] sm:$0x3]
    %v5294 = vperm.slane %v5292, 0
    %v5295 = vperm.slane %v5292, 1
    %v5362 = vunpack.c.l.b16 %v5228
    %v5363 = vunpack.c.h.b16 %v5228
    %v5364 = vunpack.c.l.b16 %v5229
    %v5365 = vunpack.c.h.b16 %v5229
    %v5366 = vunpack.c.l.b16 %v5230
    %v5367 = vunpack.c.h.b16 %v5230
    %v5368 = vunpack.c.l.b16 %v5231
    %v5369 = vunpack.c.h.b16 %v5231
    %v5370 = vunpack.c.l.b16 %v5232
    %v5371 = vunpack.c.h.b16 %v5232
    %v5372 = vunpack.c.l.b16 %v5233
    %v5373 = vunpack.c.h.b16 %v5233
    %v5374 = vunpack.c.l.b16 %v5234
    %v5375 = vunpack.c.h.b16 %v5234
    %v5376 = vunpack.c.l.b16 %v5235
    %v5377 = vunpack.c.h.b16 %v5235
    %v5378 = vunpack.c.l.b16 %v5236
    %v5379 = vunpack.c.h.b16 %v5236
    %v5380 = vunpack.c.l.b16 %v5237
    %v5381 = vunpack.c.h.b16 %v5237
    %v5382 = vunpack.c.l.b16 %v5238
    %v5383 = vunpack.c.h.b16 %v5238
    %v5384 = vunpack.c.l.b16 %v5239
    %v5385 = vunpack.c.h.b16 %v5239
    %v5386 = vunpack.c.l.b16 %v5240
    %v5387 = vunpack.c.h.b16 %v5240
    %v5388 = vunpack.c.l.b16 %v5241
    %v5389 = vunpack.c.h.b16 %v5241
    %v5390 = vunpack.c.l.b16 %v5242
    %v5391 = vunpack.c.h.b16 %v5242
    %v5392 = vunpack.c.l.b16 %v5243
    %v5393 = vunpack.c.h.b16 %v5243
    %v5394 = vunpack.c.l.b16 %v5244
    %v5395 = vunpack.c.h.b16 %v5244
    %v5396 = vunpack.c.l.b16 %v5245
    %v5397 = vunpack.c.h.b16 %v5245
    %v5398 = vunpack.c.l.b16 %v5246
    %v5399 = vunpack.c.h.b16 %v5246
    %v5400 = vunpack.c.l.b16 %v5247
    %v5401 = vunpack.c.h.b16 %v5247
    %v5402 = vunpack.c.l.b16 %v5248
    %v5403 = vunpack.c.h.b16 %v5248
    %v5404 = vunpack.c.l.b16 %v5249
    %v5405 = vunpack.c.h.b16 %v5249
    %v5406 = vunpack.c.l.b16 %v5250
    %v5407 = vunpack.c.h.b16 %v5250
    %v5408 = vunpack.c.l.b16 %v5251
    %v5409 = vunpack.c.h.b16 %v5251
    %v5410 = vunpack.c.l.b16 %v5252
    %v5411 = vunpack.c.h.b16 %v5252
    %v5412 = vunpack.c.l.b16 %v5253
    %v5413 = vunpack.c.h.b16 %v5253
    %v5414 = vunpack.c.l.b16 %v5254
    %v5415 = vunpack.c.h.b16 %v5254
    %v5416 = vunpack.c.l.b16 %v5255
    %v5417 = vunpack.c.h.b16 %v5255
    %v5418 = vunpack.c.l.b16 %v5256
    %v5419 = vunpack.c.h.b16 %v5256
    %v5420 = vunpack.c.l.b16 %v5257
    %v5421 = vunpack.c.h.b16 %v5257
    %v5422 = vunpack.c.l.b16 %v5258
    %v5423 = vunpack.c.h.b16 %v5258
    %v5424 = vunpack.c.l.b16 %v5259
    %v5425 = vunpack.c.h.b16 %v5259
    %v5426 = vunpack.c.l.b16 %v5260
    %v5427 = vunpack.c.h.b16 %v5260
    %v5428 = vunpack.c.l.b16 %v5261
    %v5429 = vunpack.c.h.b16 %v5261
    %v5430 = vunpack.c.l.b16 %v5262
    %v5431 = vunpack.c.h.b16 %v5262
    %v5432 = vunpack.c.l.b16 %v5263
    %v5433 = vunpack.c.h.b16 %v5263
    %v5434 = vunpack.c.l.b16 %v5264
    %v5435 = vunpack.c.h.b16 %v5264
    %v5436 = vunpack.c.l.b16 %v5265
    %v5437 = vunpack.c.h.b16 %v5265
    %v5438 = vunpack.c.l.b16 %v5266
    %v5439 = vunpack.c.h.b16 %v5266
    %v5440 = vunpack.c.l.b16 %v5267
    %v5441 = vunpack.c.h.b16 %v5267
    %v5442 = vunpack.c.l.b16 %v5268
    %v5443 = vunpack.c.h.b16 %v5268
    %v5444 = vunpack.c.l.b16 %v5269
    %v5445 = vunpack.c.h.b16 %v5269
    %v5446 = vunpack.c.l.b16 %v5270
    %v5447 = vunpack.c.h.b16 %v5270
    %v5448 = vunpack.c.l.b16 %v5271
    %v5449 = vunpack.c.h.b16 %v5271
    %v5450 = vunpack.c.l.b16 %v5272
    %v5451 = vunpack.c.h.b16 %v5272
    %v5452 = vunpack.c.l.b16 %v5273
    %v5453 = vunpack.c.h.b16 %v5273
    %v5454 = vunpack.c.l.b16 %v5274
    %v5455 = vunpack.c.h.b16 %v5274
    %v5456 = vunpack.c.l.b16 %v5275
    %v5457 = vunpack.c.h.b16 %v5275
    %v5458 = vunpack.c.l.b16 %v5276
    %v5459 = vunpack.c.h.b16 %v5276
    %v5460 = vunpack.c.l.b16 %v5277
    %v5461 = vunpack.c.h.b16 %v5277
    %v5462 = vunpack.c.l.b16 %v5278
    %v5463 = vunpack.c.h.b16 %v5278
    %v5464 = vunpack.c.l.b16 %v5279
    %v5465 = vunpack.c.h.b16 %v5279
    %v5466 = vunpack.c.l.b16 %v5280
    %v5467 = vunpack.c.h.b16 %v5280
    %v5468 = vunpack.c.l.b16 %v5281
    %v5469 = vunpack.c.h.b16 %v5281
    %v5470 = vunpack.c.l.b16 %v5282
    %v5471 = vunpack.c.h.b16 %v5282
    %v5472 = vunpack.c.l.b16 %v5283
    %v5473 = vunpack.c.h.b16 %v5283
    %v5474 = vunpack.c.l.b16 %v5284
    %v5475 = vunpack.c.h.b16 %v5284
    %v5476 = vunpack.c.l.b16 %v5285
    %v5477 = vunpack.c.h.b16 %v5285
    %v5478 = vunpack.c.l.b16 %v5286
    %v5479 = vunpack.c.h.b16 %v5286
    %v5480 = vunpack.c.l.b16 %v5287
    %v5481 = vunpack.c.h.b16 %v5287
    %v5482 = vunpack.c.l.b16 %v5288
    %v5483 = vunpack.c.h.b16 %v5288
    %v5484 = vunpack.c.l.b16 %v5289
    %v5485 = vunpack.c.h.b16 %v5289
    %v5486 = vunpack.c.l.b16 %v5290
    %v5487 = vunpack.c.h.b16 %v5290
    %v5488 = vunpack.c.l.b16 %v5291
    %v5489 = vunpack.c.h.b16 %v5291
    %v5490 = vpack.c.b16 %v5364, %v5362
    %v5491 = vpack.c.b16 %v5365, %v5363
    %v5492 = vpack.c.b16 %v5368, %v5366
    %v5493 = vpack.c.b16 %v5369, %v5367
    %v5494 = vpack.c.b16 %v5372, %v5370
    %v5495 = vpack.c.b16 %v5373, %v5371
    %v5496 = vpack.c.b16 %v5376, %v5374
    %v5497 = vpack.c.b16 %v5377, %v5375
    %v5498 = vpack.c.b16 %v5380, %v5378
    %v5499 = vpack.c.b16 %v5381, %v5379
    %v5500 = vpack.c.b16 %v5384, %v5382
    %v5501 = vpack.c.b16 %v5385, %v5383
    %v5502 = vpack.c.b16 %v5388, %v5386
    %v5503 = vpack.c.b16 %v5389, %v5387
    %v5504 = vpack.c.b16 %v5392, %v5390
    %v5505 = vpack.c.b16 %v5393, %v5391
    %v5506 = vpack.c.b16 %v5396, %v5394
    %v5507 = vpack.c.b16 %v5397, %v5395
    %v5508 = vpack.c.b16 %v5400, %v5398
    %v5509 = vpack.c.b16 %v5401, %v5399
    %v5510 = vpack.c.b16 %v5404, %v5402
    %v5511 = vpack.c.b16 %v5405, %v5403
    %v5512 = vpack.c.b16 %v5408, %v5406
    %v5513 = vpack.c.b16 %v5409, %v5407
    %v5514 = vpack.c.b16 %v5412, %v5410
    %v5515 = vpack.c.b16 %v5413, %v5411
    %v5516 = vpack.c.b16 %v5416, %v5414
    %v5517 = vpack.c.b16 %v5417, %v5415
    %v5518 = vpack.c.b16 %v5420, %v5418
    %v5519 = vpack.c.b16 %v5421, %v5419
    %v5520 = vpack.c.b16 %v5424, %v5422
    %v5521 = vpack.c.b16 %v5425, %v5423
    %v5522 = vpack.c.b16 %v5428, %v5426
    %v5523 = vpack.c.b16 %v5429, %v5427
    %v5524 = vpack.c.b16 %v5432, %v5430
    %v5525 = vpack.c.b16 %v5433, %v5431
    %v5526 = vpack.c.b16 %v5436, %v5434
    %v5527 = vpack.c.b16 %v5437, %v5435
    %v5528 = vpack.c.b16 %v5440, %v5438
    %v5529 = vpack.c.b16 %v5441, %v5439
    %v5530 = vpack.c.b16 %v5444, %v5442
    %v5531 = vpack.c.b16 %v5445, %v5443
    %v5532 = vpack.c.b16 %v5448, %v5446
    %v5533 = vpack.c.b16 %v5449, %v5447
    %v5534 = vpack.c.b16 %v5452, %v5450
    %v5535 = vpack.c.b16 %v5453, %v5451
    %v5536 = vpack.c.b16 %v5456, %v5454
    %v5537 = vpack.c.b16 %v5457, %v5455
    %v5538 = vpack.c.b16 %v5460, %v5458
    %v5539 = vpack.c.b16 %v5461, %v5459
    %v5540 = vpack.c.b16 %v5464, %v5462
    %v5541 = vpack.c.b16 %v5465, %v5463
    %v5542 = vpack.c.b16 %v5468, %v5466
    %v5543 = vpack.c.b16 %v5469, %v5467
    %v5544 = vpack.c.b16 %v5472, %v5470
    %v5545 = vpack.c.b16 %v5473, %v5471
    %v5546 = vpack.c.b16 %v5476, %v5474
    %v5547 = vpack.c.b16 %v5477, %v5475
    %v5548 = vpack.c.b16 %v5480, %v5478
    %v5549 = vpack.c.b16 %v5481, %v5479
    %v5550 = vpack.c.b16 %v5484, %v5482
    %v5551 = vpack.c.b16 %v5485, %v5483
    %v5552 = vpack.c.b16 %v5488, %v5486
    %v5553 = vpack.c.b16 %v5489, %v5487
    %5618 = vmatpush.bf16.msra.mxu0 %v5504
    %5619 = vmatpush.bf16.msra.mxu0 %v5502
    %5620 = vmatpush.bf16.msra.mxu0 %v5500
    %5621 = vmatpush.bf16.msra.mxu0 %v5498
    %5622 = vmatpush.bf16.msra.mxu0 %v5496
    %5623 = vmatpush.bf16.msra.mxu0 %v5494
    %5624 = vmatpush.bf16.msra.mxu0 %v5492
    %5625 = vmatpush.bf16.msra.mxu0 %v5490
    %5626 = vmatmul.bf16.gmra.mxu0 %v5224
    %v5627 = vpop.f32.mrf.mxu0
    %v5628 = vadd.f32 %v5294, %v5627
    %v5629 = vpop.f32.mrf.mxu0
    %v5630 = vadd.f32 %v5294, %v5629
    %5631 = vdwg.mxu0
    %5632 = vmatpush.bf16.msra.mxu0 %v5520
    %5633 = vmatpush.bf16.msra.mxu0 %v5518
    %5634 = vmatpush.bf16.msra.mxu0 %v5516
    %5635 = vmatpush.bf16.msra.mxu0 %v5514
    %5636 = vmatpush.bf16.msra.mxu0 %v5512
    %5637 = vmatpush.bf16.msra.mxu0 %v5510
    %5638 = vmatpush.bf16.msra.mxu0 %v5508
    %5639 = vmatpush.bf16.msra.mxu0 %v5506
    %5640 = vmatmul.bf16.gmra.mxu0 %v5225
    %v5641 = vpop.f32.mrf.mxu0
    %v5642 = vadd.f32 %v5628, %v5641
    %v5643 = vpop.f32.mrf.mxu0
    %v5644 = vadd.f32 %v5630, %v5643
    %5645 = vdwg.mxu0
    %5646 = vmatpush.bf16.msra.mxu0 %v5536
    %5647 = vmatpush.bf16.msra.mxu0 %v5534
    %5648 = vmatpush.bf16.msra.mxu0 %v5532
    %5649 = vmatpush.bf16.msra.mxu0 %v5530
    %5650 = vmatpush.bf16.msra.mxu0 %v5528
    %5651 = vmatpush.bf16.msra.mxu0 %v5526
    %5652 = vmatpush.bf16.msra.mxu0 %v5524
    %5653 = vmatpush.bf16.msra.mxu0 %v5522
    %5654 = vmatmul.bf16.gmra.mxu0 %v5226
    %v5655 = vpop.f32.mrf.mxu0
    %v5656 = vadd.f32 %v5642, %v5655
    %v5657 = vpop.f32.mrf.mxu0
    %v5658 = vadd.f32 %v5644, %v5657
    %5659 = vdwg.mxu0
    %5660 = vmatpush.bf16.msra.mxu0 %v5552
    %5661 = vmatpush.bf16.msra.mxu0 %v5550
    %5662 = vmatpush.bf16.msra.mxu0 %v5548
    %5663 = vmatpush.bf16.msra.mxu0 %v5546
    %5664 = vmatpush.bf16.msra.mxu0 %v5544
    %5665 = vmatpush.bf16.msra.mxu0 %v5542
    %5666 = vmatpush.bf16.msra.mxu0 %v5540
    %5667 = vmatpush.bf16.msra.mxu0 %v5538
    %5668 = vmatmul.bf16.gmra.mxu0 %v5227
    %v5669 = vpop.f32.mrf.mxu0
    %v5670 = vadd.f32 %v5656, %v5669
    %v5671 = vpop.f32.mrf.mxu0
    %v5672 = vadd.f32 %v5658, %v5671
    %5673 = vdwg.mxu0
    %5674 = vmatpush.bf16.msra.mxu0 %v5505
    %5675 = vmatpush.bf16.msra.mxu0 %v5503
    %5676 = vmatpush.bf16.msra.mxu0 %v5501
    %5677 = vmatpush.bf16.msra.mxu0 %v5499
    %5678 = vmatpush.bf16.msra.mxu0 %v5497
    %5679 = vmatpush.bf16.msra.mxu0 %v5495
    %5680 = vmatpush.bf16.msra.mxu0 %v5493
    %5681 = vmatpush.bf16.msra.mxu0 %v5491
    %5682 = vmatmul.bf16.gmra.mxu0 %v5224
    %v5683 = vpop.f32.mrf.mxu0
    %v5684 = vadd.f32 %v5295, %v5683
    %v5685 = vpop.f32.mrf.mxu0
    %v5686 = vadd.f32 %v5295, %v5685
    %5687 = vdwg.mxu0
    %5688 = vmatpush.bf16.msra.mxu0 %v5521
    %5689 = vmatpush.bf16.msra.mxu0 %v5519
    %5690 = vmatpush.bf16.msra.mxu0 %v5517
    %5691 = vmatpush.bf16.msra.mxu0 %v5515
    %5692 = vmatpush.bf16.msra.mxu0 %v5513
    %5693 = vmatpush.bf16.msra.mxu0 %v5511
    %5694 = vmatpush.bf16.msra.mxu0 %v5509
    %5695 = vmatpush.bf16.msra.mxu0 %v5507
    %5696 = vmatmul.bf16.gmra.mxu0 %v5225
    %v5697 = vpop.f32.mrf.mxu0
    %v5698 = vadd.f32 %v5684, %v5697
    %v5699 = vpop.f32.mrf.mxu0
    %v5700 = vadd.f32 %v5686, %v5699
    %5701 = vdwg.mxu0
    %5702 = vmatpush.bf16.msra.mxu0 %v5537
    %5703 = vmatpush.bf16.msra.mxu0 %v5535
    %5704 = vmatpush.bf16.msra.mxu0 %v5533
    %5705 = vmatpush.bf16.msra.mxu0 %v5531
    %5706 = vmatpush.bf16.msra.mxu0 %v5529
    %5707 = vmatpush.bf16.msra.mxu0 %v5527
    %5708 = vmatpush.bf16.msra.mxu0 %v5525
    %5709 = vmatpush.bf16.msra.mxu0 %v5523
    %5710 = vmatmul.bf16.gmra.mxu0 %v5226
    %v5711 = vpop.f32.mrf.mxu0
    %v5712 = vadd.f32 %v5698, %v5711
    %v5713 = vpop.f32.mrf.mxu0
    %v5714 = vadd.f32 %v5700, %v5713
    %5715 = vdwg.mxu0
    %5716 = vmatpush.bf16.msra.mxu0 %v5553
    %5717 = vmatpush.bf16.msra.mxu0 %v5551
    %5718 = vmatpush.bf16.msra.mxu0 %v5549
    %5719 = vmatpush.bf16.msra.mxu0 %v5547
    %5720 = vmatpush.bf16.msra.mxu0 %v5545
    %5721 = vmatpush.bf16.msra.mxu0 %v5543
    %5722 = vmatpush.bf16.msra.mxu0 %v5541
    %5723 = vmatpush.bf16.msra.mxu0 %v5539
    %5724 = vmatmul.bf16.gmra.mxu0 %v5227
    %v5725 = vpop.f32.mrf.mxu0
    %v5726 = vadd.f32 %v5712, %v5725
    %v5727 = vpop.f32.mrf.mxu0
    %v5728 = vadd.f32 %v5714, %v5727
    %5729 = vdwg.mxu0
    %vm5730 = vcmp.gt.f32.partialorder %v5670, 0.0
    %vm5731 = vcmp.gt.f32.partialorder %v5726, 0.0
    %vm5732 = vcmp.gt.f32.partialorder %v5672, 0.0
    %vm5733 = vcmp.gt.f32.partialorder %v5728, 0.0
    %v5734 = vmul.f32 %v5670, 0.2
    %v5735 = vmul.f32 %v5726, 0.2
    %v5736 = vmul.f32 %v5672, 0.2
    %v5737 = vmul.f32 %v5728, 0.2
    %v5738 = vsel %vm5730, %v5670, %v5734
    %v5739 = vsel %vm5731, %v5726, %v5735
    %v5740 = vsel %vm5732, %v5672, %v5736
    %v5741 = vsel %vm5733, %v5728, %v5737
    %v5742 = vld [vmem:[#allocation11] sm:$0x3]
    %v5744 = vperm.slane %v5742, 0
    %v5745 = vperm.slane %v5742, 1
    %v5748 = vmul.f32 %v5738, %v5744
    %v5749 = vmul.f32 %v5739, %v5745
    %v5750 = vmul.f32 %v5740, %v5744
    %v5751 = vmul.f32 %v5741, %v5745
    %v5752 = vadd.f32 %v5748, %v5749
    %5753 = vadd.xlane.f32.xlu0 %v5752
    %v5754 = vpop.xlane.xlu0 %5753
    %v5755 = vadd.f32 %v5750, %v5751
    %5756 = vadd.xlane.f32.xlu0 %v5755
    %v5757 = vpop.xlane.xlu0 %5756
    %v5758 = vld [vmem:[#allocation2] sm:$0x1]
    %v5760 = vperm.slane %v5758, 0
    %v5762 = vadd.f32 %v5754, %v5760
    %v5763 = vadd.f32 %v5757, %v5760
    %v5764 = vsub.f32 0.0, %v5762
    %v5765 = vsub.f32 0.0, %v5763
    %v5766 = vmul.f32 %v5764, 1.442695
    %v5767 = vpow.pop %v5766
    %v5768 = vmul.f32 %v5765, 1.442695
    %v5769 = vpow.pop %v5768
    %v5770 = vadd.f32 %v5767, 1.0
    %v5771 = vadd.f32 %v5769, 1.0
    %v5772 = vrcp.pop %v5770
    %v5773 = vmul.f32 %v5770, %v5772
    %v5774 = vsub.f32 1.0, %v5773
    %v5775 = vmul.f32 %v5772, %v5774
    %v5776 = vadd.f32 %v5772, %v5775
    %vm5777 = vweird.f32 %v5770
    %vm5778 = vweird.f32 %v5772
    %vm5779 = vmor %vm5777, %vm5778
    %v5780 = vsel %vm5779, %v5772, %v5776
    %v5781 = vand.u32 2147483647, %v5770
    %vm5782 = vcmp.eq.f32.partialorder %v5781, 8.507059e+37
    %v5783 = vand.u32 %v5770, 2147483648
    %v5784 = vor.u32 1.1754944e-38, %v5783
    %v5785 = vsel %vm5782, %v5784, %v5780
    %v5786 = vmul.f32 1.0, %v5785
    %v5787 = vrcp.pop %v5771
    %v5788 = vmul.f32 %v5771, %v5787
    %v5789 = vsub.f32 1.0, %v5788
    %v5790 = vmul.f32 %v5787, %v5789
    %v5791 = vadd.f32 %v5787, %v5790
    %vm5792 = vweird.f32 %v5771
    %vm5793 = vweird.f32 %v5787
    %vm5794 = vmor %vm5792, %vm5793
    %v5795 = vsel %vm5794, %v5787, %v5791
    %v5796 = vand.u32 2147483647, %v5771
    %vm5797 = vcmp.eq.f32.partialorder %v5796, 8.507059e+37
    %v5798 = vand.u32 %v5771, 2147483648
    %v5799 = vor.u32 1.1754944e-38, %v5798
    %v5800 = vsel %vm5797, %v5799, %v5795
    %v5801 = vmul.f32 1.0, %v5800
    %5803 = vset.pattern.permute.xlu0 0
    %5804 = vperm.xlu0 %5803, %v5786
    %v5805 = vpop.permute.xlu0 %5804
    %5808 = vset.pattern.permute.xlu0 0
    %5809 = vperm.xlu0 %5808, %v5801
    %v5810 = vpop.permute.xlu0 %5809
    %5812 = vst [vmem:[%s9] sm:$0xff] %v5805
    %5813 = vst [vmem:[%s9 + $0x8] sm:$0xff] %v5810
    // Predicated region
    $region62: #{conditional_discriminator_forward.1} parent=1 // pred_check
      _
    $region63: #{conditional_discriminator_forward.1} parent=1 // pred_check_branch
      %5815 = sbr.rel (0) target = $region65
    $region64: #{conditional_discriminator_forward.1} parent=1 // pred_region
      _
    $region65: #{conditional_discriminator_forward.1} parent=1 // pred_fallthru
      _
    // Predicated region
    $region66: #{conditional_discriminator_forward.1} parent=1 // pred_check
      _
    $region67: #{conditional_discriminator_forward.1} parent=1 // pred_check_branch
      %5817 = sbr.rel (0) target = $region69
    $region68: #{conditional_discriminator_forward.1} parent=1 // pred_region
      _
    $region69: #{conditional_discriminator_forward.1} parent=1 // pred_fallthru
      _
    %5818 = vsyncpa [#allocation4], 1
    %5819 = vsyncpa [#allocation6], 1
    %5820 = vsyncpa [#allocation9], 1
    %5821 = vsyncpa [#allocation12], 1

</llo_original>
